<compile_context>
chip_gen: v6e
topology: v6e:2x2x1
jax: 0.10.0
libtpu: 0.0.40
codegen_flags: <defaults>
</compile_context>

<pallas_src>
import functools
import math

import jax
import jax.numpy as jnp
from jax.experimental import pallas as pl
from jax.experimental.pallas import tpu as pltpu

MATMUL_DTYPE = jnp.bfloat16   # MXU operand dtype (accumulation stays f32)
ACT_DTYPE = jnp.bfloat16      # inter-kernel activation dtype (halves HBM traffic)
LN_EPS = 1e-5                 # torch.nn.LayerNorm default
VMEM_LIMIT_BYTES = None       # e.g. 48 << 20 on v7x if very large-E configs hit the scoped limit


# ----------------------------- in-kernel helpers -----------------------------

def _mm(a, b):
    # a is cast to the MXU dtype (no-op when already bf16); weights b are pre-cast once in
    # prepare_params(), so there are no per-step / per-tap weight casts.  f32 accumulation.
    return jnp.dot(a.astype(MATMUL_DTYPE), b, preferred_element_type=jnp.float32)


def _mm_nt(a, b):
    # A @ B^T (contract last dims of both).  Used for Q K^T and the fused pred matvec.
    return jax.lax.dot_general(a.astype(MATMUL_DTYPE), b.astype(MATMUL_DTYPE),
                               (((1,), (1,)), ((), ())),
                               preferred_element_type=jnp.float32)


def _ln(y, g, b, eps=LN_EPS):
    # LayerNorm over last dim, biased variance (matches torch.nn.LayerNorm); f32 statistics.
    mean = jnp.mean(y, axis=-1, keepdims=True)
    var = jnp.mean((y - mean) ** 2, axis=-1, keepdims=True)
    return (y - mean) * jax.lax.rsqrt(var + eps) * g + b


# ----------------------------- Pallas kernels -----------------------------

def _front_kernel(x_ref, w_ref, b_ref, g_ref, bb_ref, o_ref):
    # resize Linear + fist_downsample Conv1d(stride=ds) folded into ONE (ds*nin, E) matmul
    # (linear composition, folded in f32 in prepare_params), followed by layer_normal.
    y = _mm(x_ref[...], w_ref[...]) + b_ref[...]
    o_ref[...] = _ln(y, g_ref[...], bb_ref[...]).astype(o_ref.dtype)


def _conv_ln_kernel(x_ref, w_ref, b_ref, g_ref, bb_ref, o_ref, *, k):
    # Conv1d(E,E,k,stride=1) -> ReLU -> LayerNorm.  One batch element per grid step.
    # im2col slab (s_out, k*E) matmul'd against tap-stacked weight (k*E, E): one big-K MXU op.
    s_out = o_ref.shape[0]
    x = x_ref[...]
    slab = x if k == 1 else jnp.concatenate([x[j:j + s_out, :] for j in range(k)], axis=-1)
    y = jnp.maximum(_mm(slab, w_ref[...]) + b_ref[...], 0.0)
    o_ref[...] = _ln(y, g_ref[...], bb_ref[...]).astype(o_ref.dtype)


def _attn_block_kernel(x_ref, wi_ref, bi_ref, wo_ref, bo_ref, g_ref, bb_ref,
                       o_ref, attn_sc, *, H):
    # QKV projection -> per-head softmax(QK^T)V written into a VMEM scratch slab (no lane
    # concatenate) -> output projection -> residual add (f32) -> LayerNorm (post-norm, matches
    # nn.TransformerEncoderLayer).  q is pre-scaled by 1/sqrt(Dh) before QK^T.
    # TODO(synk): for very long S on v7x, tile the KV axis with an online softmax (flash-style)
    # instead of materializing the (S, S) score matrix per head.
    x = x_ref[...]                                        # (S, E) bf16
    E = x.shape[-1]
    Dh = E // H
    qkv = _mm(x, wi_ref[...]) + bi_ref[...]               # (S, 3E) f32
    q = (qkv[:, :E] * (1.0 / math.sqrt(Dh))).astype(MATMUL_DTYPE)
    kk = qkv[:, E:2 * E].astype(MATMUL_DTYPE)
    v = qkv[:, 2 * E:].astype(MATMUL_DTYPE)
    for h in range(H):
        sl = slice(h * Dh, (h + 1) * Dh)
        s = _mm_nt(q[:, sl], kk[:, sl])                   # (S, S) f32
        p = jnp.exp(s - jnp.max(s, axis=-1, keepdims=True))
        p = p * pl.reciprocal(jnp.sum(p, axis=-1, keepdims=True), approx=True)
        attn_sc[:, sl] = _mm(p, v[:, sl]).astype(attn_sc.dtype)
    y = _mm(attn_sc[...], wo_ref[...]) + bo_ref[...] + x.astype(jnp.float32)
    o_ref[...] = _ln(y, g_ref[...], bb_ref[...]).astype(o_ref.dtype)


def _ffn_ln_kernel(x_ref, w1_ref, b1_ref, w2_ref, b2_ref, g_ref, bb_ref, o_ref):
    # Linear(E,4E) -> ReLU -> Linear(4E,E) -> residual add (f32) -> LayerNorm.
    x = x_ref[...]                                        # (tm, E) bf16
    h = jnp.maximum(_mm(x, w1_ref[...]) + b1_ref[...], 0.0)
    y = _mm(h, w2_ref[...]) + b2_ref[...] + x.astype(jnp.float32)
    o_ref[...] = _ln(y, g_ref[...], bb_ref[...]).astype(o_ref.dtype)


def _deconv_core(x_ref, w_ref, b_ref, g_ref, bb_ref, s_out, k):
    # ConvTranspose1d(stride=1,pad=0) as a flipped conv on an IN-KERNEL zero-padded input
    # (no HBM-level jnp.pad round trip), im2col slab -> one big-K matmul, then ReLU + LayerNorm.
    x = x_ref[...]                                        # (s_mid, E) bf16
    E = x.shape[-1]
    if k > 1:
        z = jnp.zeros((k - 1, E), x.dtype)
        xp = jnp.concatenate([z, x, z], axis=0)           # (s_mid + 2(k-1), E)
        slab = jnp.concatenate([xp[j:j + s_out, :] for j in range(k)], axis=-1)
    else:
        slab = x
    y = jnp.maximum(_mm(slab, w_ref[...]) + b_ref[...], 0.0)
    return _ln(y, g_ref[...], bb_ref[...])                # (s_out, E) f32


def _deconv_ln_mix_kernel(x_ref, res_ref, w_ref, b_ref, g_ref, bb_ref, o_ref,
                          *, k, a_new, a_res):
    y = _deconv_core(x_ref, w_ref, b_ref, g_ref, bb_ref, o_ref.shape[0], k)
    o_ref[...] = (a_new * y + a_res * res_ref[...].astype(jnp.float32)).astype(o_ref.dtype)


def _deconv_ln_mix_pred_kernel(x_ref, res_ref, w_ref, b_ref, g_ref, bb_ref,
                               wp_ref, bp_ref, o_ref, *, k, a_new, a_res):
    # Last layer: deconv+ReLU+LN+mix fused with the pred Linear(E,1) matvec.  The prediction is
    # emitted as a lane-dense (1, S) row (no nout=1 masked column stores) and the final (S, E)
    # activation never goes back to HBM.
    s_out = o_ref.shape[1]
    y = _deconv_core(x_ref, w_ref, b_ref, g_ref, bb_ref, s_out, k)
    y = a_new * y + a_res * res_ref[...].astype(jnp.float32)      # (S, E) f32
    o_ref[...] = (_mm_nt(wp_ref[...], y) + bp_ref[...]).astype(o_ref.dtype)   # (1, S)


def _linear_kernel(x_ref, w_ref, b_ref, o_ref):
    # Generic pred Linear(E, nout) fallback (nout != 1).
    o_ref[...] = (_mm(x_ref[...], w_ref[...]) + b_ref[...]).astype(o_ref.dtype)


# ----------------------------- pallas_call wrappers -----------------------------

def _compiler_params():
    return pltpu.CompilerParams(dimension_semantics=("parallel",),
                                vmem_limit_bytes=VMEM_LIMIT_BYTES)


def _row_tile(m, row_bytes, cap=512, budget=6 << 20):
    # Biggest row tile <= cap whose per-tile activation working set fits a VMEM budget
    # (drops 512 -> 256 automatically for the f32 4E FFN intermediate at large E; v7x-safe).
    t = cap
    while t > 8 and t * row_bytes > budget:
        t //= 2
    return m if m <= t else t


def _const_spec(arr):
    # Fully VMEM-resident weight/bias/LN constant (same block for every grid step).
    # TODO(synk): pipeline_mode=pl.Buffered(1) would stop these from being double-buffered;
    # left off here for portability across jax versions - bf16 weights already halve residency.
    nd = arr.ndim
    return pl.BlockSpec(arr.shape, lambda i, _nd=nd: (0,) * _nd)


def _rowwise_call(kernel, x, consts, out_cols, out_dtype, row_bytes):
    # Tile the leading (row) axis; weights stay fully VMEM-resident across the grid.
    M = x.shape[0]
    tm = _row_tile(M, row_bytes)
    x_spec = pl.BlockSpec((tm,) + x.shape[1:],
                          lambda i, _nd=x.ndim: (i,) + (0,) * (_nd - 1))
    in_specs = [x_spec] + [_const_spec(c) for c in consts]
    out_spec = pl.BlockSpec((tm, out_cols), lambda i: (i, 0))
    return pl.pallas_call(
        kernel,
        out_shape=jax.ShapeDtypeStruct((M, out_cols), out_dtype),
        grid=(pl.cdiv(M, tm),),
        in_specs=in_specs,
        out_specs=out_spec,
        compiler_params=_compiler_params(),
    )(x, *consts)


def _batchwise_call(kernel, xs, consts, out_tail, out_dtype, scratch_shapes=()):
    # One batch element per grid step (leading dim squeezed); weights fully resident.
    # TODO(synk): on v7x (2 TCs) / tiny B, a 2-D (B, S-tile) grid with halo'd conv input blocks
    # would expose more pipeline steps; kept 1-D since attention needs the full sequence anyway.
    B = xs[0].shape[0]
    in_specs = []
    for a in xs:
        in_specs.append(pl.BlockSpec((None,) + a.shape[1:],
                                     lambda b, _nd=a.ndim: (b,) + (0,) * (_nd - 1)))
    in_specs += [_const_spec(c) for c in consts]
    out_spec = pl.BlockSpec((None,) + out_tail,
                            lambda b, _n=len(out_tail): (b,) + (0,) * _n)
    return pl.pallas_call(
        kernel,
        out_shape=jax.ShapeDtypeStruct((B,) + out_tail, out_dtype),
        grid=(B,),
        in_specs=in_specs,
        out_specs=out_spec,
        scratch_shapes=list(scratch_shapes),
        compiler_params=_compiler_params(),
    )(*xs, *consts)


# ----------------------------- parameters -----------------------------

def init_params(key, nin, nout, E, nlayers, ds):
    # Generated in the PyTorch layouts; prepare_params() does the one-time layout transform.
    keys = iter(jax.random.split(key, 256))

    def w(shape, scale=0.05):
        return jax.random.normal(next(keys), shape, jnp.float32) * scale

    raw = {
        "resize_w": w((E, nin)), "resize_b": w((E,)),          # nn.Linear(nin, E)
        "down_w": w((E, E, ds)), "down_b": w((E,)),            # Conv1d(E, E, ds, stride=ds)
        "ln0_g": jnp.ones((E,), jnp.float32), "ln0_b": jnp.zeros((E,), jnp.float32),
        "pred_w": w((nout, E)), "pred_b": w((nout,)),          # nn.Linear(E, nout)
        "layers": [],
    }
    for i in range(nlayers):
        k = (nlayers - i) * 2 - 1
        raw["layers"].append({
            "conv_w": w((E, E, k)), "conv_b": w((E,)),         # Conv1d(E, E, k)
            "ln1_g": jnp.ones((E,), jnp.float32), "ln1_b": jnp.zeros((E,), jnp.float32),
            "attn_in_w": w((3 * E, E)), "attn_in_b": w((3 * E,)),
            "attn_out_w": w((E, E)), "attn_out_b": w((E,)),
            "t_ln1_g": jnp.ones((E,), jnp.float32), "t_ln1_b": jnp.zeros((E,), jnp.float32),
            "ff1_w": w((4 * E, E)), "ff1_b": w((4 * E,)),
            "ff2_w": w((E, 4 * E)), "ff2_b": w((E,)),
            "t_ln2_g": jnp.ones((E,), jnp.float32), "t_ln2_b": jnp.zeros((E,), jnp.float32),
            "deconv_w": w((E, E, k)), "deconv_b": w((E,)),     # ConvTranspose1d weight (in,out,k)
            "ln2_g": jnp.ones((E,), jnp.float32), "ln2_b": jnp.zeros((E,), jnp.float32),
        })
    return raw


def prepare_params(raw):
    # One-time weight layout plumbing + single bf16 cast, hoisted out of the forward pass.
    wdt = MATMUL_DTYPE

    def row(v):
        return v.reshape(1, -1)

    E = raw["ln0_g"].shape[0]
    ds = raw["down_w"].shape[2]
    nout = raw["pred_w"].shape[0]

    # Fold resize Linear into the stride-ds downsample conv (exact linear composition, in f32).
    wr = raw["resize_w"].T                                  # (nin, E)
    wd = jnp.transpose(raw["down_w"], (2, 1, 0))            # (ds, Ein, Eout), tap-major
    front_w = jnp.concatenate([wr @ wd[j] for j in range(ds)], axis=0)     # (ds*nin, E)
    front_b = raw["down_b"] + sum(raw["resize_b"] @ wd[j] for j in range(ds))

    p = {
        "front_w": front_w.astype(wdt), "front_b": row(front_b),
        "ln0_g": row(raw["ln0_g"]), "ln0_b": row(raw["ln0_b"]),
        "pred_w": raw["pred_w"].T.astype(wdt),              # (E, nout) generic fallback
        "pred_b": row(raw["pred_b"]),
        "layers": [],
    }
    if nout == 1:
        p["pred_w_row"] = raw["pred_w"].astype(wdt)         # (1, E) for the fused lane-dense pred

    for lr in raw["layers"]:
        k = lr["conv_w"].shape[2]
        p["layers"].append({
            # Conv1d: tap-stacked (k*Ein, Eout) so the kernel does one big-K matmul.
            "conv_w": jnp.transpose(lr["conv_w"], (2, 1, 0)).reshape(k * E, E).astype(wdt),
            "conv_b": row(lr["conv_b"]),
            "ln1_g": row(lr["ln1_g"]), "ln1_b": row(lr["ln1_b"]),
            "attn_in_w": lr["attn_in_w"].T.astype(wdt),      # (E, 3E)
            "attn_in_b": row(lr["attn_in_b"]),
            "attn_out_w": lr["attn_out_w"].T.astype(wdt),    # (E, E)
            "attn_out_b": row(lr["attn_out_b"]),
            "t_ln1_g": row(lr["t_ln1_g"]), "t_ln1_b": row(lr["t_ln1_b"]),
            "ff1_w": lr["ff1_w"].T.astype(wdt), "ff1_b": row(lr["ff1_b"]),
            "ff2_w": lr["ff2_w"].T.astype(wdt), "ff2_b": row(lr["ff2_b"]),
            "t_ln2_g": row(lr["t_ln2_g"]), "t_ln2_b": row(lr["t_ln2_b"]),
            # ConvTranspose1d(stride=1,pad=0) == Conv1d with flipped taps on a (k-1)-padded input.
            "deconv_w": jnp.transpose(jnp.flip(lr["deconv_w"], axis=-1),
                                      (2, 0, 1)).reshape(k * E, E).astype(wdt),
            "deconv_b": row(lr["deconv_b"]),
            "ln2_g": row(lr["ln2_g"]), "ln2_b": row(lr["ln2_b"]),
        })
    return p


# ----------------------------- forward -----------------------------

def sakt_forward(params, x, nheads):
    # x: (B, nin, L)
    B, nin, L = x.shape
    E = params["ln0_g"].shape[1]
    ds = params["front_w"].shape[0] // nin
    assert L % ds == 0, "sequence length must be divisible by downsample_rate"
    S = L // ds

    # resize Linear + fist_downsample Conv1d (folded) + layer_normal  (single fused kernel).
    # TODO(synk): the (B,nin,L)->(B,L,nin) transpose remains host-side XLA glue (tiny for small
    # nin); the subsequent reshape to (B*S, ds*nin) is contiguity-preserving (free).
    x_rows = jnp.transpose(x, (0, 2, 1)).reshape(B * S, ds * nin)
    h = _rowwise_call(
        _front_kernel, x_rows,
        [params["front_w"], params["front_b"], params["ln0_g"], params["ln0_b"]],
        E, ACT_DTYPE, row_bytes=4 * (ds * nin + 4 * E),
    ).reshape(B, S, E)
    # (GRU output x_lstm is computed-and-discarded in PyTorch when feature_extractor is None.)

    nl = len(params["layers"])
    pred_fused = "pred_w_row" in params
    out = None

    for li, lp in enumerate(params["layers"]):
        k = lp["conv_w"].shape[0] // E
        s_mid = S - k + 1
        res = h                                                    # (B, S, E) bf16

        # conv(k) + ReLU + LayerNorm1
        h = _batchwise_call(
            functools.partial(_conv_ln_kernel, k=k), [h],
            [lp["conv_w"], lp["conv_b"], lp["ln1_g"], lp["ln1_b"]],
            (s_mid, E), ACT_DTYPE)

        # transformer encoder layer (post-norm): fused attention block + fused FFN block
        h = _batchwise_call(
            functools.partial(_attn_block_kernel, H=nheads), [h],
            [lp["attn_in_w"], lp["attn_in_b"], lp["attn_out_w"], lp["attn_out_b"],
             lp["t_ln1_g"], lp["t_ln1_b"]],
            (s_mid, E), ACT_DTYPE,
            scratch_shapes=[pltpu.VMEM((s_mid, E), ACT_DTYPE)])
        h = _rowwise_call(
            _ffn_ln_kernel, h.reshape(B * s_mid, E),
            [lp["ff1_w"], lp["ff1_b"], lp["ff2_w"], lp["ff2_b"],
             lp["t_ln2_g"], lp["t_ln2_b"]],
            E, ACT_DTYPE, row_bytes=32 * E,
        ).reshape(B, s_mid, E)

        # deconv(k) + ReLU + LayerNorm2 + 0.5*x + 0.5*res (padding done in-kernel);
        # the last layer also fuses the pred matvec into a lane-dense (1, S) output.
        if li == nl - 1 and pred_fused:
            out = _batchwise_call(
                functools.partial(_deconv_ln_mix_pred_kernel, k=k, a_new=0.5, a_res=0.5),
                [h, res],
                [lp["deconv_w"], lp["deconv_b"], lp["ln2_g"], lp["ln2_b"],
                 params["pred_w_row"], params["pred_b"]],
                (1, S), jnp.float32)[:, 0, :]                      # (B, S), .squeeze(-1)
        else:
            h = _batchwise_call(
                functools.partial(_deconv_ln_mix_kernel, k=k, a_new=0.5, a_res=0.5),
                [h, res],
                [lp["deconv_w"], lp["deconv_b"], lp["ln2_g"], lp["ln2_b"]],
                (S, E), ACT_DTYPE)

    if out is not None:
        return out

    # Generic pred path (nout != 1): narrow-lane output but negligible work.
    nout = params["pred_w"].shape[1]
    out = _rowwise_call(
        _linear_kernel, h.reshape(B * S, E),
        [params["pred_w"], params["pred_b"]],
        nout, jnp.float32, row_bytes=8 * E,
    ).reshape(B, S, nout)
    return out[..., 0] if nout == 1 else out


# ----------------------------- main -----------------------------

if __name__ == "__main__":
    B, nin, L = 2, 4, 16
    E, nlayers, nheads, ds, nout = 32, 2, 4, 2, 1
    assert E % nheads == 0

    key = jax.random.PRNGKey(0)
    kx, kp = jax.random.split(key)
    x = jax.random.normal(kx, (B, nin, L), jnp.float32)
    params = prepare_params(init_params(kp, nin, nout, E, nlayers, ds))

    fwd = jax.jit(lambda p, xx: sakt_forward(p, xx, nheads))
    out = jax.block_until_ready(fwd(params, x))

    assert out.shape == (B, L // ds), out.shape
    assert bool(jnp.all(jnp.isfinite(out)))
    print("KERNEL_OK")
</pallas_src>

<mosaic_0001>
module attributes {stable_mosaic.version = 11 : i64} {
  func.func @_front_kernel(%arg0: i32, %arg1: memref<16x8xf32, #tpu.memory_space<vmem>>, %arg2: memref<8x32xbf16, #tpu.memory_space<vmem>>, %arg3: memref<1x32xf32, #tpu.memory_space<vmem>>, %arg4: memref<1x32xf32, #tpu.memory_space<vmem>>, %arg5: memref<1x32xf32, #tpu.memory_space<vmem>>, %arg6: memref<16x32xbf16, #tpu.memory_space<vmem>>) attributes {dimension_semantics = [#tpu.dimension_semantics<parallel>], iteration_bounds = array<i64: 1>, scalar_prefetch = 0 : i64, scratch_operands = 0 : i64, tpu.core_type = #tpu.core_type<tc>, window_params = [{transform_indices = @transform_0, window_bounds = array<i64: 16, 8>}, {pipeline_mode = #tpu.pipeline_mode<synchronous>, transform_indices = @transform_1, window_bounds = array<i64: 8, 32>}, {pipeline_mode = #tpu.pipeline_mode<synchronous>, transform_indices = @transform_2, window_bounds = array<i64: 1, 32>}, {pipeline_mode = #tpu.pipeline_mode<synchronous>, transform_indices = @transform_3, window_bounds = array<i64: 1, 32>}, {pipeline_mode = #tpu.pipeline_mode<synchronous>, transform_indices = @transform_4, window_bounds = array<i64: 1, 32>}, {transform_indices = @transform_5, window_bounds = array<i64: 16, 32>}]} {
    %c0 = arith.constant 0 : index
    %c0_0 = arith.constant 0 : index
    %0 = vector.load %arg1[%c0, %c0_0] : memref<16x8xf32, #tpu.memory_space<vmem>>, vector<16x8xf32>
    %c0_1 = arith.constant 0 : index
    %c0_2 = arith.constant 0 : index
    %1 = vector.load %arg2[%c0_1, %c0_2] : memref<8x32xbf16, #tpu.memory_space<vmem>>, vector<8x32xbf16>
    %2 = arith.truncf %0 : vector<16x8xf32> to vector<16x8xbf16>
    %cst = arith.constant dense<0.000000e+00> : vector<16x32xf32>
    %3 = tpu.matmul %2, %1, %cst {dimension_numbers = #tpu.dot_dimension_numbers<[1], [0], [0], [1], [0, 0, 1, 1], [], []>} : vector<16x8xbf16>, vector<8x32xbf16>, vector<16x32xf32> -> vector<16x32xf32>
    %c0_3 = arith.constant 0 : index
    %c0_4 = arith.constant 0 : index
    %4 = vector.load %arg3[%c0_3, %c0_4] : memref<1x32xf32, #tpu.memory_space<vmem>>, vector<1x32xf32>
    %5 = vector.broadcast %4 : vector<1x32xf32> to vector<16x32xf32>
    %6 = arith.addf %3, %5 : vector<16x32xf32>
    %c0_5 = arith.constant 0 : index
    %c0_6 = arith.constant 0 : index
    %7 = vector.load %arg4[%c0_5, %c0_6] : memref<1x32xf32, #tpu.memory_space<vmem>>, vector<1x32xf32>
    %c0_7 = arith.constant 0 : index
    %c0_8 = arith.constant 0 : index
    %8 = vector.load %arg5[%c0_7, %c0_8] : memref<1x32xf32, #tpu.memory_space<vmem>>, vector<1x32xf32>
    %cst_9 = arith.constant dense<0.000000e+00> : vector<16xf32>
    %9 = vector.multi_reduction <add>, %6, %cst_9 [1] : vector<16x32xf32> to vector<16xf32>
    %10 = vector.shape_cast %9 : vector<16xf32> to vector<16x1xf32>
    %cst_10 = arith.constant 3.200000e+01 : f32
    %11 = vector.broadcast %cst_10 : f32 to vector<16x1xf32>
    %12 = arith.divf %10, %11 : vector<16x1xf32>
    %13 = vector.broadcast %12 : vector<16x1xf32> to vector<16x32xf32>
    %14 = arith.subf %6, %13 : vector<16x32xf32>
    %15 = arith.mulf %14, %14 : vector<16x32xf32>
    %cst_11 = arith.constant dense<0.000000e+00> : vector<16xf32>
    %16 = vector.multi_reduction <add>, %15, %cst_11 [1] : vector<16x32xf32> to vector<16xf32>
    %17 = vector.shape_cast %16 : vector<16xf32> to vector<16x1xf32>
    %cst_12 = arith.constant 3.200000e+01 : f32
    %18 = vector.broadcast %cst_12 : f32 to vector<16x1xf32>
    %19 = arith.divf %17, %18 : vector<16x1xf32>
    %20 = vector.broadcast %12 : vector<16x1xf32> to vector<16x32xf32>
    %21 = arith.subf %6, %20 : vector<16x32xf32>
    %cst_13 = arith.constant 9.99999974E-6 : f32
    %22 = vector.broadcast %cst_13 : f32 to vector<16x1xf32>
    %23 = arith.addf %19, %22 : vector<16x1xf32>
    %24 = math.rsqrt %23 : vector<16x1xf32>
    %25 = vector.broadcast %24 : vector<16x1xf32> to vector<16x32xf32>
    %26 = arith.mulf %21, %25 : vector<16x32xf32>
    %27 = vector.broadcast %7 : vector<1x32xf32> to vector<16x32xf32>
    %28 = arith.mulf %26, %27 : vector<16x32xf32>
    %29 = vector.broadcast %8 : vector<1x32xf32> to vector<16x32xf32>
    %30 = arith.addf %28, %29 : vector<16x32xf32>
    %31 = arith.truncf %30 : vector<16x32xf32> to vector<16x32xbf16>
    %c0_14 = arith.constant 0 : index
    %c0_15 = arith.constant 0 : index
    %32 = vector.load %arg6[%c0_14, %c0_15] : memref<16x32xbf16, #tpu.memory_space<vmem>>, vector<16x32xbf16>
    tpu.vector_store %arg6[%c0_14, %c0_15], %31 {strides = array<i32>} : memref<16x32xbf16, #tpu.memory_space<vmem>>, vector<16x32xbf16>,
    return
  }
  func.func @transform_0(%arg0: i32) -> (i32, i32) {
    %c0_i32 = arith.constant 0 : i32
    %c0_i32_0 = arith.constant 0 : i32
    return %arg0, %c0_i32 : i32, i32
  }
  func.func @transform_1(%arg0: i32) -> (i32, i32) {
    %c0_i32 = arith.constant 0 : i32
    %c0_i32_0 = arith.constant 0 : i32
    %c0_i32_1 = arith.constant 0 : i32
    return %c0_i32, %c0_i32_0 : i32, i32
  }
  func.func @transform_2(%arg0: i32) -> (i32, i32) {
    %c0_i32 = arith.constant 0 : i32
    %c0_i32_0 = arith.constant 0 : i32
    %c0_i32_1 = arith.constant 0 : i32
    return %c0_i32, %c0_i32_0 : i32, i32
  }
  func.func @transform_3(%arg0: i32) -> (i32, i32) {
    %c0_i32 = arith.constant 0 : i32
    %c0_i32_0 = arith.constant 0 : i32
    %c0_i32_1 = arith.constant 0 : i32
    return %c0_i32, %c0_i32_0 : i32, i32
  }
  func.func @transform_4(%arg0: i32) -> (i32, i32) {
    %c0_i32 = arith.constant 0 : i32
    %c0_i32_0 = arith.constant 0 : i32
    %c0_i32_1 = arith.constant 0 : i32
    return %c0_i32, %c0_i32_0 : i32, i32
  }
  func.func @transform_5(%arg0: i32) -> (i32, i32) {
    %c0_i32 = arith.constant 0 : i32
    %c0_i32_0 = arith.constant 0 : i32
    return %arg0, %c0_i32 : i32, i32
  }
}

module attributes {stable_mosaic.version = 11 : i64} {
  func.func @_conv_ln_kernel(%arg0: i32, %arg1: memref<1x8x32xbf16, #tpu.memory_space<vmem>>, %arg2: memref<96x32xbf16, #tpu.memory_space<vmem>>, %arg3: memref<1x32xf32, #tpu.memory_space<vmem>>, %arg4: memref<1x32xf32, #tpu.memory_space<vmem>>, %arg5: memref<1x32xf32, #tpu.memory_space<vmem>>, %arg6: memref<1x6x32xbf16, #tpu.memory_space<vmem>>) attributes {dimension_semantics = [#tpu.dimension_semantics<parallel>], iteration_bounds = array<i64: 2>, scalar_prefetch = 0 : i64, scratch_operands = 0 : i64, tpu.core_type = #tpu.core_type<tc>, window_params = [{transform_indices = @transform_0, window_bounds = array<i64: 1, 8, 32>}, {pipeline_mode = #tpu.pipeline_mode<synchronous>, transform_indices = @transform_1, window_bounds = array<i64: 96, 32>}, {pipeline_mode = #tpu.pipeline_mode<synchronous>, transform_indices = @transform_2, window_bounds = array<i64: 1, 32>}, {pipeline_mode = #tpu.pipeline_mode<synchronous>, transform_indices = @transform_3, window_bounds = array<i64: 1, 32>}, {pipeline_mode = #tpu.pipeline_mode<synchronous>, transform_indices = @transform_4, window_bounds = array<i64: 1, 32>}, {transform_indices = @transform_5, window_bounds = array<i64: 1, 6, 32>}]} {
    %c0 = arith.constant 0 : index
    %c0_0 = arith.constant 0 : index
    %c0_1 = arith.constant 0 : index
    %0 = vector.load %arg1[%c0, %c0_0, %c0_1] : memref<1x8x32xbf16, #tpu.memory_space<vmem>>, vector<1x8x32xbf16>
    %1 = vector.shape_cast %0 : vector<1x8x32xbf16> to vector<8x32xbf16>
    %2 = vector.extract_strided_slice %1 {offsets = [0, 0], sizes = [6, 32], strides = [1, 1]} : vector<8x32xbf16> to vector<6x32xbf16>
    %3 = vector.extract_strided_slice %1 {offsets = [1, 0], sizes = [6, 32], strides = [1, 1]} : vector<8x32xbf16> to vector<6x32xbf16>
    %4 = vector.extract_strided_slice %1 {offsets = [2, 0], sizes = [6, 32], strides = [1, 1]} : vector<8x32xbf16> to vector<6x32xbf16>
    %5 = tpu.concatenate %2, %3, %4 in 1 : vector<6x32xbf16>, vector<6x32xbf16>, vector<6x32xbf16> -> vector<6x96xbf16>
    %c0_2 = arith.constant 0 : index
    %c0_3 = arith.constant 0 : index
    %6 = vector.load %arg2[%c0_2, %c0_3] : memref<96x32xbf16, #tpu.memory_space<vmem>>, vector<96x32xbf16>
    %cst = arith.constant dense<0.000000e+00> : vector<6x32xf32>
    %7 = tpu.matmul %5, %6, %cst {dimension_numbers = #tpu.dot_dimension_numbers<[1], [0], [0], [1], [0, 0, 1, 1], [], []>} : vector<6x96xbf16>, vector<96x32xbf16>, vector<6x32xf32> -> vector<6x32xf32>
    %c0_4 = arith.constant 0 : index
    %c0_5 = arith.constant 0 : index
    %8 = vector.load %arg3[%c0_4, %c0_5] : memref<1x32xf32, #tpu.memory_space<vmem>>, vector<1x32xf32>
    %9 = vector.broadcast %8 : vector<1x32xf32> to vector<6x32xf32>
    %10 = arith.addf %7, %9 : vector<6x32xf32>
    %cst_6 = arith.constant 0.000000e+00 : f32
    %11 = vector.broadcast %cst_6 : f32 to vector<6x32xf32>
    %12 = arith.maximumf %10, %11 : vector<6x32xf32>
    %c0_7 = arith.constant 0 : index
    %c0_8 = arith.constant 0 : index
    %13 = vector.load %arg4[%c0_7, %c0_8] : memref<1x32xf32, #tpu.memory_space<vmem>>, vector<1x32xf32>
    %c0_9 = arith.constant 0 : index
    %c0_10 = arith.constant 0 : index
    %14 = vector.load %arg5[%c0_9, %c0_10] : memref<1x32xf32, #tpu.memory_space<vmem>>, vector<1x32xf32>
    %cst_11 = arith.constant dense<0.000000e+00> : vector<6xf32>
    %15 = vector.multi_reduction <add>, %12, %cst_11 [1] : vector<6x32xf32> to vector<6xf32>
    %16 = vector.shape_cast %15 : vector<6xf32> to vector<6x1xf32>
    %cst_12 = arith.constant 3.200000e+01 : f32
    %17 = vector.broadcast %cst_12 : f32 to vector<6x1xf32>
    %18 = arith.divf %16, %17 : vector<6x1xf32>
    %19 = vector.broadcast %18 : vector<6x1xf32> to vector<6x32xf32>
    %20 = arith.subf %12, %19 : vector<6x32xf32>
    %21 = arith.mulf %20, %20 : vector<6x32xf32>
    %cst_13 = arith.constant dense<0.000000e+00> : vector<6xf32>
    %22 = vector.multi_reduction <add>, %21, %cst_13 [1] : vector<6x32xf32> to vector<6xf32>
    %23 = vector.shape_cast %22 : vector<6xf32> to vector<6x1xf32>
    %cst_14 = arith.constant 3.200000e+01 : f32
    %24 = vector.broadcast %cst_14 : f32 to vector<6x1xf32>
    %25 = arith.divf %23, %24 : vector<6x1xf32>
    %26 = vector.broadcast %18 : vector<6x1xf32> to vector<6x32xf32>
    %27 = arith.subf %12, %26 : vector<6x32xf32>
    %cst_15 = arith.constant 9.99999974E-6 : f32
    %28 = vector.broadcast %cst_15 : f32 to vector<6x1xf32>
    %29 = arith.addf %25, %28 : vector<6x1xf32>
    %30 = math.rsqrt %29 : vector<6x1xf32>
    %31 = vector.broadcast %30 : vector<6x1xf32> to vector<6x32xf32>
    %32 = arith.mulf %27, %31 : vector<6x32xf32>
    %33 = vector.broadcast %13 : vector<1x32xf32> to vector<6x32xf32>
    %34 = arith.mulf %32, %33 : vector<6x32xf32>
    %35 = vector.broadcast %14 : vector<1x32xf32> to vector<6x32xf32>
    %36 = arith.addf %34, %35 : vector<6x32xf32>
    %37 = arith.truncf %36 : vector<6x32xf32> to vector<6x32xbf16>
    %c0_16 = arith.constant 0 : index
    %c0_17 = arith.constant 0 : index
    %c0_18 = arith.constant 0 : index
    %38 = vector.load %arg6[%c0_16, %c0_17, %c0_18] : memref<1x6x32xbf16, #tpu.memory_space<vmem>>, vector<1x6x32xbf16>
    %39 = vector.shape_cast %38 : vector<1x6x32xbf16> to vector<6x32xbf16>
    %40 = vector.shape_cast %37 : vector<6x32xbf16> to vector<1x6x32xbf16>
    tpu.vector_store %arg6[%c0_16, %c0_17, %c0_18], %40 {strides = array<i32>} : memref<1x6x32xbf16, #tpu.memory_space<vmem>>, vector<1x6x32xbf16>,
    return
  }
  func.func @transform_0(%arg0: i32) -> (i32, i32, i32) {
    %c0_i32 = arith.constant 0 : i32
    %c0_i32_0 = arith.constant 0 : i32
    %c0_i32_1 = arith.constant 0 : i32
    return %arg0, %c0_i32, %c0_i32_0 : i32, i32, i32
  }
  func.func @transform_1(%arg0: i32) -> (i32, i32) {
    %c0_i32 = arith.constant 0 : i32
    %c0_i32_0 = arith.constant 0 : i32
    %c0_i32_1 = arith.constant 0 : i32
    return %c0_i32, %c0_i32_0 : i32, i32
  }
  func.func @transform_2(%arg0: i32) -> (i32, i32) {
    %c0_i32 = arith.constant 0 : i32
    %c0_i32_0 = arith.constant 0 : i32
    %c0_i32_1 = arith.constant 0 : i32
    return %c0_i32, %c0_i32_0 : i32, i32
  }
  func.func @transform_3(%arg0: i32) -> (i32, i32) {
    %c0_i32 = arith.constant 0 : i32
    %c0_i32_0 = arith.constant 0 : i32
    %c0_i32_1 = arith.constant 0 : i32
    return %c0_i32, %c0_i32_0 : i32, i32
  }
  func.func @transform_4(%arg0: i32) -> (i32, i32) {
    %c0_i32 = arith.constant 0 : i32
    %c0_i32_0 = arith.constant 0 : i32
    %c0_i32_1 = arith.constant 0 : i32
    return %c0_i32, %c0_i32_0 : i32, i32
  }
  func.func @transform_5(%arg0: i32) -> (i32, i32, i32) {
    %c0_i32 = arith.constant 0 : i32
    %c0_i32_0 = arith.constant 0 : i32
    %c0_i32_1 = arith.constant 0 : i32
    return %arg0, %c0_i32, %c0_i32_0 : i32, i32, i32
  }
}

module attributes {stable_mosaic.version = 11 : i64} {
  func.func @_attn_block_kernel(%arg0: i32, %arg1: memref<1x6x32xbf16, #tpu.memory_space<vmem>>, %arg2: memref<32x96xbf16, #tpu.memory_space<vmem>>, %arg3: memref<1x96xf32, #tpu.memory_space<vmem>>, %arg4: memref<32x32xbf16, #tpu.memory_space<vmem>>, %arg5: memref<1x32xf32, #tpu.memory_space<vmem>>, %arg6: memref<1x32xf32, #tpu.memory_space<vmem>>, %arg7: memref<1x32xf32, #tpu.memory_space<vmem>>, %arg8: memref<1x6x32xbf16, #tpu.memory_space<vmem>>, %arg9: memref<6x32xbf16, #tpu.memory_space<vmem>>) attributes {dimension_semantics = [#tpu.dimension_semantics<parallel>], iteration_bounds = array<i64: 2>, scalar_prefetch = 0 : i64, scratch_operands = 1 : i64, tpu.core_type = #tpu.core_type<tc>, window_params = [{transform_indices = @transform_0, window_bounds = array<i64: 1, 6, 32>}, {pipeline_mode = #tpu.pipeline_mode<synchronous>, transform_indices = @transform_1, window_bounds = array<i64: 32, 96>}, {pipeline_mode = #tpu.pipeline_mode<synchronous>, transform_indices = @transform_2, window_bounds = array<i64: 1, 96>}, {pipeline_mode = #tpu.pipeline_mode<synchronous>, transform_indices = @transform_3, window_bounds = array<i64: 32, 32>}, {pipeline_mode = #tpu.pipeline_mode<synchronous>, transform_indices = @transform_4, window_bounds = array<i64: 1, 32>}, {pipeline_mode = #tpu.pipeline_mode<synchronous>, transform_indices = @transform_5, window_bounds = array<i64: 1, 32>}, {pipeline_mode = #tpu.pipeline_mode<synchronous>, transform_indices = @transform_6, window_bounds = array<i64: 1, 32>}, {transform_indices = @transform_7, window_bounds = array<i64: 1, 6, 32>}]} {
    %c0 = arith.constant 0 : index
    %c0_0 = arith.constant 0 : index
    %c0_1 = arith.constant 0 : index
    %0 = vector.load %arg1[%c0, %c0_0, %c0_1] : memref<1x6x32xbf16, #tpu.memory_space<vmem>>, vector<1x6x32xbf16>
    %1 = vector.shape_cast %0 : vector<1x6x32xbf16> to vector<6x32xbf16>
    %c0_2 = arith.constant 0 : index
    %c0_3 = arith.constant 0 : index
    %2 = vector.load %arg2[%c0_2, %c0_3] : memref<32x96xbf16, #tpu.memory_space<vmem>>, vector<32x96xbf16>
    %cst = arith.constant dense<0.000000e+00> : vector<6x96xf32>
    %3 = tpu.matmul %1, %2, %cst {dimension_numbers = #tpu.dot_dimension_numbers<[1], [0], [0], [1], [0, 0, 1, 1], [], []>} : vector<6x32xbf16>, vector<32x96xbf16>, vector<6x96xf32> -> vector<6x96xf32>
    %c0_4 = arith.constant 0 : index
    %c0_5 = arith.constant 0 : index
    %4 = vector.load %arg3[%c0_4, %c0_5] : memref<1x96xf32, #tpu.memory_space<vmem>>, vector<1x96xf32>
    %5 = vector.broadcast %4 : vector<1x96xf32> to vector<6x96xf32>
    %6 = arith.addf %3, %5 : vector<6x96xf32>
    %7 = vector.extract_strided_slice %6 {offsets = [0, 0], sizes = [6, 32], strides = [1, 1]} : vector<6x96xf32> to vector<6x32xf32>
    %cst_6 = arith.constant 0.353553385 : f32
    %8 = vector.broadcast %cst_6 : f32 to vector<6x32xf32>
    %9 = arith.mulf %7, %8 : vector<6x32xf32>
    %10 = arith.truncf %9 : vector<6x32xf32> to vector<6x32xbf16>
    %11 = vector.extract_strided_slice %6 {offsets = [0, 32], sizes = [6, 32], strides = [1, 1]} : vector<6x96xf32> to vector<6x32xf32>
    %12 = arith.truncf %11 : vector<6x32xf32> to vector<6x32xbf16>
    %13 = vector.extract_strided_slice %6 {offsets = [0, 64], sizes = [6, 32], strides = [1, 1]} : vector<6x96xf32> to vector<6x32xf32>
    %14 = arith.truncf %13 : vector<6x32xf32> to vector<6x32xbf16>
    %15 = vector.extract_strided_slice %10 {offsets = [0, 0], sizes = [6, 8], strides = [1, 1]} : vector<6x32xbf16> to vector<6x8xbf16>
    %16 = vector.extract_strided_slice %12 {offsets = [0, 0], sizes = [6, 8], strides = [1, 1]} : vector<6x32xbf16> to vector<6x8xbf16>
    %cst_7 = arith.constant dense<0.000000e+00> : vector<6x6xf32>
    %17 = tpu.matmul %15, %16, %cst_7 {dimension_numbers = #tpu.dot_dimension_numbers<[1], [1], [0], [0], [0, 0, 1, 0], [], []>} : vector<6x8xbf16>, vector<6x8xbf16>, vector<6x6xf32> -> vector<6x6xf32>
    %cst_8 = arith.constant dense<0xFF800000> : vector<6xf32>
    %18 = vector.multi_reduction <maximumf>, %17, %cst_8 [1] : vector<6x6xf32> to vector<6xf32>
    %19 = vector.shape_cast %18 : vector<6xf32> to vector<6x1xf32>
    %20 = vector.broadcast %19 : vector<6x1xf32> to vector<6x6xf32>
    %21 = arith.subf %17, %20 : vector<6x6xf32>
    %22 = math.exp %21 : vector<6x6xf32>
    %cst_9 = arith.constant dense<0.000000e+00> : vector<6xf32>
    %23 = vector.multi_reduction <add>, %22, %cst_9 [1] : vector<6x6xf32> to vector<6xf32>
    %24 = vector.shape_cast %23 : vector<6xf32> to vector<6x1xf32>
    %25 = tpu.reciprocal %24 {approx = true} : vector<6x1xf32> -> vector<6x1xf32>
    %26 = vector.broadcast %25 : vector<6x1xf32> to vector<6x6xf32>
    %27 = arith.mulf %22, %26 : vector<6x6xf32>
    %28 = vector.extract_strided_slice %14 {offsets = [0, 0], sizes = [6, 8], strides = [1, 1]} : vector<6x32xbf16> to vector<6x8xbf16>
    %29 = arith.truncf %27 : vector<6x6xf32> to vector<6x6xbf16>
    %cst_10 = arith.constant dense<0.000000e+00> : vector<6x8xf32>
    %30 = tpu.matmul %29, %28, %cst_10 {dimension_numbers = #tpu.dot_dimension_numbers<[1], [0], [0], [1], [0, 0, 1, 1], [], []>} : vector<6x6xbf16>, vector<6x8xbf16>, vector<6x8xf32> -> vector<6x8xf32>
    %31 = arith.truncf %30 : vector<6x8xf32> to vector<6x8xbf16>
    %c0_11 = arith.constant 0 : index
    %c0_12 = arith.constant 0 : index
    %32 = vector.load %arg9[%c0_11, %c0_12] : memref<6x32xbf16, #tpu.memory_space<vmem>>, vector<6x8xbf16>
    tpu.vector_store %arg9[%c0_11, %c0_12], %31 {strides = array<i32>} : memref<6x32xbf16, #tpu.memory_space<vmem>>, vector<6x8xbf16>,
    %33 = vector.extract_strided_slice %10 {offsets = [0, 8], sizes = [6, 8], strides = [1, 1]} : vector<6x32xbf16> to vector<6x8xbf16>
    %34 = vector.extract_strided_slice %12 {offsets = [0, 8], sizes = [6, 8], strides = [1, 1]} : vector<6x32xbf16> to vector<6x8xbf16>
    %cst_13 = arith.constant dense<0.000000e+00> : vector<6x6xf32>
    %35 = tpu.matmul %33, %34, %cst_13 {dimension_numbers = #tpu.dot_dimension_numbers<[1], [1], [0], [0], [0, 0, 1, 0], [], []>} : vector<6x8xbf16>, vector<6x8xbf16>, vector<6x6xf32> -> vector<6x6xf32>
    %cst_14 = arith.constant dense<0xFF800000> : vector<6xf32>
    %36 = vector.multi_reduction <maximumf>, %35, %cst_14 [1] : vector<6x6xf32> to vector<6xf32>
    %37 = vector.shape_cast %36 : vector<6xf32> to vector<6x1xf32>
    %38 = vector.broadcast %37 : vector<6x1xf32> to vector<6x6xf32>
    %39 = arith.subf %35, %38 : vector<6x6xf32>
    %40 = math.exp %39 : vector<6x6xf32>
    %cst_15 = arith.constant dense<0.000000e+00> : vector<6xf32>
    %41 = vector.multi_reduction <add>, %40, %cst_15 [1] : vector<6x6xf32> to vector<6xf32>
    %42 = vector.shape_cast %41 : vector<6xf32> to vector<6x1xf32>
    %43 = tpu.reciprocal %42 {approx = true} : vector<6x1xf32> -> vector<6x1xf32>
    %44 = vector.broadcast %43 : vector<6x1xf32> to vector<6x6xf32>
    %45 = arith.mulf %40, %44 : vector<6x6xf32>
    %46 = vector.extract_strided_slice %14 {offsets = [0, 8], sizes = [6, 8], strides = [1, 1]} : vector<6x32xbf16> to vector<6x8xbf16>
    %47 = arith.truncf %45 : vector<6x6xf32> to vector<6x6xbf16>
    %cst_16 = arith.constant dense<0.000000e+00> : vector<6x8xf32>
    %48 = tpu.matmul %47, %46, %cst_16 {dimension_numbers = #tpu.dot_dimension_numbers<[1], [0], [0], [1], [0, 0, 1, 1], [], []>} : vector<6x6xbf16>, vector<6x8xbf16>, vector<6x8xf32> -> vector<6x8xf32>
    %49 = arith.truncf %48 : vector<6x8xf32> to vector<6x8xbf16>
    %c0_17 = arith.constant 0 : index
    %c8 = arith.constant 8 : index
    %50 = vector.load %arg9[%c0_17, %c8] : memref<6x32xbf16, #tpu.memory_space<vmem>>, vector<6x8xbf16>
    tpu.vector_store %arg9[%c0_17, %c8], %49 {strides = array<i32>} : memref<6x32xbf16, #tpu.memory_space<vmem>>, vector<6x8xbf16>,
    %51 = vector.extract_strided_slice %10 {offsets = [0, 16], sizes = [6, 8], strides = [1, 1]} : vector<6x32xbf16> to vector<6x8xbf16>
    %52 = vector.extract_strided_slice %12 {offsets = [0, 16], sizes = [6, 8], strides = [1, 1]} : vector<6x32xbf16> to vector<6x8xbf16>
    %cst_18 = arith.constant dense<0.000000e+00> : vector<6x6xf32>
    %53 = tpu.matmul %51, %52, %cst_18 {dimension_numbers = #tpu.dot_dimension_numbers<[1], [1], [0], [0], [0, 0, 1, 0], [], []>} : vector<6x8xbf16>, vector<6x8xbf16>, vector<6x6xf32> -> vector<6x6xf32>
    %cst_19 = arith.constant dense<0xFF800000> : vector<6xf32>
    %54 = vector.multi_reduction <maximumf>, %53, %cst_19 [1] : vector<6x6xf32> to vector<6xf32>
    %55 = vector.shape_cast %54 : vector<6xf32> to vector<6x1xf32>
    %56 = vector.broadcast %55 : vector<6x1xf32> to vector<6x6xf32>
    %57 = arith.subf %53, %56 : vector<6x6xf32>
    %58 = math.exp %57 : vector<6x6xf32>
    %cst_20 = arith.constant dense<0.000000e+00> : vector<6xf32>
    %59 = vector.multi_reduction <add>, %58, %cst_20 [1] : vector<6x6xf32> to vector<6xf32>
    %60 = vector.shape_cast %59 : vector<6xf32> to vector<6x1xf32>
    %61 = tpu.reciprocal %60 {approx = true} : vector<6x1xf32> -> vector<6x1xf32>
    %62 = vector.broadcast %61 : vector<6x1xf32> to vector<6x6xf32>
    %63 = arith.mulf %58, %62 : vector<6x6xf32>
    %64 = vector.extract_strided_slice %14 {offsets = [0, 16], sizes = [6, 8], strides = [1, 1]} : vector<6x32xbf16> to vector<6x8xbf16>
    %65 = arith.truncf %63 : vector<6x6xf32> to vector<6x6xbf16>
    %cst_21 = arith.constant dense<0.000000e+00> : vector<6x8xf32>
    %66 = tpu.matmul %65, %64, %cst_21 {dimension_numbers = #tpu.dot_dimension_numbers<[1], [0], [0], [1], [0, 0, 1, 1], [], []>} : vector<6x6xbf16>, vector<6x8xbf16>, vector<6x8xf32> -> vector<6x8xf32>
    %67 = arith.truncf %66 : vector<6x8xf32> to vector<6x8xbf16>
    %c0_22 = arith.constant 0 : index
    %c16 = arith.constant 16 : index
    %68 = vector.load %arg9[%c0_22, %c16] : memref<6x32xbf16, #tpu.memory_space<vmem>>, vector<6x8xbf16>
    tpu.vector_store %arg9[%c0_22, %c16], %67 {strides = array<i32>} : memref<6x32xbf16, #tpu.memory_space<vmem>>, vector<6x8xbf16>,
    %69 = vector.extract_strided_slice %10 {offsets = [0, 24], sizes = [6, 8], strides = [1, 1]} : vector<6x32xbf16> to vector<6x8xbf16>
    %70 = vector.extract_strided_slice %12 {offsets = [0, 24], sizes = [6, 8], strides = [1, 1]} : vector<6x32xbf16> to vector<6x8xbf16>
    %cst_23 = arith.constant dense<0.000000e+00> : vector<6x6xf32>
    %71 = tpu.matmul %69, %70, %cst_23 {dimension_numbers = #tpu.dot_dimension_numbers<[1], [1], [0], [0], [0, 0, 1, 0], [], []>} : vector<6x8xbf16>, vector<6x8xbf16>, vector<6x6xf32> -> vector<6x6xf32>
    %cst_24 = arith.constant dense<0xFF800000> : vector<6xf32>
    %72 = vector.multi_reduction <maximumf>, %71, %cst_24 [1] : vector<6x6xf32> to vector<6xf32>
    %73 = vector.shape_cast %72 : vector<6xf32> to vector<6x1xf32>
    %74 = vector.broadcast %73 : vector<6x1xf32> to vector<6x6xf32>
    %75 = arith.subf %71, %74 : vector<6x6xf32>
    %76 = math.exp %75 : vector<6x6xf32>
    %cst_25 = arith.constant dense<0.000000e+00> : vector<6xf32>
    %77 = vector.multi_reduction <add>, %76, %cst_25 [1] : vector<6x6xf32> to vector<6xf32>
    %78 = vector.shape_cast %77 : vector<6xf32> to vector<6x1xf32>
    %79 = tpu.reciprocal %78 {approx = true} : vector<6x1xf32> -> vector<6x1xf32>
    %80 = vector.broadcast %79 : vector<6x1xf32> to vector<6x6xf32>
    %81 = arith.mulf %76, %80 : vector<6x6xf32>
    %82 = vector.extract_strided_slice %14 {offsets = [0, 24], sizes = [6, 8], strides = [1, 1]} : vector<6x32xbf16> to vector<6x8xbf16>
    %83 = arith.truncf %81 : vector<6x6xf32> to vector<6x6xbf16>
    %cst_26 = arith.constant dense<0.000000e+00> : vector<6x8xf32>
    %84 = tpu.matmul %83, %82, %cst_26 {dimension_numbers = #tpu.dot_dimension_numbers<[1], [0], [0], [1], [0, 0, 1, 1], [], []>} : vector<6x6xbf16>, vector<6x8xbf16>, vector<6x8xf32> -> vector<6x8xf32>
    %85 = arith.truncf %84 : vector<6x8xf32> to vector<6x8xbf16>
    %c0_27 = arith.constant 0 : index
    %c24 = arith.constant 24 : index
    %86 = vector.load %arg9[%c0_27, %c24] : memref<6x32xbf16, #tpu.memory_space<vmem>>, vector<6x8xbf16>
    tpu.vector_store %arg9[%c0_27, %c24], %85 {strides = array<i32>} : memref<6x32xbf16, #tpu.memory_space<vmem>>, vector<6x8xbf16>,
    %c0_28 = arith.constant 0 : index
    %c0_29 = arith.constant 0 : index
    %87 = vector.load %arg9[%c0_28, %c0_29] : memref<6x32xbf16, #tpu.memory_space<vmem>>, vector<6x32xbf16>
    %c0_30 = arith.constant 0 : index
    %c0_31 = arith.constant 0 : index
    %88 = vector.load %arg4[%c0_30, %c0_31] : memref<32x32xbf16, #tpu.memory_space<vmem>>, vector<32x32xbf16>
    %cst_32 = arith.constant dense<0.000000e+00> : vector<6x32xf32>
    %89 = tpu.matmul %87, %88, %cst_32 {dimension_numbers = #tpu.dot_dimension_numbers<[1], [0], [0], [1], [0, 0, 1, 1], [], []>} : vector<6x32xbf16>, vector<32x32xbf16>, vector<6x32xf32> -> vector<6x32xf32>
    %c0_33 = arith.constant 0 : index
    %c0_34 = arith.constant 0 : index
    %90 = vector.load %arg5[%c0_33, %c0_34] : memref<1x32xf32, #tpu.memory_space<vmem>>, vector<1x32xf32>
    %91 = vector.broadcast %90 : vector<1x32xf32> to vector<6x32xf32>
    %92 = arith.addf %89, %91 : vector<6x32xf32>
    %93 = arith.extf %1 : vector<6x32xbf16> to vector<6x32xf32>
    %94 = arith.addf %92, %93 : vector<6x32xf32>
    %c0_35 = arith.constant 0 : index
    %c0_36 = arith.constant 0 : index
    %95 = vector.load %arg6[%c0_35, %c0_36] : memref<1x32xf32, #tpu.memory_space<vmem>>, vector<1x32xf32>
    %c0_37 = arith.constant 0 : index
    %c0_38 = arith.constant 0 : index
    %96 = vector.load %arg7[%c0_37, %c0_38] : memref<1x32xf32, #tpu.memory_space<vmem>>, vector<1x32xf32>
    %cst_39 = arith.constant dense<0.000000e+00> : vector<6xf32>
    %97 = vector.multi_reduction <add>, %94, %cst_39 [1] : vector<6x32xf32> to vector<6xf32>
    %98 = vector.shape_cast %97 : vector<6xf32> to vector<6x1xf32>
    %cst_40 = arith.constant 3.200000e+01 : f32
    %99 = vector.broadcast %cst_40 : f32 to vector<6x1xf32>
    %100 = arith.divf %98, %99 : vector<6x1xf32>
    %101 = vector.broadcast %100 : vector<6x1xf32> to vector<6x32xf32>
    %102 = arith.subf %94, %101 : vector<6x32xf32>
    %103 = arith.mulf %102, %102 : vector<6x32xf32>
    %cst_41 = arith.constant dense<0.000000e+00> : vector<6xf32>
    %104 = vector.multi_reduction <add>, %103, %cst_41 [1] : vector<6x32xf32> to vector<6xf32>
    %105 = vector.shape_cast %104 : vector<6xf32> to vector<6x1xf32>
    %cst_42 = arith.constant 3.200000e+01 : f32
    %106 = vector.broadcast %cst_42 : f32 to vector<6x1xf32>
    %107 = arith.divf %105, %106 : vector<6x1xf32>
    %108 = vector.broadcast %100 : vector<6x1xf32> to vector<6x32xf32>
    %109 = arith.subf %94, %108 : vector<6x32xf32>
    %cst_43 = arith.constant 9.99999974E-6 : f32
    %110 = vector.broadcast %cst_43 : f32 to vector<6x1xf32>
    %111 = arith.addf %107, %110 : vector<6x1xf32>
    %112 = math.rsqrt %111 : vector<6x1xf32>
    %113 = vector.broadcast %112 : vector<6x1xf32> to vector<6x32xf32>
    %114 = arith.mulf %109, %113 : vector<6x32xf32>
    %115 = vector.broadcast %95 : vector<1x32xf32> to vector<6x32xf32>
    %116 = arith.mulf %114, %115 : vector<6x32xf32>
    %117 = vector.broadcast %96 : vector<1x32xf32> to vector<6x32xf32>
    %118 = arith.addf %116, %117 : vector<6x32xf32>
    %119 = arith.truncf %118 : vector<6x32xf32> to vector<6x32xbf16>
    %c0_44 = arith.constant 0 : index
    %c0_45 = arith.constant 0 : index
    %c0_46 = arith.constant 0 : index
    %120 = vector.load %arg8[%c0_44, %c0_45, %c0_46] : memref<1x6x32xbf16, #tpu.memory_space<vmem>>, vector<1x6x32xbf16>
    %121 = vector.shape_cast %120 : vector<1x6x32xbf16> to vector<6x32xbf16>
    %122 = vector.shape_cast %119 : vector<6x32xbf16> to vector<1x6x32xbf16>
    tpu.vector_store %arg8[%c0_44, %c0_45, %c0_46], %122 {strides = array<i32>} : memref<1x6x32xbf16, #tpu.memory_space<vmem>>, vector<1x6x32xbf16>,
    return
  }
  func.func @transform_0(%arg0: i32) -> (i32, i32, i32) {
    %c0_i32 = arith.constant 0 : i32
    %c0_i32_0 = arith.constant 0 : i32
    %c0_i32_1 = arith.constant 0 : i32
    return %arg0, %c0_i32, %c0_i32_0 : i32, i32, i32
  }
  func.func @transform_1(%arg0: i32) -> (i32, i32) {
    %c0_i32 = arith.constant 0 : i32
    %c0_i32_0 = arith.constant 0 : i32
    %c0_i32_1 = arith.constant 0 : i32
    return %c0_i32, %c0_i32_0 : i32, i32
  }
  func.func @transform_2(%arg0: i32) -> (i32, i32) {
    %c0_i32 = arith.constant 0 : i32
    %c0_i32_0 = arith.constant 0 : i32
    %c0_i32_1 = arith.constant 0 : i32
    return %c0_i32, %c0_i32_0 : i32, i32
  }
  func.func @transform_3(%arg0: i32) -> (i32, i32) {
    %c0_i32 = arith.constant 0 : i32
    %c0_i32_0 = arith.constant 0 : i32
    %c0_i32_1 = arith.constant 0 : i32
    return %c0_i32, %c0_i32_0 : i32, i32
  }
  func.func @transform_4(%arg0: i32) -> (i32, i32) {
    %c0_i32 = arith.constant 0 : i32
    %c0_i32_0 = arith.constant 0 : i32
    %c0_i32_1 = arith.constant 0 : i32
    return %c0_i32, %c0_i32_0 : i32, i32
  }
  func.func @transform_5(%arg0: i32) -> (i32, i32) {
    %c0_i32 = arith.constant 0 : i32
    %c0_i32_0 = arith.constant 0 : i32
    %c0_i32_1 = arith.constant 0 : i32
    return %c0_i32, %c0_i32_0 : i32, i32
  }
  func.func @transform_6(%arg0: i32) -> (i32, i32) {
    %c0_i32 = arith.constant 0 : i32
    %c0_i32_0 = arith.constant 0 : i32
    %c0_i32_1 = arith.constant 0 : i32
    return %c0_i32, %c0_i32_0 : i32, i32
  }
  func.func @transform_7(%arg0: i32) -> (i32, i32, i32) {
    %c0_i32 = arith.constant 0 : i32
    %c0_i32_0 = arith.constant 0 : i32
    %c0_i32_1 = arith.constant 0 : i32
    return %arg0, %c0_i32, %c0_i32_0 : i32, i32, i32
  }
}

module attributes {stable_mosaic.version = 11 : i64} {
  func.func @_ffn_ln_kernel(%arg0: i32, %arg1: memref<12x32xbf16, #tpu.memory_space<vmem>>, %arg2: memref<32x128xbf16, #tpu.memory_space<vmem>>, %arg3: memref<1x128xf32, #tpu.memory_space<vmem>>, %arg4: memref<128x32xbf16, #tpu.memory_space<vmem>>, %arg5: memref<1x32xf32, #tpu.memory_space<vmem>>, %arg6: memref<1x32xf32, #tpu.memory_space<vmem>>, %arg7: memref<1x32xf32, #tpu.memory_space<vmem>>, %arg8: memref<12x32xbf16, #tpu.memory_space<vmem>>) attributes {dimension_semantics = [#tpu.dimension_semantics<parallel>], iteration_bounds = array<i64: 1>, scalar_prefetch = 0 : i64, scratch_operands = 0 : i64, tpu.core_type = #tpu.core_type<tc>, window_params = [{transform_indices = @transform_0, window_bounds = array<i64: 12, 32>}, {pipeline_mode = #tpu.pipeline_mode<synchronous>, transform_indices = @transform_1, window_bounds = array<i64: 32, 128>}, {pipeline_mode = #tpu.pipeline_mode<synchronous>, transform_indices = @transform_2, window_bounds = array<i64: 1, 128>}, {pipeline_mode = #tpu.pipeline_mode<synchronous>, transform_indices = @transform_3, window_bounds = array<i64: 128, 32>}, {pipeline_mode = #tpu.pipeline_mode<synchronous>, transform_indices = @transform_4, window_bounds = array<i64: 1, 32>}, {pipeline_mode = #tpu.pipeline_mode<synchronous>, transform_indices = @transform_5, window_bounds = array<i64: 1, 32>}, {pipeline_mode = #tpu.pipeline_mode<synchronous>, transform_indices = @transform_6, window_bounds = array<i64: 1, 32>}, {transform_indices = @transform_7, window_bounds = array<i64: 12, 32>}]} {
    %c0 = arith.constant 0 : index
    %c0_0 = arith.constant 0 : index
    %0 = vector.load %arg1[%c0, %c0_0] : memref<12x32xbf16, #tpu.memory_space<vmem>>, vector<12x32xbf16>
    %c0_1 = arith.constant 0 : index
    %c0_2 = arith.constant 0 : index
    %1 = vector.load %arg2[%c0_1, %c0_2] : memref<32x128xbf16, #tpu.memory_space<vmem>>, vector<32x128xbf16>
    %cst = arith.constant dense<0.000000e+00> : vector<12x128xf32>
    %2 = tpu.matmul %0, %1, %cst {dimension_numbers = #tpu.dot_dimension_numbers<[1], [0], [0], [1], [0, 0, 1, 1], [], []>} : vector<12x32xbf16>, vector<32x128xbf16>, vector<12x128xf32> -> vector<12x128xf32>
    %c0_3 = arith.constant 0 : index
    %c0_4 = arith.constant 0 : index
    %3 = vector.load %arg3[%c0_3, %c0_4] : memref<1x128xf32, #tpu.memory_space<vmem>>, vector<1x128xf32>
    %4 = vector.broadcast %3 : vector<1x128xf32> to vector<12x128xf32>
    %5 = arith.addf %2, %4 : vector<12x128xf32>
    %cst_5 = arith.constant 0.000000e+00 : f32
    %6 = vector.broadcast %cst_5 : f32 to vector<12x128xf32>
    %7 = arith.maximumf %5, %6 : vector<12x128xf32>
    %c0_6 = arith.constant 0 : index
    %c0_7 = arith.constant 0 : index
    %8 = vector.load %arg4[%c0_6, %c0_7] : memref<128x32xbf16, #tpu.memory_space<vmem>>, vector<128x32xbf16>
    %9 = arith.truncf %7 : vector<12x128xf32> to vector<12x128xbf16>
    %cst_8 = arith.constant dense<0.000000e+00> : vector<12x32xf32>
    %10 = tpu.matmul %9, %8, %cst_8 {dimension_numbers = #tpu.dot_dimension_numbers<[1], [0], [0], [1], [0, 0, 1, 1], [], []>} : vector<12x128xbf16>, vector<128x32xbf16>, vector<12x32xf32> -> vector<12x32xf32>
    %c0_9 = arith.constant 0 : index
    %c0_10 = arith.constant 0 : index
    %11 = vector.load %arg5[%c0_9, %c0_10] : memref<1x32xf32, #tpu.memory_space<vmem>>, vector<1x32xf32>
    %12 = vector.broadcast %11 : vector<1x32xf32> to vector<12x32xf32>
    %13 = arith.addf %10, %12 : vector<12x32xf32>
    %14 = arith.extf %0 : vector<12x32xbf16> to vector<12x32xf32>
    %15 = arith.addf %13, %14 : vector<12x32xf32>
    %c0_11 = arith.constant 0 : index
    %c0_12 = arith.constant 0 : index
    %16 = vector.load %arg6[%c0_11, %c0_12] : memref<1x32xf32, #tpu.memory_space<vmem>>, vector<1x32xf32>
    %c0_13 = arith.constant 0 : index
    %c0_14 = arith.constant 0 : index
    %17 = vector.load %arg7[%c0_13, %c0_14] : memref<1x32xf32, #tpu.memory_space<vmem>>, vector<1x32xf32>
    %cst_15 = arith.constant dense<0.000000e+00> : vector<12xf32>
    %18 = vector.multi_reduction <add>, %15, %cst_15 [1] : vector<12x32xf32> to vector<12xf32>
    %19 = vector.shape_cast %18 : vector<12xf32> to vector<12x1xf32>
    %cst_16 = arith.constant 3.200000e+01 : f32
    %20 = vector.broadcast %cst_16 : f32 to vector<12x1xf32>
    %21 = arith.divf %19, %20 : vector<12x1xf32>
    %22 = vector.broadcast %21 : vector<12x1xf32> to vector<12x32xf32>
    %23 = arith.subf %15, %22 : vector<12x32xf32>
    %24 = arith.mulf %23, %23 : vector<12x32xf32>
    %cst_17 = arith.constant dense<0.000000e+00> : vector<12xf32>
    %25 = vector.multi_reduction <add>, %24, %cst_17 [1] : vector<12x32xf32> to vector<12xf32>
    %26 = vector.shape_cast %25 : vector<12xf32> to vector<12x1xf32>
    %cst_18 = arith.constant 3.200000e+01 : f32
    %27 = vector.broadcast %cst_18 : f32 to vector<12x1xf32>
    %28 = arith.divf %26, %27 : vector<12x1xf32>
    %29 = vector.broadcast %21 : vector<12x1xf32> to vector<12x32xf32>
    %30 = arith.subf %15, %29 : vector<12x32xf32>
    %cst_19 = arith.constant 9.99999974E-6 : f32
    %31 = vector.broadcast %cst_19 : f32 to vector<12x1xf32>
    %32 = arith.addf %28, %31 : vector<12x1xf32>
    %33 = math.rsqrt %32 : vector<12x1xf32>
    %34 = vector.broadcast %33 : vector<12x1xf32> to vector<12x32xf32>
    %35 = arith.mulf %30, %34 : vector<12x32xf32>
    %36 = vector.broadcast %16 : vector<1x32xf32> to vector<12x32xf32>
    %37 = arith.mulf %35, %36 : vector<12x32xf32>
    %38 = vector.broadcast %17 : vector<1x32xf32> to vector<12x32xf32>
    %39 = arith.addf %37, %38 : vector<12x32xf32>
    %40 = arith.truncf %39 : vector<12x32xf32> to vector<12x32xbf16>
    %c0_20 = arith.constant 0 : index
    %c0_21 = arith.constant 0 : index
    %41 = vector.load %arg8[%c0_20, %c0_21] : memref<12x32xbf16, #tpu.memory_space<vmem>>, vector<12x32xbf16>
    tpu.vector_store %arg8[%c0_20, %c0_21], %40 {strides = array<i32>} : memref<12x32xbf16, #tpu.memory_space<vmem>>, vector<12x32xbf16>,
    return
  }
  func.func @transform_0(%arg0: i32) -> (i32, i32) {
    %c0_i32 = arith.constant 0 : i32
    %c0_i32_0 = arith.constant 0 : i32
    return %arg0, %c0_i32 : i32, i32
  }
  func.func @transform_1(%arg0: i32) -> (i32, i32) {
    %c0_i32 = arith.constant 0 : i32
    %c0_i32_0 = arith.constant 0 : i32
    %c0_i32_1 = arith.constant 0 : i32
    return %c0_i32, %c0_i32_0 : i32, i32
  }
  func.func @transform_2(%arg0: i32) -> (i32, i32) {
    %c0_i32 = arith.constant 0 : i32
    %c0_i32_0 = arith.constant 0 : i32
    %c0_i32_1 = arith.constant 0 : i32
    return %c0_i32, %c0_i32_0 : i32, i32
  }
  func.func @transform_3(%arg0: i32) -> (i32, i32) {
    %c0_i32 = arith.constant 0 : i32
    %c0_i32_0 = arith.constant 0 : i32
    %c0_i32_1 = arith.constant 0 : i32
    return %c0_i32, %c0_i32_0 : i32, i32
  }
  func.func @transform_4(%arg0: i32) -> (i32, i32) {
    %c0_i32 = arith.constant 0 : i32
    %c0_i32_0 = arith.constant 0 : i32
    %c0_i32_1 = arith.constant 0 : i32
    return %c0_i32, %c0_i32_0 : i32, i32
  }
  func.func @transform_5(%arg0: i32) -> (i32, i32) {
    %c0_i32 = arith.constant 0 : i32
    %c0_i32_0 = arith.constant 0 : i32
    %c0_i32_1 = arith.constant 0 : i32
    return %c0_i32, %c0_i32_0 : i32, i32
  }
  func.func @transform_6(%arg0: i32) -> (i32, i32) {
    %c0_i32 = arith.constant 0 : i32
    %c0_i32_0 = arith.constant 0 : i32
    %c0_i32_1 = arith.constant 0 : i32
    return %c0_i32, %c0_i32_0 : i32, i32
  }
  func.func @transform_7(%arg0: i32) -> (i32, i32) {
    %c0_i32 = arith.constant 0 : i32
    %c0_i32_0 = arith.constant 0 : i32
    return %arg0, %c0_i32 : i32, i32
  }
}

module attributes {stable_mosaic.version = 11 : i64} {
  func.func @_deconv_ln_mix_kernel(%arg0: i32, %arg1: memref<1x6x32xbf16, #tpu.memory_space<vmem>>, %arg2: memref<1x8x32xbf16, #tpu.memory_space<vmem>>, %arg3: memref<96x32xbf16, #tpu.memory_space<vmem>>, %arg4: memref<1x32xf32, #tpu.memory_space<vmem>>, %arg5: memref<1x32xf32, #tpu.memory_space<vmem>>, %arg6: memref<1x32xf32, #tpu.memory_space<vmem>>, %arg7: memref<1x8x32xbf16, #tpu.memory_space<vmem>>) attributes {dimension_semantics = [#tpu.dimension_semantics<parallel>], iteration_bounds = array<i64: 2>, scalar_prefetch = 0 : i64, scratch_operands = 0 : i64, tpu.core_type = #tpu.core_type<tc>, window_params = [{transform_indices = @transform_0, window_bounds = array<i64: 1, 6, 32>}, {transform_indices = @transform_1, window_bounds = array<i64: 1, 8, 32>}, {pipeline_mode = #tpu.pipeline_mode<synchronous>, transform_indices = @transform_2, window_bounds = array<i64: 96, 32>}, {pipeline_mode = #tpu.pipeline_mode<synchronous>, transform_indices = @transform_3, window_bounds = array<i64: 1, 32>}, {pipeline_mode = #tpu.pipeline_mode<synchronous>, transform_indices = @transform_4, window_bounds = array<i64: 1, 32>}, {pipeline_mode = #tpu.pipeline_mode<synchronous>, transform_indices = @transform_5, window_bounds = array<i64: 1, 32>}, {transform_indices = @transform_6, window_bounds = array<i64: 1, 8, 32>}]} {
    %c0 = arith.constant 0 : index
    %c0_0 = arith.constant 0 : index
    %c0_1 = arith.constant 0 : index
    %0 = vector.load %arg1[%c0, %c0_0, %c0_1] : memref<1x6x32xbf16, #tpu.memory_space<vmem>>, vector<1x6x32xbf16>
    %1 = vector.shape_cast %0 : vector<1x6x32xbf16> to vector<6x32xbf16>
    %cst = arith.constant 0.000000e+00 : bf16
    %2 = vector.broadcast %cst : bf16 to vector<2x32xbf16>
    %3 = tpu.concatenate %2, %1, %2 in 0 : vector<2x32xbf16>, vector<6x32xbf16>, vector<2x32xbf16> -> vector<10x32xbf16>
    %4 = vector.extract_strided_slice %3 {offsets = [0, 0], sizes = [8, 32], strides = [1, 1]} : vector<10x32xbf16> to vector<8x32xbf16>
    %5 = vector.extract_strided_slice %3 {offsets = [1, 0], sizes = [8, 32], strides = [1, 1]} : vector<10x32xbf16> to vector<8x32xbf16>
    %6 = vector.extract_strided_slice %3 {offsets = [2, 0], sizes = [8, 32], strides = [1, 1]} : vector<10x32xbf16> to vector<8x32xbf16>
    %7 = tpu.concatenate %4, %5, %6 in 1 : vector<8x32xbf16>, vector<8x32xbf16>, vector<8x32xbf16> -> vector<8x96xbf16>
    %c0_2 = arith.constant 0 : index
    %c0_3 = arith.constant 0 : index
    %8 = vector.load %arg3[%c0_2, %c0_3] : memref<96x32xbf16, #tpu.memory_space<vmem>>, vector<96x32xbf16>
    %cst_4 = arith.constant dense<0.000000e+00> : vector<8x32xf32>
    %9 = tpu.matmul %7, %8, %cst_4 {dimension_numbers = #tpu.dot_dimension_numbers<[1], [0], [0], [1], [0, 0, 1, 1], [], []>} : vector<8x96xbf16>, vector<96x32xbf16>, vector<8x32xf32> -> vector<8x32xf32>
    %c0_5 = arith.constant 0 : index
    %c0_6 = arith.constant 0 : index
    %10 = vector.load %arg4[%c0_5, %c0_6] : memref<1x32xf32, #tpu.memory_space<vmem>>, vector<1x32xf32>
    %11 = vector.broadcast %10 : vector<1x32xf32> to vector<8x32xf32>
    %12 = arith.addf %9, %11 : vector<8x32xf32>
    %cst_7 = arith.constant 0.000000e+00 : f32
    %13 = vector.broadcast %cst_7 : f32 to vector<8x32xf32>
    %14 = arith.maximumf %12, %13 : vector<8x32xf32>
    %c0_8 = arith.constant 0 : index
    %c0_9 = arith.constant 0 : index
    %15 = vector.load %arg5[%c0_8, %c0_9] : memref<1x32xf32, #tpu.memory_space<vmem>>, vector<1x32xf32>
    %c0_10 = arith.constant 0 : index
    %c0_11 = arith.constant 0 : index
    %16 = vector.load %arg6[%c0_10, %c0_11] : memref<1x32xf32, #tpu.memory_space<vmem>>, vector<1x32xf32>
    %cst_12 = arith.constant dense<0.000000e+00> : vector<8xf32>
    %17 = vector.multi_reduction <add>, %14, %cst_12 [1] : vector<8x32xf32> to vector<8xf32>
    %18 = vector.shape_cast %17 : vector<8xf32> to vector<8x1xf32>
    %cst_13 = arith.constant 3.200000e+01 : f32
    %19 = vector.broadcast %cst_13 : f32 to vector<8x1xf32>
    %20 = arith.divf %18, %19 : vector<8x1xf32>
    %21 = vector.broadcast %20 : vector<8x1xf32> to vector<8x32xf32>
    %22 = arith.subf %14, %21 : vector<8x32xf32>
    %23 = arith.mulf %22, %22 : vector<8x32xf32>
    %cst_14 = arith.constant dense<0.000000e+00> : vector<8xf32>
    %24 = vector.multi_reduction <add>, %23, %cst_14 [1] : vector<8x32xf32> to vector<8xf32>
    %25 = vector.shape_cast %24 : vector<8xf32> to vector<8x1xf32>
    %cst_15 = arith.constant 3.200000e+01 : f32
    %26 = vector.broadcast %cst_15 : f32 to vector<8x1xf32>
    %27 = arith.divf %25, %26 : vector<8x1xf32>
    %28 = vector.broadcast %20 : vector<8x1xf32> to vector<8x32xf32>
    %29 = arith.subf %14, %28 : vector<8x32xf32>
    %cst_16 = arith.constant 9.99999974E-6 : f32
    %30 = vector.broadcast %cst_16 : f32 to vector<8x1xf32>
    %31 = arith.addf %27, %30 : vector<8x1xf32>
    %32 = math.rsqrt %31 : vector<8x1xf32>
    %33 = vector.broadcast %32 : vector<8x1xf32> to vector<8x32xf32>
    %34 = arith.mulf %29, %33 : vector<8x32xf32>
    %35 = vector.broadcast %15 : vector<1x32xf32> to vector<8x32xf32>
    %36 = arith.mulf %34, %35 : vector<8x32xf32>
    %37 = vector.broadcast %16 : vector<1x32xf32> to vector<8x32xf32>
    %38 = arith.addf %36, %37 : vector<8x32xf32>
    %cst_17 = arith.constant 5.000000e-01 : f32
    %39 = vector.broadcast %cst_17 : f32 to vector<8x32xf32>
    %40 = arith.mulf %39, %38 : vector<8x32xf32>
    %c0_18 = arith.constant 0 : index
    %c0_19 = arith.constant 0 : index
    %c0_20 = arith.constant 0 : index
    %41 = vector.load %arg2[%c0_18, %c0_19, %c0_20] : memref<1x8x32xbf16, #tpu.memory_space<vmem>>, vector<1x8x32xbf16>
    %42 = vector.shape_cast %41 : vector<1x8x32xbf16> to vector<8x32xbf16>
    %43 = arith.extf %42 : vector<8x32xbf16> to vector<8x32xf32>
    %cst_21 = arith.constant 5.000000e-01 : f32
    %44 = vector.broadcast %cst_21 : f32 to vector<8x32xf32>
    %45 = arith.mulf %44, %43 : vector<8x32xf32>
    %46 = arith.addf %40, %45 : vector<8x32xf32>
    %47 = arith.truncf %46 : vector<8x32xf32> to vector<8x32xbf16>
    %c0_22 = arith.constant 0 : index
    %c0_23 = arith.constant 0 : index
    %c0_24 = arith.constant 0 : index
    %48 = vector.load %arg7[%c0_22, %c0_23, %c0_24] : memref<1x8x32xbf16, #tpu.memory_space<vmem>>, vector<1x8x32xbf16>
    %49 = vector.shape_cast %48 : vector<1x8x32xbf16> to vector<8x32xbf16>
    %50 = vector.shape_cast %47 : vector<8x32xbf16> to vector<1x8x32xbf16>
    tpu.vector_store %arg7[%c0_22, %c0_23, %c0_24], %50 {strides = array<i32>} : memref<1x8x32xbf16, #tpu.memory_space<vmem>>, vector<1x8x32xbf16>,
    return
  }
  func.func @transform_0(%arg0: i32) -> (i32, i32, i32) {
    %c0_i32 = arith.constant 0 : i32
    %c0_i32_0 = arith.constant 0 : i32
    %c0_i32_1 = arith.constant 0 : i32
    return %arg0, %c0_i32, %c0_i32_0 : i32, i32, i32
  }
  func.func @transform_1(%arg0: i32) -> (i32, i32, i32) {
    %c0_i32 = arith.constant 0 : i32
    %c0_i32_0 = arith.constant 0 : i32
    %c0_i32_1 = arith.constant 0 : i32
    return %arg0, %c0_i32, %c0_i32_0 : i32, i32, i32
  }
  func.func @transform_2(%arg0: i32) -> (i32, i32) {
    %c0_i32 = arith.constant 0 : i32
    %c0_i32_0 = arith.constant 0 : i32
    %c0_i32_1 = arith.constant 0 : i32
    return %c0_i32, %c0_i32_0 : i32, i32
  }
  func.func @transform_3(%arg0: i32) -> (i32, i32) {
    %c0_i32 = arith.constant 0 : i32
    %c0_i32_0 = arith.constant 0 : i32
    %c0_i32_1 = arith.constant 0 : i32
    return %c0_i32, %c0_i32_0 : i32, i32
  }
  func.func @transform_4(%arg0: i32) -> (i32, i32) {
    %c0_i32 = arith.constant 0 : i32
    %c0_i32_0 = arith.constant 0 : i32
    %c0_i32_1 = arith.constant 0 : i32
    return %c0_i32, %c0_i32_0 : i32, i32
  }
  func.func @transform_5(%arg0: i32) -> (i32, i32) {
    %c0_i32 = arith.constant 0 : i32
    %c0_i32_0 = arith.constant 0 : i32
    %c0_i32_1 = arith.constant 0 : i32
    return %c0_i32, %c0_i32_0 : i32, i32
  }
  func.func @transform_6(%arg0: i32) -> (i32, i32, i32) {
    %c0_i32 = arith.constant 0 : i32
    %c0_i32_0 = arith.constant 0 : i32
    %c0_i32_1 = arith.constant 0 : i32
    return %arg0, %c0_i32, %c0_i32_0 : i32, i32, i32
  }
}

module attributes {stable_mosaic.version = 11 : i64} {
  func.func @_conv_ln_kernel(%arg0: i32, %arg1: memref<1x8x32xbf16, #tpu.memory_space<vmem>>, %arg2: memref<32x32xbf16, #tpu.memory_space<vmem>>, %arg3: memref<1x32xf32, #tpu.memory_space<vmem>>, %arg4: memref<1x32xf32, #tpu.memory_space<vmem>>, %arg5: memref<1x32xf32, #tpu.memory_space<vmem>>, %arg6: memref<1x8x32xbf16, #tpu.memory_space<vmem>>) attributes {dimension_semantics = [#tpu.dimension_semantics<parallel>], iteration_bounds = array<i64: 2>, scalar_prefetch = 0 : i64, scratch_operands = 0 : i64, tpu.core_type = #tpu.core_type<tc>, window_params = [{transform_indices = @transform_0, window_bounds = array<i64: 1, 8, 32>}, {pipeline_mode = #tpu.pipeline_mode<synchronous>, transform_indices = @transform_1, window_bounds = array<i64: 32, 32>}, {pipeline_mode = #tpu.pipeline_mode<synchronous>, transform_indices = @transform_2, window_bounds = array<i64: 1, 32>}, {pipeline_mode = #tpu.pipeline_mode<synchronous>, transform_indices = @transform_3, window_bounds = array<i64: 1, 32>}, {pipeline_mode = #tpu.pipeline_mode<synchronous>, transform_indices = @transform_4, window_bounds = array<i64: 1, 32>}, {transform_indices = @transform_5, window_bounds = array<i64: 1, 8, 32>}]} {
    %c0 = arith.constant 0 : index
    %c0_0 = arith.constant 0 : index
    %c0_1 = arith.constant 0 : index
    %0 = vector.load %arg1[%c0, %c0_0, %c0_1] : memref<1x8x32xbf16, #tpu.memory_space<vmem>>, vector<1x8x32xbf16>
    %1 = vector.shape_cast %0 : vector<1x8x32xbf16> to vector<8x32xbf16>
    %c0_2 = arith.constant 0 : index
    %c0_3 = arith.constant 0 : index
    %2 = vector.load %arg2[%c0_2, %c0_3] : memref<32x32xbf16, #tpu.memory_space<vmem>>, vector<32x32xbf16>
    %cst = arith.constant dense<0.000000e+00> : vector<8x32xf32>
    %3 = tpu.matmul %1, %2, %cst {dimension_numbers = #tpu.dot_dimension_numbers<[1], [0], [0], [1], [0, 0, 1, 1], [], []>} : vector<8x32xbf16>, vector<32x32xbf16>, vector<8x32xf32> -> vector<8x32xf32>
    %c0_4 = arith.constant 0 : index
    %c0_5 = arith.constant 0 : index
    %4 = vector.load %arg3[%c0_4, %c0_5] : memref<1x32xf32, #tpu.memory_space<vmem>>, vector<1x32xf32>
    %5 = vector.broadcast %4 : vector<1x32xf32> to vector<8x32xf32>
    %6 = arith.addf %3, %5 : vector<8x32xf32>
    %cst_6 = arith.constant 0.000000e+00 : f32
    %7 = vector.broadcast %cst_6 : f32 to vector<8x32xf32>
    %8 = arith.maximumf %6, %7 : vector<8x32xf32>
    %c0_7 = arith.constant 0 : index
    %c0_8 = arith.constant 0 : index
    %9 = vector.load %arg4[%c0_7, %c0_8] : memref<1x32xf32, #tpu.memory_space<vmem>>, vector<1x32xf32>
    %c0_9 = arith.constant 0 : index
    %c0_10 = arith.constant 0 : index
    %10 = vector.load %arg5[%c0_9, %c0_10] : memref<1x32xf32, #tpu.memory_space<vmem>>, vector<1x32xf32>
    %cst_11 = arith.constant dense<0.000000e+00> : vector<8xf32>
    %11 = vector.multi_reduction <add>, %8, %cst_11 [1] : vector<8x32xf32> to vector<8xf32>
    %12 = vector.shape_cast %11 : vector<8xf32> to vector<8x1xf32>
    %cst_12 = arith.constant 3.200000e+01 : f32
    %13 = vector.broadcast %cst_12 : f32 to vector<8x1xf32>
    %14 = arith.divf %12, %13 : vector<8x1xf32>
    %15 = vector.broadcast %14 : vector<8x1xf32> to vector<8x32xf32>
    %16 = arith.subf %8, %15 : vector<8x32xf32>
    %17 = arith.mulf %16, %16 : vector<8x32xf32>
    %cst_13 = arith.constant dense<0.000000e+00> : vector<8xf32>
    %18 = vector.multi_reduction <add>, %17, %cst_13 [1] : vector<8x32xf32> to vector<8xf32>
    %19 = vector.shape_cast %18 : vector<8xf32> to vector<8x1xf32>
    %cst_14 = arith.constant 3.200000e+01 : f32
    %20 = vector.broadcast %cst_14 : f32 to vector<8x1xf32>
    %21 = arith.divf %19, %20 : vector<8x1xf32>
    %22 = vector.broadcast %14 : vector<8x1xf32> to vector<8x32xf32>
    %23 = arith.subf %8, %22 : vector<8x32xf32>
    %cst_15 = arith.constant 9.99999974E-6 : f32
    %24 = vector.broadcast %cst_15 : f32 to vector<8x1xf32>
    %25 = arith.addf %21, %24 : vector<8x1xf32>
    %26 = math.rsqrt %25 : vector<8x1xf32>
    %27 = vector.broadcast %26 : vector<8x1xf32> to vector<8x32xf32>
    %28 = arith.mulf %23, %27 : vector<8x32xf32>
    %29 = vector.broadcast %9 : vector<1x32xf32> to vector<8x32xf32>
    %30 = arith.mulf %28, %29 : vector<8x32xf32>
    %31 = vector.broadcast %10 : vector<1x32xf32> to vector<8x32xf32>
    %32 = arith.addf %30, %31 : vector<8x32xf32>
    %33 = arith.truncf %32 : vector<8x32xf32> to vector<8x32xbf16>
    %c0_16 = arith.constant 0 : index
    %c0_17 = arith.constant 0 : index
    %c0_18 = arith.constant 0 : index
    %34 = vector.load %arg6[%c0_16, %c0_17, %c0_18] : memref<1x8x32xbf16, #tpu.memory_space<vmem>>, vector<1x8x32xbf16>
    %35 = vector.shape_cast %34 : vector<1x8x32xbf16> to vector<8x32xbf16>
    %36 = vector.shape_cast %33 : vector<8x32xbf16> to vector<1x8x32xbf16>
    tpu.vector_store %arg6[%c0_16, %c0_17, %c0_18], %36 {strides = array<i32>} : memref<1x8x32xbf16, #tpu.memory_space<vmem>>, vector<1x8x32xbf16>,
    return
  }
  func.func @transform_0(%arg0: i32) -> (i32, i32, i32) {
    %c0_i32 = arith.constant 0 : i32
    %c0_i32_0 = arith.constant 0 : i32
    %c0_i32_1 = arith.constant 0 : i32
    return %arg0, %c0_i32, %c0_i32_0 : i32, i32, i32
  }
  func.func @transform_1(%arg0: i32) -> (i32, i32) {
    %c0_i32 = arith.constant 0 : i32
    %c0_i32_0 = arith.constant 0 : i32
    %c0_i32_1 = arith.constant 0 : i32
    return %c0_i32, %c0_i32_0 : i32, i32
  }
  func.func @transform_2(%arg0: i32) -> (i32, i32) {
    %c0_i32 = arith.constant 0 : i32
    %c0_i32_0 = arith.constant 0 : i32
    %c0_i32_1 = arith.constant 0 : i32
    return %c0_i32, %c0_i32_0 : i32, i32
  }
  func.func @transform_3(%arg0: i32) -> (i32, i32) {
    %c0_i32 = arith.constant 0 : i32
    %c0_i32_0 = arith.constant 0 : i32
    %c0_i32_1 = arith.constant 0 : i32
    return %c0_i32, %c0_i32_0 : i32, i32
  }
  func.func @transform_4(%arg0: i32) -> (i32, i32) {
    %c0_i32 = arith.constant 0 : i32
    %c0_i32_0 = arith.constant 0 : i32
    %c0_i32_1 = arith.constant 0 : i32
    return %c0_i32, %c0_i32_0 : i32, i32
  }
  func.func @transform_5(%arg0: i32) -> (i32, i32, i32) {
    %c0_i32 = arith.constant 0 : i32
    %c0_i32_0 = arith.constant 0 : i32
    %c0_i32_1 = arith.constant 0 : i32
    return %arg0, %c0_i32, %c0_i32_0 : i32, i32, i32
  }
}

module attributes {stable_mosaic.version = 11 : i64} {
  func.func @_attn_block_kernel(%arg0: i32, %arg1: memref<1x8x32xbf16, #tpu.memory_space<vmem>>, %arg2: memref<32x96xbf16, #tpu.memory_space<vmem>>, %arg3: memref<1x96xf32, #tpu.memory_space<vmem>>, %arg4: memref<32x32xbf16, #tpu.memory_space<vmem>>, %arg5: memref<1x32xf32, #tpu.memory_space<vmem>>, %arg6: memref<1x32xf32, #tpu.memory_space<vmem>>, %arg7: memref<1x32xf32, #tpu.memory_space<vmem>>, %arg8: memref<1x8x32xbf16, #tpu.memory_space<vmem>>, %arg9: memref<8x32xbf16, #tpu.memory_space<vmem>>) attributes {dimension_semantics = [#tpu.dimension_semantics<parallel>], iteration_bounds = array<i64: 2>, scalar_prefetch = 0 : i64, scratch_operands = 1 : i64, tpu.core_type = #tpu.core_type<tc>, window_params = [{transform_indices = @transform_0, window_bounds = array<i64: 1, 8, 32>}, {pipeline_mode = #tpu.pipeline_mode<synchronous>, transform_indices = @transform_1, window_bounds = array<i64: 32, 96>}, {pipeline_mode = #tpu.pipeline_mode<synchronous>, transform_indices = @transform_2, window_bounds = array<i64: 1, 96>}, {pipeline_mode = #tpu.pipeline_mode<synchronous>, transform_indices = @transform_3, window_bounds = array<i64: 32, 32>}, {pipeline_mode = #tpu.pipeline_mode<synchronous>, transform_indices = @transform_4, window_bounds = array<i64: 1, 32>}, {pipeline_mode = #tpu.pipeline_mode<synchronous>, transform_indices = @transform_5, window_bounds = array<i64: 1, 32>}, {pipeline_mode = #tpu.pipeline_mode<synchronous>, transform_indices = @transform_6, window_bounds = array<i64: 1, 32>}, {transform_indices = @transform_7, window_bounds = array<i64: 1, 8, 32>}]} {
    %c0 = arith.constant 0 : index
    %c0_0 = arith.constant 0 : index
    %c0_1 = arith.constant 0 : index
    %0 = vector.load %arg1[%c0, %c0_0, %c0_1] : memref<1x8x32xbf16, #tpu.memory_space<vmem>>, vector<1x8x32xbf16>
    %1 = vector.shape_cast %0 : vector<1x8x32xbf16> to vector<8x32xbf16>
    %c0_2 = arith.constant 0 : index
    %c0_3 = arith.constant 0 : index
    %2 = vector.load %arg2[%c0_2, %c0_3] : memref<32x96xbf16, #tpu.memory_space<vmem>>, vector<32x96xbf16>
    %cst = arith.constant dense<0.000000e+00> : vector<8x96xf32>
    %3 = tpu.matmul %1, %2, %cst {dimension_numbers = #tpu.dot_dimension_numbers<[1], [0], [0], [1], [0, 0, 1, 1], [], []>} : vector<8x32xbf16>, vector<32x96xbf16>, vector<8x96xf32> -> vector<8x96xf32>
    %c0_4 = arith.constant 0 : index
    %c0_5 = arith.constant 0 : index
    %4 = vector.load %arg3[%c0_4, %c0_5] : memref<1x96xf32, #tpu.memory_space<vmem>>, vector<1x96xf32>
    %5 = vector.broadcast %4 : vector<1x96xf32> to vector<8x96xf32>
    %6 = arith.addf %3, %5 : vector<8x96xf32>
    %7 = vector.extract_strided_slice %6 {offsets = [0, 0], sizes = [8, 32], strides = [1, 1]} : vector<8x96xf32> to vector<8x32xf32>
    %cst_6 = arith.constant 0.353553385 : f32
    %8 = vector.broadcast %cst_6 : f32 to vector<8x32xf32>
    %9 = arith.mulf %7, %8 : vector<8x32xf32>
    %10 = arith.truncf %9 : vector<8x32xf32> to vector<8x32xbf16>
    %11 = vector.extract_strided_slice %6 {offsets = [0, 32], sizes = [8, 32], strides = [1, 1]} : vector<8x96xf32> to vector<8x32xf32>
    %12 = arith.truncf %11 : vector<8x32xf32> to vector<8x32xbf16>
    %13 = vector.extract_strided_slice %6 {offsets = [0, 64], sizes = [8, 32], strides = [1, 1]} : vector<8x96xf32> to vector<8x32xf32>
    %14 = arith.truncf %13 : vector<8x32xf32> to vector<8x32xbf16>
    %15 = vector.extract_strided_slice %10 {offsets = [0, 0], sizes = [8, 8], strides = [1, 1]} : vector<8x32xbf16> to vector<8x8xbf16>
    %16 = vector.extract_strided_slice %12 {offsets = [0, 0], sizes = [8, 8], strides = [1, 1]} : vector<8x32xbf16> to vector<8x8xbf16>
    %cst_7 = arith.constant dense<0.000000e+00> : vector<8x8xf32>
    %17 = tpu.matmul %15, %16, %cst_7 {dimension_numbers = #tpu.dot_dimension_numbers<[1], [1], [0], [0], [0, 0, 1, 0], [], []>} : vector<8x8xbf16>, vector<8x8xbf16>, vector<8x8xf32> -> vector<8x8xf32>
    %cst_8 = arith.constant dense<0xFF800000> : vector<8xf32>
    %18 = vector.multi_reduction <maximumf>, %17, %cst_8 [1] : vector<8x8xf32> to vector<8xf32>
    %19 = vector.shape_cast %18 : vector<8xf32> to vector<8x1xf32>
    %20 = vector.broadcast %19 : vector<8x1xf32> to vector<8x8xf32>
    %21 = arith.subf %17, %20 : vector<8x8xf32>
    %22 = math.exp %21 : vector<8x8xf32>
    %cst_9 = arith.constant dense<0.000000e+00> : vector<8xf32>
    %23 = vector.multi_reduction <add>, %22, %cst_9 [1] : vector<8x8xf32> to vector<8xf32>
    %24 = vector.shape_cast %23 : vector<8xf32> to vector<8x1xf32>
    %25 = tpu.reciprocal %24 {approx = true} : vector<8x1xf32> -> vector<8x1xf32>
    %26 = vector.broadcast %25 : vector<8x1xf32> to vector<8x8xf32>
    %27 = arith.mulf %22, %26 : vector<8x8xf32>
    %28 = vector.extract_strided_slice %14 {offsets = [0, 0], sizes = [8, 8], strides = [1, 1]} : vector<8x32xbf16> to vector<8x8xbf16>
    %29 = arith.truncf %27 : vector<8x8xf32> to vector<8x8xbf16>
    %cst_10 = arith.constant dense<0.000000e+00> : vector<8x8xf32>
    %30 = tpu.matmul %29, %28, %cst_10 {dimension_numbers = #tpu.dot_dimension_numbers<[1], [0], [0], [1], [0, 0, 1, 1], [], []>} : vector<8x8xbf16>, vector<8x8xbf16>, vector<8x8xf32> -> vector<8x8xf32>
    %31 = arith.truncf %30 : vector<8x8xf32> to vector<8x8xbf16>
    %c0_11 = arith.constant 0 : index
    %c0_12 = arith.constant 0 : index
    %32 = vector.load %arg9[%c0_11, %c0_12] : memref<8x32xbf16, #tpu.memory_space<vmem>>, vector<8x8xbf16>
    tpu.vector_store %arg9[%c0_11, %c0_12], %31 {strides = array<i32>} : memref<8x32xbf16, #tpu.memory_space<vmem>>, vector<8x8xbf16>,
    %33 = vector.extract_strided_slice %10 {offsets = [0, 8], sizes = [8, 8], strides = [1, 1]} : vector<8x32xbf16> to vector<8x8xbf16>
    %34 = vector.extract_strided_slice %12 {offsets = [0, 8], sizes = [8, 8], strides = [1, 1]} : vector<8x32xbf16> to vector<8x8xbf16>
    %cst_13 = arith.constant dense<0.000000e+00> : vector<8x8xf32>
    %35 = tpu.matmul %33, %34, %cst_13 {dimension_numbers = #tpu.dot_dimension_numbers<[1], [1], [0], [0], [0, 0, 1, 0], [], []>} : vector<8x8xbf16>, vector<8x8xbf16>, vector<8x8xf32> -> vector<8x8xf32>
    %cst_14 = arith.constant dense<0xFF800000> : vector<8xf32>
    %36 = vector.multi_reduction <maximumf>, %35, %cst_14 [1] : vector<8x8xf32> to vector<8xf32>
    %37 = vector.shape_cast %36 : vector<8xf32> to vector<8x1xf32>
    %38 = vector.broadcast %37 : vector<8x1xf32> to vector<8x8xf32>
    %39 = arith.subf %35, %38 : vector<8x8xf32>
    %40 = math.exp %39 : vector<8x8xf32>
    %cst_15 = arith.constant dense<0.000000e+00> : vector<8xf32>
    %41 = vector.multi_reduction <add>, %40, %cst_15 [1] : vector<8x8xf32> to vector<8xf32>
    %42 = vector.shape_cast %41 : vector<8xf32> to vector<8x1xf32>
    %43 = tpu.reciprocal %42 {approx = true} : vector<8x1xf32> -> vector<8x1xf32>
    %44 = vector.broadcast %43 : vector<8x1xf32> to vector<8x8xf32>
    %45 = arith.mulf %40, %44 : vector<8x8xf32>
    %46 = vector.extract_strided_slice %14 {offsets = [0, 8], sizes = [8, 8], strides = [1, 1]} : vector<8x32xbf16> to vector<8x8xbf16>
    %47 = arith.truncf %45 : vector<8x8xf32> to vector<8x8xbf16>
    %cst_16 = arith.constant dense<0.000000e+00> : vector<8x8xf32>
    %48 = tpu.matmul %47, %46, %cst_16 {dimension_numbers = #tpu.dot_dimension_numbers<[1], [0], [0], [1], [0, 0, 1, 1], [], []>} : vector<8x8xbf16>, vector<8x8xbf16>, vector<8x8xf32> -> vector<8x8xf32>
    %49 = arith.truncf %48 : vector<8x8xf32> to vector<8x8xbf16>
    %c0_17 = arith.constant 0 : index
    %c8 = arith.constant 8 : index
    %50 = vector.load %arg9[%c0_17, %c8] : memref<8x32xbf16, #tpu.memory_space<vmem>>, vector<8x8xbf16>
    tpu.vector_store %arg9[%c0_17, %c8], %49 {strides = array<i32>} : memref<8x32xbf16, #tpu.memory_space<vmem>>, vector<8x8xbf16>,
    %51 = vector.extract_strided_slice %10 {offsets = [0, 16], sizes = [8, 8], strides = [1, 1]} : vector<8x32xbf16> to vector<8x8xbf16>
    %52 = vector.extract_strided_slice %12 {offsets = [0, 16], sizes = [8, 8], strides = [1, 1]} : vector<8x32xbf16> to vector<8x8xbf16>
    %cst_18 = arith.constant dense<0.000000e+00> : vector<8x8xf32>
    %53 = tpu.matmul %51, %52, %cst_18 {dimension_numbers = #tpu.dot_dimension_numbers<[1], [1], [0], [0], [0, 0, 1, 0], [], []>} : vector<8x8xbf16>, vector<8x8xbf16>, vector<8x8xf32> -> vector<8x8xf32>
    %cst_19 = arith.constant dense<0xFF800000> : vector<8xf32>
    %54 = vector.multi_reduction <maximumf>, %53, %cst_19 [1] : vector<8x8xf32> to vector<8xf32>
    %55 = vector.shape_cast %54 : vector<8xf32> to vector<8x1xf32>
    %56 = vector.broadcast %55 : vector<8x1xf32> to vector<8x8xf32>
    %57 = arith.subf %53, %56 : vector<8x8xf32>
    %58 = math.exp %57 : vector<8x8xf32>
    %cst_20 = arith.constant dense<0.000000e+00> : vector<8xf32>
    %59 = vector.multi_reduction <add>, %58, %cst_20 [1] : vector<8x8xf32> to vector<8xf32>
    %60 = vector.shape_cast %59 : vector<8xf32> to vector<8x1xf32>
    %61 = tpu.reciprocal %60 {approx = true} : vector<8x1xf32> -> vector<8x1xf32>
    %62 = vector.broadcast %61 : vector<8x1xf32> to vector<8x8xf32>
    %63 = arith.mulf %58, %62 : vector<8x8xf32>
    %64 = vector.extract_strided_slice %14 {offsets = [0, 16], sizes = [8, 8], strides = [1, 1]} : vector<8x32xbf16> to vector<8x8xbf16>
    %65 = arith.truncf %63 : vector<8x8xf32> to vector<8x8xbf16>
    %cst_21 = arith.constant dense<0.000000e+00> : vector<8x8xf32>
    %66 = tpu.matmul %65, %64, %cst_21 {dimension_numbers = #tpu.dot_dimension_numbers<[1], [0], [0], [1], [0, 0, 1, 1], [], []>} : vector<8x8xbf16>, vector<8x8xbf16>, vector<8x8xf32> -> vector<8x8xf32>
    %67 = arith.truncf %66 : vector<8x8xf32> to vector<8x8xbf16>
    %c0_22 = arith.constant 0 : index
    %c16 = arith.constant 16 : index
    %68 = vector.load %arg9[%c0_22, %c16] : memref<8x32xbf16, #tpu.memory_space<vmem>>, vector<8x8xbf16>
    tpu.vector_store %arg9[%c0_22, %c16], %67 {strides = array<i32>} : memref<8x32xbf16, #tpu.memory_space<vmem>>, vector<8x8xbf16>,
    %69 = vector.extract_strided_slice %10 {offsets = [0, 24], sizes = [8, 8], strides = [1, 1]} : vector<8x32xbf16> to vector<8x8xbf16>
    %70 = vector.extract_strided_slice %12 {offsets = [0, 24], sizes = [8, 8], strides = [1, 1]} : vector<8x32xbf16> to vector<8x8xbf16>
    %cst_23 = arith.constant dense<0.000000e+00> : vector<8x8xf32>
    %71 = tpu.matmul %69, %70, %cst_23 {dimension_numbers = #tpu.dot_dimension_numbers<[1], [1], [0], [0], [0, 0, 1, 0], [], []>} : vector<8x8xbf16>, vector<8x8xbf16>, vector<8x8xf32> -> vector<8x8xf32>
    %cst_24 = arith.constant dense<0xFF800000> : vector<8xf32>
    %72 = vector.multi_reduction <maximumf>, %71, %cst_24 [1] : vector<8x8xf32> to vector<8xf32>
    %73 = vector.shape_cast %72 : vector<8xf32> to vector<8x1xf32>
    %74 = vector.broadcast %73 : vector<8x1xf32> to vector<8x8xf32>
    %75 = arith.subf %71, %74 : vector<8x8xf32>
    %76 = math.exp %75 : vector<8x8xf32>
    %cst_25 = arith.constant dense<0.000000e+00> : vector<8xf32>
    %77 = vector.multi_reduction <add>, %76, %cst_25 [1] : vector<8x8xf32> to vector<8xf32>
    %78 = vector.shape_cast %77 : vector<8xf32> to vector<8x1xf32>
    %79 = tpu.reciprocal %78 {approx = true} : vector<8x1xf32> -> vector<8x1xf32>
    %80 = vector.broadcast %79 : vector<8x1xf32> to vector<8x8xf32>
    %81 = arith.mulf %76, %80 : vector<8x8xf32>
    %82 = vector.extract_strided_slice %14 {offsets = [0, 24], sizes = [8, 8], strides = [1, 1]} : vector<8x32xbf16> to vector<8x8xbf16>
    %83 = arith.truncf %81 : vector<8x8xf32> to vector<8x8xbf16>
    %cst_26 = arith.constant dense<0.000000e+00> : vector<8x8xf32>
    %84 = tpu.matmul %83, %82, %cst_26 {dimension_numbers = #tpu.dot_dimension_numbers<[1], [0], [0], [1], [0, 0, 1, 1], [], []>} : vector<8x8xbf16>, vector<8x8xbf16>, vector<8x8xf32> -> vector<8x8xf32>
    %85 = arith.truncf %84 : vector<8x8xf32> to vector<8x8xbf16>
    %c0_27 = arith.constant 0 : index
    %c24 = arith.constant 24 : index
    %86 = vector.load %arg9[%c0_27, %c24] : memref<8x32xbf16, #tpu.memory_space<vmem>>, vector<8x8xbf16>
    tpu.vector_store %arg9[%c0_27, %c24], %85 {strides = array<i32>} : memref<8x32xbf16, #tpu.memory_space<vmem>>, vector<8x8xbf16>,
    %c0_28 = arith.constant 0 : index
    %c0_29 = arith.constant 0 : index
    %87 = vector.load %arg9[%c0_28, %c0_29] : memref<8x32xbf16, #tpu.memory_space<vmem>>, vector<8x32xbf16>
    %c0_30 = arith.constant 0 : index
    %c0_31 = arith.constant 0 : index
    %88 = vector.load %arg4[%c0_30, %c0_31] : memref<32x32xbf16, #tpu.memory_space<vmem>>, vector<32x32xbf16>
    %cst_32 = arith.constant dense<0.000000e+00> : vector<8x32xf32>
    %89 = tpu.matmul %87, %88, %cst_32 {dimension_numbers = #tpu.dot_dimension_numbers<[1], [0], [0], [1], [0, 0, 1, 1], [], []>} : vector<8x32xbf16>, vector<32x32xbf16>, vector<8x32xf32> -> vector<8x32xf32>
    %c0_33 = arith.constant 0 : index
    %c0_34 = arith.constant 0 : index
    %90 = vector.load %arg5[%c0_33, %c0_34] : memref<1x32xf32, #tpu.memory_space<vmem>>, vector<1x32xf32>
    %91 = vector.broadcast %90 : vector<1x32xf32> to vector<8x32xf32>
    %92 = arith.addf %89, %91 : vector<8x32xf32>
    %93 = arith.extf %1 : vector<8x32xbf16> to vector<8x32xf32>
    %94 = arith.addf %92, %93 : vector<8x32xf32>
    %c0_35 = arith.constant 0 : index
    %c0_36 = arith.constant 0 : index
    %95 = vector.load %arg6[%c0_35, %c0_36] : memref<1x32xf32, #tpu.memory_space<vmem>>, vector<1x32xf32>
    %c0_37 = arith.constant 0 : index
    %c0_38 = arith.constant 0 : index
    %96 = vector.load %arg7[%c0_37, %c0_38] : memref<1x32xf32, #tpu.memory_space<vmem>>, vector<1x32xf32>
    %cst_39 = arith.constant dense<0.000000e+00> : vector<8xf32>
    %97 = vector.multi_reduction <add>, %94, %cst_39 [1] : vector<8x32xf32> to vector<8xf32>
    %98 = vector.shape_cast %97 : vector<8xf32> to vector<8x1xf32>
    %cst_40 = arith.constant 3.200000e+01 : f32
    %99 = vector.broadcast %cst_40 : f32 to vector<8x1xf32>
    %100 = arith.divf %98, %99 : vector<8x1xf32>
    %101 = vector.broadcast %100 : vector<8x1xf32> to vector<8x32xf32>
    %102 = arith.subf %94, %101 : vector<8x32xf32>
    %103 = arith.mulf %102, %102 : vector<8x32xf32>
    %cst_41 = arith.constant dense<0.000000e+00> : vector<8xf32>
    %104 = vector.multi_reduction <add>, %103, %cst_41 [1] : vector<8x32xf32> to vector<8xf32>
    %105 = vector.shape_cast %104 : vector<8xf32> to vector<8x1xf32>
    %cst_42 = arith.constant 3.200000e+01 : f32
    %106 = vector.broadcast %cst_42 : f32 to vector<8x1xf32>
    %107 = arith.divf %105, %106 : vector<8x1xf32>
    %108 = vector.broadcast %100 : vector<8x1xf32> to vector<8x32xf32>
    %109 = arith.subf %94, %108 : vector<8x32xf32>
    %cst_43 = arith.constant 9.99999974E-6 : f32
    %110 = vector.broadcast %cst_43 : f32 to vector<8x1xf32>
    %111 = arith.addf %107, %110 : vector<8x1xf32>
    %112 = math.rsqrt %111 : vector<8x1xf32>
    %113 = vector.broadcast %112 : vector<8x1xf32> to vector<8x32xf32>
    %114 = arith.mulf %109, %113 : vector<8x32xf32>
    %115 = vector.broadcast %95 : vector<1x32xf32> to vector<8x32xf32>
    %116 = arith.mulf %114, %115 : vector<8x32xf32>
    %117 = vector.broadcast %96 : vector<1x32xf32> to vector<8x32xf32>
    %118 = arith.addf %116, %117 : vector<8x32xf32>
    %119 = arith.truncf %118 : vector<8x32xf32> to vector<8x32xbf16>
    %c0_44 = arith.constant 0 : index
    %c0_45 = arith.constant 0 : index
    %c0_46 = arith.constant 0 : index
    %120 = vector.load %arg8[%c0_44, %c0_45, %c0_46] : memref<1x8x32xbf16, #tpu.memory_space<vmem>>, vector<1x8x32xbf16>
    %121 = vector.shape_cast %120 : vector<1x8x32xbf16> to vector<8x32xbf16>
    %122 = vector.shape_cast %119 : vector<8x32xbf16> to vector<1x8x32xbf16>
    tpu.vector_store %arg8[%c0_44, %c0_45, %c0_46], %122 {strides = array<i32>} : memref<1x8x32xbf16, #tpu.memory_space<vmem>>, vector<1x8x32xbf16>,
    return
  }
  func.func @transform_0(%arg0: i32) -> (i32, i32, i32) {
    %c0_i32 = arith.constant 0 : i32
    %c0_i32_0 = arith.constant 0 : i32
    %c0_i32_1 = arith.constant 0 : i32
    return %arg0, %c0_i32, %c0_i32_0 : i32, i32, i32
  }
  func.func @transform_1(%arg0: i32) -> (i32, i32) {
    %c0_i32 = arith.constant 0 : i32
    %c0_i32_0 = arith.constant 0 : i32
    %c0_i32_1 = arith.constant 0 : i32
    return %c0_i32, %c0_i32_0 : i32, i32
  }
  func.func @transform_2(%arg0: i32) -> (i32, i32) {
    %c0_i32 = arith.constant 0 : i32
    %c0_i32_0 = arith.constant 0 : i32
    %c0_i32_1 = arith.constant 0 : i32
    return %c0_i32, %c0_i32_0 : i32, i32
  }
  func.func @transform_3(%arg0: i32) -> (i32, i32) {
    %c0_i32 = arith.constant 0 : i32
    %c0_i32_0 = arith.constant 0 : i32
    %c0_i32_1 = arith.constant 0 : i32
    return %c0_i32, %c0_i32_0 : i32, i32
  }
  func.func @transform_4(%arg0: i32) -> (i32, i32) {
    %c0_i32 = arith.constant 0 : i32
    %c0_i32_0 = arith.constant 0 : i32
    %c0_i32_1 = arith.constant 0 : i32
    return %c0_i32, %c0_i32_0 : i32, i32
  }
  func.func @transform_5(%arg0: i32) -> (i32, i32) {
    %c0_i32 = arith.constant 0 : i32
    %c0_i32_0 = arith.constant 0 : i32
    %c0_i32_1 = arith.constant 0 : i32
    return %c0_i32, %c0_i32_0 : i32, i32
  }
  func.func @transform_6(%arg0: i32) -> (i32, i32) {
    %c0_i32 = arith.constant 0 : i32
    %c0_i32_0 = arith.constant 0 : i32
    %c0_i32_1 = arith.constant 0 : i32
    return %c0_i32, %c0_i32_0 : i32, i32
  }
  func.func @transform_7(%arg0: i32) -> (i32, i32, i32) {
    %c0_i32 = arith.constant 0 : i32
    %c0_i32_0 = arith.constant 0 : i32
    %c0_i32_1 = arith.constant 0 : i32
    return %arg0, %c0_i32, %c0_i32_0 : i32, i32, i32
  }
}

module attributes {stable_mosaic.version = 11 : i64} {
  func.func @_ffn_ln_kernel(%arg0: i32, %arg1: memref<16x32xbf16, #tpu.memory_space<vmem>>, %arg2: memref<32x128xbf16, #tpu.memory_space<vmem>>, %arg3: memref<1x128xf32, #tpu.memory_space<vmem>>, %arg4: memref<128x32xbf16, #tpu.memory_space<vmem>>, %arg5: memref<1x32xf32, #tpu.memory_space<vmem>>, %arg6: memref<1x32xf32, #tpu.memory_space<vmem>>, %arg7: memref<1x32xf32, #tpu.memory_space<vmem>>, %arg8: memref<16x32xbf16, #tpu.memory_space<vmem>>) attributes {dimension_semantics = [#tpu.dimension_semantics<parallel>], iteration_bounds = array<i64: 1>, scalar_prefetch = 0 : i64, scratch_operands = 0 : i64, tpu.core_type = #tpu.core_type<tc>, window_params = [{transform_indices = @transform_0, window_bounds = array<i64: 16, 32>}, {pipeline_mode = #tpu.pipeline_mode<synchronous>, transform_indices = @transform_1, window_bounds = array<i64: 32, 128>}, {pipeline_mode = #tpu.pipeline_mode<synchronous>, transform_indices = @transform_2, window_bounds = array<i64: 1, 128>}, {pipeline_mode = #tpu.pipeline_mode<synchronous>, transform_indices = @transform_3, window_bounds = array<i64: 128, 32>}, {pipeline_mode = #tpu.pipeline_mode<synchronous>, transform_indices = @transform_4, window_bounds = array<i64: 1, 32>}, {pipeline_mode = #tpu.pipeline_mode<synchronous>, transform_indices = @transform_5, window_bounds = array<i64: 1, 32>}, {pipeline_mode = #tpu.pipeline_mode<synchronous>, transform_indices = @transform_6, window_bounds = array<i64: 1, 32>}, {transform_indices = @transform_7, window_bounds = array<i64: 16, 32>}]} {
    %c0 = arith.constant 0 : index
    %c0_0 = arith.constant 0 : index
    %0 = vector.load %arg1[%c0, %c0_0] : memref<16x32xbf16, #tpu.memory_space<vmem>>, vector<16x32xbf16>
    %c0_1 = arith.constant 0 : index
    %c0_2 = arith.constant 0 : index
    %1 = vector.load %arg2[%c0_1, %c0_2] : memref<32x128xbf16, #tpu.memory_space<vmem>>, vector<32x128xbf16>
    %cst = arith.constant dense<0.000000e+00> : vector<16x128xf32>
    %2 = tpu.matmul %0, %1, %cst {dimension_numbers = #tpu.dot_dimension_numbers<[1], [0], [0], [1], [0, 0, 1, 1], [], []>} : vector<16x32xbf16>, vector<32x128xbf16>, vector<16x128xf32> -> vector<16x128xf32>
    %c0_3 = arith.constant 0 : index
    %c0_4 = arith.constant 0 : index
    %3 = vector.load %arg3[%c0_3, %c0_4] : memref<1x128xf32, #tpu.memory_space<vmem>>, vector<1x128xf32>
    %4 = vector.broadcast %3 : vector<1x128xf32> to vector<16x128xf32>
    %5 = arith.addf %2, %4 : vector<16x128xf32>
    %cst_5 = arith.constant 0.000000e+00 : f32
    %6 = vector.broadcast %cst_5 : f32 to vector<16x128xf32>
    %7 = arith.maximumf %5, %6 : vector<16x128xf32>
    %c0_6 = arith.constant 0 : index
    %c0_7 = arith.constant 0 : index
    %8 = vector.load %arg4[%c0_6, %c0_7] : memref<128x32xbf16, #tpu.memory_space<vmem>>, vector<128x32xbf16>
    %9 = arith.truncf %7 : vector<16x128xf32> to vector<16x128xbf16>
    %cst_8 = arith.constant dense<0.000000e+00> : vector<16x32xf32>
    %10 = tpu.matmul %9, %8, %cst_8 {dimension_numbers = #tpu.dot_dimension_numbers<[1], [0], [0], [1], [0, 0, 1, 1], [], []>} : vector<16x128xbf16>, vector<128x32xbf16>, vector<16x32xf32> -> vector<16x32xf32>
    %c0_9 = arith.constant 0 : index
    %c0_10 = arith.constant 0 : index
    %11 = vector.load %arg5[%c0_9, %c0_10] : memref<1x32xf32, #tpu.memory_space<vmem>>, vector<1x32xf32>
    %12 = vector.broadcast %11 : vector<1x32xf32> to vector<16x32xf32>
    %13 = arith.addf %10, %12 : vector<16x32xf32>
    %14 = arith.extf %0 : vector<16x32xbf16> to vector<16x32xf32>
    %15 = arith.addf %13, %14 : vector<16x32xf32>
    %c0_11 = arith.constant 0 : index
    %c0_12 = arith.constant 0 : index
    %16 = vector.load %arg6[%c0_11, %c0_12] : memref<1x32xf32, #tpu.memory_space<vmem>>, vector<1x32xf32>
    %c0_13 = arith.constant 0 : index
    %c0_14 = arith.constant 0 : index
    %17 = vector.load %arg7[%c0_13, %c0_14] : memref<1x32xf32, #tpu.memory_space<vmem>>, vector<1x32xf32>
    %cst_15 = arith.constant dense<0.000000e+00> : vector<16xf32>
    %18 = vector.multi_reduction <add>, %15, %cst_15 [1] : vector<16x32xf32> to vector<16xf32>
    %19 = vector.shape_cast %18 : vector<16xf32> to vector<16x1xf32>
    %cst_16 = arith.constant 3.200000e+01 : f32
    %20 = vector.broadcast %cst_16 : f32 to vector<16x1xf32>
    %21 = arith.divf %19, %20 : vector<16x1xf32>
    %22 = vector.broadcast %21 : vector<16x1xf32> to vector<16x32xf32>
    %23 = arith.subf %15, %22 : vector<16x32xf32>
    %24 = arith.mulf %23, %23 : vector<16x32xf32>
    %cst_17 = arith.constant dense<0.000000e+00> : vector<16xf32>
    %25 = vector.multi_reduction <add>, %24, %cst_17 [1] : vector<16x32xf32> to vector<16xf32>
    %26 = vector.shape_cast %25 : vector<16xf32> to vector<16x1xf32>
    %cst_18 = arith.constant 3.200000e+01 : f32
    %27 = vector.broadcast %cst_18 : f32 to vector<16x1xf32>
    %28 = arith.divf %26, %27 : vector<16x1xf32>
    %29 = vector.broadcast %21 : vector<16x1xf32> to vector<16x32xf32>
    %30 = arith.subf %15, %29 : vector<16x32xf32>
    %cst_19 = arith.constant 9.99999974E-6 : f32
    %31 = vector.broadcast %cst_19 : f32 to vector<16x1xf32>
    %32 = arith.addf %28, %31 : vector<16x1xf32>
    %33 = math.rsqrt %32 : vector<16x1xf32>
    %34 = vector.broadcast %33 : vector<16x1xf32> to vector<16x32xf32>
    %35 = arith.mulf %30, %34 : vector<16x32xf32>
    %36 = vector.broadcast %16 : vector<1x32xf32> to vector<16x32xf32>
    %37 = arith.mulf %35, %36 : vector<16x32xf32>
    %38 = vector.broadcast %17 : vector<1x32xf32> to vector<16x32xf32>
    %39 = arith.addf %37, %38 : vector<16x32xf32>
    %40 = arith.truncf %39 : vector<16x32xf32> to vector<16x32xbf16>
    %c0_20 = arith.constant 0 : index
    %c0_21 = arith.constant 0 : index
    %41 = vector.load %arg8[%c0_20, %c0_21] : memref<16x32xbf16, #tpu.memory_space<vmem>>, vector<16x32xbf16>
    tpu.vector_store %arg8[%c0_20, %c0_21], %40 {strides = array<i32>} : memref<16x32xbf16, #tpu.memory_space<vmem>>, vector<16x32xbf16>,
    return
  }
  func.func @transform_0(%arg0: i32) -> (i32, i32) {
    %c0_i32 = arith.constant 0 : i32
    %c0_i32_0 = arith.constant 0 : i32
    return %arg0, %c0_i32 : i32, i32
  }
  func.func @transform_1(%arg0: i32) -> (i32, i32) {
    %c0_i32 = arith.constant 0 : i32
    %c0_i32_0 = arith.constant 0 : i32
    %c0_i32_1 = arith.constant 0 : i32
    return %c0_i32, %c0_i32_0 : i32, i32
  }
  func.func @transform_2(%arg0: i32) -> (i32, i32) {
    %c0_i32 = arith.constant 0 : i32
    %c0_i32_0 = arith.constant 0 : i32
    %c0_i32_1 = arith.constant 0 : i32
    return %c0_i32, %c0_i32_0 : i32, i32
  }
  func.func @transform_3(%arg0: i32) -> (i32, i32) {
    %c0_i32 = arith.constant 0 : i32
    %c0_i32_0 = arith.constant 0 : i32
    %c0_i32_1 = arith.constant 0 : i32
    return %c0_i32, %c0_i32_0 : i32, i32
  }
  func.func @transform_4(%arg0: i32) -> (i32, i32) {
    %c0_i32 = arith.constant 0 : i32
    %c0_i32_0 = arith.constant 0 : i32
    %c0_i32_1 = arith.constant 0 : i32
    return %c0_i32, %c0_i32_0 : i32, i32
  }
  func.func @transform_5(%arg0: i32) -> (i32, i32) {
    %c0_i32 = arith.constant 0 : i32
    %c0_i32_0 = arith.constant 0 : i32
    %c0_i32_1 = arith.constant 0 : i32
    return %c0_i32, %c0_i32_0 : i32, i32
  }
  func.func @transform_6(%arg0: i32) -> (i32, i32) {
    %c0_i32 = arith.constant 0 : i32
    %c0_i32_0 = arith.constant 0 : i32
    %c0_i32_1 = arith.constant 0 : i32
    return %c0_i32, %c0_i32_0 : i32, i32
  }
  func.func @transform_7(%arg0: i32) -> (i32, i32) {
    %c0_i32 = arith.constant 0 : i32
    %c0_i32_0 = arith.constant 0 : i32
    return %arg0, %c0_i32 : i32, i32
  }
}

module attributes {stable_mosaic.version = 11 : i64} {
  func.func @_deconv_ln_mix_pred_kernel(%arg0: i32, %arg1: memref<1x8x32xbf16, #tpu.memory_space<vmem>>, %arg2: memref<1x8x32xbf16, #tpu.memory_space<vmem>>, %arg3: memref<32x32xbf16, #tpu.memory_space<vmem>>, %arg4: memref<1x32xf32, #tpu.memory_space<vmem>>, %arg5: memref<1x32xf32, #tpu.memory_space<vmem>>, %arg6: memref<1x32xf32, #tpu.memory_space<vmem>>, %arg7: memref<1x32xbf16, #tpu.memory_space<vmem>>, %arg8: memref<1x1xf32, #tpu.memory_space<vmem>>, %arg9: memref<1x1x8xf32, #tpu.memory_space<vmem>>) attributes {dimension_semantics = [#tpu.dimension_semantics<parallel>], iteration_bounds = array<i64: 2>, scalar_prefetch = 0 : i64, scratch_operands = 0 : i64, tpu.core_type = #tpu.core_type<tc>, window_params = [{transform_indices = @transform_0, window_bounds = array<i64: 1, 8, 32>}, {transform_indices = @transform_1, window_bounds = array<i64: 1, 8, 32>}, {pipeline_mode = #tpu.pipeline_mode<synchronous>, transform_indices = @transform_2, window_bounds = array<i64: 32, 32>}, {pipeline_mode = #tpu.pipeline_mode<synchronous>, transform_indices = @transform_3, window_bounds = array<i64: 1, 32>}, {pipeline_mode = #tpu.pipeline_mode<synchronous>, transform_indices = @transform_4, window_bounds = array<i64: 1, 32>}, {pipeline_mode = #tpu.pipeline_mode<synchronous>, transform_indices = @transform_5, window_bounds = array<i64: 1, 32>}, {pipeline_mode = #tpu.pipeline_mode<synchronous>, transform_indices = @transform_6, window_bounds = array<i64: 1, 32>}, {pipeline_mode = #tpu.pipeline_mode<synchronous>, transform_indices = @transform_7, window_bounds = array<i64: 1, 1>}, {transform_indices = @transform_8, window_bounds = array<i64: 1, 1, 8>}]} {
    %c0 = arith.constant 0 : index
    %c0_0 = arith.constant 0 : index
    %c0_1 = arith.constant 0 : index
    %0 = vector.load %arg1[%c0, %c0_0, %c0_1] : memref<1x8x32xbf16, #tpu.memory_space<vmem>>, vector<1x8x32xbf16>
    %1 = vector.shape_cast %0 : vector<1x8x32xbf16> to vector<8x32xbf16>
    %c0_2 = arith.constant 0 : index
    %c0_3 = arith.constant 0 : index
    %2 = vector.load %arg3[%c0_2, %c0_3] : memref<32x32xbf16, #tpu.memory_space<vmem>>, vector<32x32xbf16>
    %cst = arith.constant dense<0.000000e+00> : vector<8x32xf32>
    %3 = tpu.matmul %1, %2, %cst {dimension_numbers = #tpu.dot_dimension_numbers<[1], [0], [0], [1], [0, 0, 1, 1], [], []>} : vector<8x32xbf16>, vector<32x32xbf16>, vector<8x32xf32> -> vector<8x32xf32>
    %c0_4 = arith.constant 0 : index
    %c0_5 = arith.constant 0 : index
    %4 = vector.load %arg4[%c0_4, %c0_5] : memref<1x32xf32, #tpu.memory_space<vmem>>, vector<1x32xf32>
    %5 = vector.broadcast %4 : vector<1x32xf32> to vector<8x32xf32>
    %6 = arith.addf %3, %5 : vector<8x32xf32>
    %cst_6 = arith.constant 0.000000e+00 : f32
    %7 = vector.broadcast %cst_6 : f32 to vector<8x32xf32>
    %8 = arith.maximumf %6, %7 : vector<8x32xf32>
    %c0_7 = arith.constant 0 : index
    %c0_8 = arith.constant 0 : index
    %9 = vector.load %arg5[%c0_7, %c0_8] : memref<1x32xf32, #tpu.memory_space<vmem>>, vector<1x32xf32>
    %c0_9 = arith.constant 0 : index
    %c0_10 = arith.constant 0 : index
    %10 = vector.load %arg6[%c0_9, %c0_10] : memref<1x32xf32, #tpu.memory_space<vmem>>, vector<1x32xf32>
    %cst_11 = arith.constant dense<0.000000e+00> : vector<8xf32>
    %11 = vector.multi_reduction <add>, %8, %cst_11 [1] : vector<8x32xf32> to vector<8xf32>
    %12 = vector.shape_cast %11 : vector<8xf32> to vector<8x1xf32>
    %cst_12 = arith.constant 3.200000e+01 : f32
    %13 = vector.broadcast %cst_12 : f32 to vector<8x1xf32>
    %14 = arith.divf %12, %13 : vector<8x1xf32>
    %15 = vector.broadcast %14 : vector<8x1xf32> to vector<8x32xf32>
    %16 = arith.subf %8, %15 : vector<8x32xf32>
    %17 = arith.mulf %16, %16 : vector<8x32xf32>
    %cst_13 = arith.constant dense<0.000000e+00> : vector<8xf32>
    %18 = vector.multi_reduction <add>, %17, %cst_13 [1] : vector<8x32xf32> to vector<8xf32>
    %19 = vector.shape_cast %18 : vector<8xf32> to vector<8x1xf32>
    %cst_14 = arith.constant 3.200000e+01 : f32
    %20 = vector.broadcast %cst_14 : f32 to vector<8x1xf32>
    %21 = arith.divf %19, %20 : vector<8x1xf32>
    %22 = vector.broadcast %14 : vector<8x1xf32> to vector<8x32xf32>
    %23 = arith.subf %8, %22 : vector<8x32xf32>
    %cst_15 = arith.constant 9.99999974E-6 : f32
    %24 = vector.broadcast %cst_15 : f32 to vector<8x1xf32>
    %25 = arith.addf %21, %24 : vector<8x1xf32>
    %26 = math.rsqrt %25 : vector<8x1xf32>
    %27 = vector.broadcast %26 : vector<8x1xf32> to vector<8x32xf32>
    %28 = arith.mulf %23, %27 : vector<8x32xf32>
    %29 = vector.broadcast %9 : vector<1x32xf32> to vector<8x32xf32>
    %30 = arith.mulf %28, %29 : vector<8x32xf32>
    %31 = vector.broadcast %10 : vector<1x32xf32> to vector<8x32xf32>
    %32 = arith.addf %30, %31 : vector<8x32xf32>
    %cst_16 = arith.constant 5.000000e-01 : f32
    %33 = vector.broadcast %cst_16 : f32 to vector<8x32xf32>
    %34 = arith.mulf %33, %32 : vector<8x32xf32>
    %c0_17 = arith.constant 0 : index
    %c0_18 = arith.constant 0 : index
    %c0_19 = arith.constant 0 : index
    %35 = vector.load %arg2[%c0_17, %c0_18, %c0_19] : memref<1x8x32xbf16, #tpu.memory_space<vmem>>, vector<1x8x32xbf16>
    %36 = vector.shape_cast %35 : vector<1x8x32xbf16> to vector<8x32xbf16>
    %37 = arith.extf %36 : vector<8x32xbf16> to vector<8x32xf32>
    %cst_20 = arith.constant 5.000000e-01 : f32
    %38 = vector.broadcast %cst_20 : f32 to vector<8x32xf32>
    %39 = arith.mulf %38, %37 : vector<8x32xf32>
    %40 = arith.addf %34, %39 : vector<8x32xf32>
    %c0_21 = arith.constant 0 : index
    %c0_22 = arith.constant 0 : index
    %41 = vector.load %arg7[%c0_21, %c0_22] : memref<1x32xbf16, #tpu.memory_space<vmem>>, vector<1x32xbf16>
    %42 = arith.truncf %40 : vector<8x32xf32> to vector<8x32xbf16>
    %cst_23 = arith.constant dense<0.000000e+00> : vector<1x8xf32>
    %43 = tpu.matmul %41, %42, %cst_23 {dimension_numbers = #tpu.dot_dimension_numbers<[1], [1], [0], [0], [0, 0, 1, 0], [], []>} : vector<1x32xbf16>, vector<8x32xbf16>, vector<1x8xf32> -> vector<1x8xf32>
    %c0_24 = arith.constant 0 : index
    %c0_25 = arith.constant 0 : index
    %44 = vector.load %arg8[%c0_24, %c0_25] : memref<1x1xf32, #tpu.memory_space<vmem>>, vector<1x1xf32>
    %45 = vector.broadcast %44 : vector<1x1xf32> to vector<1x8xf32>
    %46 = arith.addf %43, %45 : vector<1x8xf32>
    %c0_26 = arith.constant 0 : index
    %c0_27 = arith.constant 0 : index
    %c0_28 = arith.constant 0 : index
    %47 = vector.load %arg9[%c0_26, %c0_27, %c0_28] : memref<1x1x8xf32, #tpu.memory_space<vmem>>, vector<1x1x8xf32>
    %48 = vector.shape_cast %47 : vector<1x1x8xf32> to vector<1x8xf32>
    %49 = vector.shape_cast %46 : vector<1x8xf32> to vector<1x1x8xf32>
    tpu.vector_store %arg9[%c0_26, %c0_27, %c0_28], %49 {strides = array<i32>} : memref<1x1x8xf32, #tpu.memory_space<vmem>>, vector<1x1x8xf32>,
    return
  }
  func.func @transform_0(%arg0: i32) -> (i32, i32, i32) {
    %c0_i32 = arith.constant 0 : i32
    %c0_i32_0 = arith.constant 0 : i32
    %c0_i32_1 = arith.constant 0 : i32
    return %arg0, %c0_i32, %c0_i32_0 : i32, i32, i32
  }
  func.func @transform_1(%arg0: i32) -> (i32, i32, i32) {
    %c0_i32 = arith.constant 0 : i32
    %c0_i32_0 = arith.constant 0 : i32
    %c0_i32_1 = arith.constant 0 : i32
    return %arg0, %c0_i32, %c0_i32_0 : i32, i32, i32
  }
  func.func @transform_2(%arg0: i32) -> (i32, i32) {
    %c0_i32 = arith.constant 0 : i32
    %c0_i32_0 = arith.constant 0 : i32
    %c0_i32_1 = arith.constant 0 : i32
    return %c0_i32, %c0_i32_0 : i32, i32
  }
  func.func @transform_3(%arg0: i32) -> (i32, i32) {
    %c0_i32 = arith.constant 0 : i32
    %c0_i32_0 = arith.constant 0 : i32
    %c0_i32_1 = arith.constant 0 : i32
    return %c0_i32, %c0_i32_0 : i32, i32
  }
  func.func @transform_4(%arg0: i32) -> (i32, i32) {
    %c0_i32 = arith.constant 0 : i32
    %c0_i32_0 = arith.constant 0 : i32
    %c0_i32_1 = arith.constant 0 : i32
    return %c0_i32, %c0_i32_0 : i32, i32
  }
  func.func @transform_5(%arg0: i32) -> (i32, i32) {
    %c0_i32 = arith.constant 0 : i32
    %c0_i32_0 = arith.constant 0 : i32
    %c0_i32_1 = arith.constant 0 : i32
    return %c0_i32, %c0_i32_0 : i32, i32
  }
  func.func @transform_6(%arg0: i32) -> (i32, i32) {
    %c0_i32 = arith.constant 0 : i32
    %c0_i32_0 = arith.constant 0 : i32
    %c0_i32_1 = arith.constant 0 : i32
    return %c0_i32, %c0_i32_0 : i32, i32
  }
  func.func @transform_7(%arg0: i32) -> (i32, i32) {
    %c0_i32 = arith.constant 0 : i32
    %c0_i32_0 = arith.constant 0 : i32
    %c0_i32_1 = arith.constant 0 : i32
    return %c0_i32, %c0_i32_0 : i32, i32
  }
  func.func @transform_8(%arg0: i32) -> (i32, i32, i32) {
    %c0_i32 = arith.constant 0 : i32
    %c0_i32_0 = arith.constant 0 : i32
    %c0_i32_1 = arith.constant 0 : i32
    return %arg0, %c0_i32, %c0_i32_0 : i32, i32, i32
  }
}

</mosaic_0001>

<llo_original>
// kernel: _lambda_.9
$region0: #{_lambda_.9}
  #allocation0 [shape = 'u32[]', space=smem, size = 0x4, offset = 0x4, fixed_abs, tag = 'smem constant byte address 0x4 - core index']
  #allocation1 [shape = 'u32[144,128]{1,0:T(1,128)}', space=vmem, size = 0x12000, scoped, tag = 'internal scratch']
  %s0 = inlined_call_operand.vmem [shape: f32[16,8], index: 0, kind: input, shape index: {}]
  %s1 = inlined_call_operand.vmem [shape: bf16[8,32], index: 1, kind: input, shape index: {}]
  %s2 = inlined_call_operand.vmem [shape: f32[1,32], index: 2, kind: input, shape index: {}]
  %s3 = inlined_call_operand.vmem [shape: f32[1,32], index: 3, kind: input, shape index: {}]
  %s4 = inlined_call_operand.vmem [shape: f32[1,32], index: 4, kind: input, shape index: {}]
  %s5 = inlined_call_operand.vmem [shape: bf16[16,32], index: 5, kind: output, shape index: {}]
  %s6 = sld [smem:[#allocation0]]
  $region30: #{_lambda_.9} parent=0
    _
  %s8 = ssub.s32 1, %s6
  %s9 = scalar_select 0, %s8, %s6
  // Predicated region
  $region2: #{_lambda_.9} parent=0 // pred_check
    _
  $region3: #{_lambda_.9} parent=0 // pred_check_branch
    %11 = sbr.rel (0) target = $region5
  $region4: #{_lambda_.9} parent=0 // pred_region
    _
  $region5: #{_lambda_.9} parent=0 // pred_fallthru
    _
  // Predicated region
  $region6: #{_lambda_.9} parent=0 // pred_check
    _
  $region7: #{_lambda_.9} parent=0 // pred_check_branch
    %13 = sbr.rel (0) target = $region9
  $region8: #{_lambda_.9} parent=0 // pred_region
    _
  $region9: #{_lambda_.9} parent=0 // pred_fallthru
    _
  // Predicated region
  $region10: #{_lambda_.9} parent=0 // pred_check
    _
  $region11: #{_lambda_.9} parent=0 // pred_check_branch
    %15 = sbr.rel (0) target = $region13
  $region12: #{_lambda_.9} parent=0 // pred_region
    _
  $region13: #{_lambda_.9} parent=0 // pred_fallthru
    _
  // Predicated region
  $region14: #{_lambda_.9} parent=0 // pred_check
    _
  $region15: #{_lambda_.9} parent=0 // pred_check_branch
    %17 = sbr.rel (0) target = $region17
  $region16: #{_lambda_.9} parent=0 // pred_region
    _
  $region17: #{_lambda_.9} parent=0 // pred_fallthru
    _
  // Predicated region
  $region18: #{_lambda_.9} parent=0 // pred_check
    _
  $region19: #{_lambda_.9} parent=0 // pred_check_branch
    %19 = sbr.rel (0) target = $region21
  $region20: #{_lambda_.9} parent=0 // pred_region
    _
  $region21: #{_lambda_.9} parent=0 // pred_fallthru
    _
  %v21 = vld [vmem:[%s0] sm:$0xff]
  %v22 = vld [vmem:[%s0 + $0x8] sm:$0xff]
  %v23 = vld [vmem:[%s1] sm:$0xf]
  %v24 = vpack.c.bf16 %v22, %v21
  %v25 = vld [vmem:[%s2] sm:$0x1]
  %v27 = vlaneseq
  %v28 = vshrl.u32 %v27, 7
  %v29 = vsub.s32 0, %v28
  %v30 = vrot.slane %v25, %v29
  %vm32 = vcmask 64512
  %v34 = vsel %vm32, %v24, 0
  %vm36 = vcmask 1043456
  %v38 = vsel %vm36, %v23, 0
  %40 = vmatprep.subr.bf16.mxu0 0
  %41 = vmatpush1.bf16.msra.mxu0 0
  %42 = vmatprep.subr.bf16.mxu0 0
  %43 = vmatpush1.bf16.msra.mxu0 0
  %44 = vmatprep.subr.bf16.mxu0 0
  %45 = vmatpush1.bf16.msra.mxu0 0
  %46 = vmatprep.subr.bf16.mxu0 0
  %47 = vmatpush1.bf16.msra.mxu0 0
  %48 = vmatprep.subr.bf16.mxu0 0
  %49 = vmatpush1.bf16.msra.mxu0 0
  %50 = vmatprep.subr.bf16.mxu0 0
  %51 = vmatpush1.bf16.msra.mxu0 0
  %52 = vmatprep.subr.bf16.mxu0 0
  %53 = vmatpush1.bf16.msra.mxu0 0
  %54 = vmatprep.subr.bf16.mxu0 0
  %55 = vmatpush1.bf16.msra.mxu0 %v38
  %56 = vmatprep.subr.bf16.mxu0 0
  %57 = vmatpush2.bf16.msra.mxu0 0
  %58 = vmatprep.subr.bf16.mxu0 0
  %59 = vmatpush2.bf16.msra.mxu0 0
  %60 = vmatprep.subr.bf16.mxu0 0
  %61 = vmatpush2.bf16.msra.mxu0 0
  %62 = vmatprep.subr.bf16.mxu0 0
  %63 = vmatpush2.bf16.msra.mxu0 0
  %64 = vmatprep.subr.bf16.mxu0 0
  %65 = vmatpush2.bf16.msra.mxu0 0
  %66 = vmatprep.subr.bf16.mxu0 0
  %67 = vmatpush2.bf16.msra.mxu0 0
  %68 = vmatprep.subr.bf16.mxu0 0
  %69 = vmatpush2.bf16.msra.mxu0 0
  %70 = vmatprep.subr.bf16.mxu0 0
  %71 = vmatpush2.bf16.msra.mxu0 0
  %72 = vmatprep.mubr.bf16.mxu0 0
  %73 = vmatmul.mubr.bf16.gmra.mxu0 %v34
  %v74 = vpop.f32.mrf.mxu0
  %v75 = vadd.f32 %v30, %v74
  %v76 = vpop.f32.mrf.mxu0
  %v77 = vpop.f32.mrf.mxu0
  %v78 = vadd.f32 %v30, %v77
  %v79 = vpop.f32.mrf.mxu0
  %80 = vdwg.mxu0
  %v81 = vld [vmem:[%s3] sm:$0x1]
  %v82 = vld [vmem:[%s4] sm:$0x1]
  %vm83 = vcmask 261120
  %v84 = vsel %vm83, %v75, 0.0
  %85 = vadd.xlane.f32.xlu0 %v84
  %v86 = vpop.xlane.xlu0 %85
  %v87 = vsel %vm83, %v78, 0.0
  %88 = vadd.xlane.f32.xlu0 %v87
  %v89 = vpop.xlane.xlu0 %88
  %v90 = vrcp.pop 32.0
  %v91 = vmul.f32 %v86, %v90
  %v92 = vmul.f32 %v89, %v90
  %v93 = vsub.f32 %v75, %v91
  %v94 = vsub.f32 %v78, %v92
  %v95 = vmul.f32 %v93, %v93
  %v96 = vmul.f32 %v94, %v94
  %v97 = vsel %vm83, %v95, 0.0
  %98 = vadd.xlane.f32.xlu0 %v97
  %v99 = vpop.xlane.xlu0 %98
  %v100 = vsel %vm83, %v96, 0.0
  %101 = vadd.xlane.f32.xlu0 %v100
  %v102 = vpop.xlane.xlu0 %101
  %v103 = vmul.f32 %v99, %v90
  %v104 = vmul.f32 %v102, %v90
  %v105 = vadd.f32 %v103, 1e-05
  %v106 = vadd.f32 %v104, 1e-05
  %v107 = vrsqrt.pop %v105
  %v108 = vrsqrt.pop %v106
  %v109 = vmul.f32 %v93, %v107
  %v110 = vmul.f32 %v94, %v108
  %v112 = vlaneseq
  %v113 = vshrl.u32 %v112, 7
  %v114 = vsub.s32 0, %v113
  %v115 = vrot.slane %v81, %v114
  %v117 = vmul.f32 %v109, %v115
  %v118 = vmul.f32 %v110, %v115
  %v120 = vlaneseq
  %v121 = vshrl.u32 %v120, 7
  %v122 = vsub.s32 0, %v121
  %v123 = vrot.slane %v82, %v122
  %v125 = vadd.f32 %v117, %v123
  %v126 = vadd.f32 %v118, %v123
  %v127 = vpack.c.bf16 %v126, %v125
  %v129 = vunpack.c.l.b16 %v127
  %v130 = vunpack.c.h.b16 %v127
  %v131 = vpack.c.b16 %v129, %v129
  %v132 = vpack.c.b16 %v130, %v130
  %vm135 = vcmask 257024
  %136 = vst.msk [vmem:[%s5] sm:$0xf] %vm135, %v131
  %137 = vst.msk [vmem:[%s5 + $0x4] sm:$0xf] %vm135, %v132
  // Predicated region
  $region22: #{_lambda_.9} parent=0 // pred_check
    _
  $region23: #{_lambda_.9} parent=0 // pred_check_branch
    %139 = sbr.rel (0) target = $region25
  $region24: #{_lambda_.9} parent=0 // pred_region
    _
  $region25: #{_lambda_.9} parent=0 // pred_fallthru
    _
  // Predicated region
  $region26: #{_lambda_.9} parent=0 // pred_check
    _
  $region27: #{_lambda_.9} parent=0 // pred_check_branch
    %141 = sbr.rel (0) target = $region29
  $region28: #{_lambda_.9} parent=0 // pred_region
    _
  $region29: #{_lambda_.9} parent=0 // pred_fallthru
    _

// kernel: _lambda_.10
$region0: #{_lambda_.10}
  #allocation0 [shape = 'u32[]', space=smem, size = 0x4, offset = 0x4, fixed_abs, tag = 'smem constant byte address 0x4 - core index']
  #allocation1 [shape = 'u32[144,128]{1,0:T(1,128)}', space=vmem, size = 0x12000, scoped, tag = 'internal scratch']
  %s0 = inlined_call_operand.vmem [shape: bf16[2,8,32], index: 0, kind: input, shape index: {}]
  %s1 = inlined_call_operand.vmem [shape: bf16[96,32], index: 1, kind: input, shape index: {}]
  %s2 = inlined_call_operand.vmem [shape: f32[1,32], index: 2, kind: input, shape index: {}]
  %s3 = inlined_call_operand.vmem [shape: f32[1,32], index: 3, kind: input, shape index: {}]
  %s4 = inlined_call_operand.vmem [shape: f32[1,32], index: 4, kind: input, shape index: {}]
  %s5 = inlined_call_operand.vmem [shape: bf16[2,6,32], index: 5, kind: output, shape index: {}]
  %s6 = sld [smem:[#allocation0]]
  $region53: #{_lambda_.10} parent=0
    _
  %s8 = ssub.s32 1, %s6
  %s9 = scalar_select 0, %s8, %s6
  loop: start=0, step=1, limit=4
  $region2: #{_lambda_.10} parent=0 // loop_pre_header
    _
  $region3: #{_lambda_.10} parent=0 // loop_header
    %s11 = sphi 0, %s15
    %p12 = scmp.ge.s32.totalorder %s11, 4
    %s21 = sphi 0, %s23
    %s24 = sphi 0, %s21
    %s25 = sphi 0, %s24
    %s41 = sphi 0, %s25
    %s45 = sphi 0, %s45
    %s47 = sphi 0, %s45
    %s48 = sphi 0, %s47
    %s62 = sphi 0, %s48
    %s66 = sphi 0, %s66
    %s68 = sphi 0, %s66
    %s69 = sphi 0, %s68
    %s83 = sphi 0, %s69
    %s87 = sphi 0, %s87
    %s89 = sphi 0, %s87
    %s90 = sphi 0, %s89
    %s104 = sphi 0, %s90
    %s108 = sphi 0, %s108
    %s110 = sphi 0, %s108
    %s111 = sphi 0, %s110
    %s125 = sphi 0, %s111
    %s131 = sphi 0, %s133
    %s134 = sphi 0, %s131
    %s135 = sphi 0, %s134
    %s151 = sphi 0, %s135
  $region4: #{_lambda_.10} parent=0 // loop_header_branch
    %14 = sbr.rel (%p12) target = $region8
  $region5: #{_lambda_.10} parent=0 // loop_body
    %s16 = ssub.s32 %s11, 1
    %s17 = ssub.s32 %s11, 2
    %s18 = sadd.s32 %s11, 1
    %s19 = ssub.s32 %s11, %s18
    %p20 = scmp.eq.s32.totalorder %s19, 0
    %s22 = sadd.s32 %s21, 1
    %s23 = scalar_select %p20, %s21, %s22
    %p26 = pneg %p20
    %p27 = scmp.eq.s32.totalorder %s11, 1
    %p28 = por %p26, %p27
    %p29 = scmp.ne.s32.totalorder %s21, %s24
    %p30 = scmp.eq.s32.totalorder %s11, 0
    %p31 = por %p29, %p30
    %p32 = scmp.ne.s32.totalorder %s21, %s24
    %p33 = scmp.eq.s32.totalorder %s16, 1
    %p34 = por %p32, %p33
    %p35 = scmp.ne.s32.totalorder %s24, %s25
    %p36 = scmp.eq.s32.totalorder %s16, 0
    %p37 = por %p35, %p36
    %p38 = scmp.ne.s32.totalorder %s24, %s25
    %p39 = scmp.eq.s32.totalorder %s17, 1
    %p40 = por %p38, %p39
    %p42 = scmp.ne.s32.totalorder %s25, %s41
    %p43 = scmp.eq.s32.totalorder %s17, 0
    %p44 = por %p42, %p43
    %s46 = sadd.s32 %s45, 1
    %p49 = scmp.eq.s32.totalorder %s11, 1
    %p50 = scmp.ne.s32.totalorder %s45, %s47
    %p51 = scmp.eq.s32.totalorder %s11, 0
    %p52 = por %p50, %p51
    %p53 = scmp.ne.s32.totalorder %s45, %s47
    %p54 = scmp.eq.s32.totalorder %s16, 1
    %p55 = por %p53, %p54
    %p56 = scmp.ne.s32.totalorder %s47, %s48
    %p57 = scmp.eq.s32.totalorder %s16, 0
    %p58 = por %p56, %p57
    %p59 = scmp.ne.s32.totalorder %s47, %s48
    %p60 = scmp.eq.s32.totalorder %s17, 1
    %p61 = por %p59, %p60
    %p63 = scmp.ne.s32.totalorder %s48, %s62
    %p64 = scmp.eq.s32.totalorder %s17, 0
    %p65 = por %p63, %p64
    %s67 = sadd.s32 %s66, 1
    %p70 = scmp.eq.s32.totalorder %s11, 1
    %p71 = scmp.ne.s32.totalorder %s66, %s68
    %p72 = scmp.eq.s32.totalorder %s11, 0
    %p73 = por %p71, %p72
    %p74 = scmp.ne.s32.totalorder %s66, %s68
    %p75 = scmp.eq.s32.totalorder %s16, 1
    %p76 = por %p74, %p75
    %p77 = scmp.ne.s32.totalorder %s68, %s69
    %p78 = scmp.eq.s32.totalorder %s16, 0
    %p79 = por %p77, %p78
    %p80 = scmp.ne.s32.totalorder %s68, %s69
    %p81 = scmp.eq.s32.totalorder %s17, 1
    %p82 = por %p80, %p81
    %p84 = scmp.ne.s32.totalorder %s69, %s83
    %p85 = scmp.eq.s32.totalorder %s17, 0
    %p86 = por %p84, %p85
    %s88 = sadd.s32 %s87, 1
    %p91 = scmp.eq.s32.totalorder %s11, 1
    %p92 = scmp.ne.s32.totalorder %s87, %s89
    %p93 = scmp.eq.s32.totalorder %s11, 0
    %p94 = por %p92, %p93
    %p95 = scmp.ne.s32.totalorder %s87, %s89
    %p96 = scmp.eq.s32.totalorder %s16, 1
    %p97 = por %p95, %p96
    %p98 = scmp.ne.s32.totalorder %s89, %s90
    %p99 = scmp.eq.s32.totalorder %s16, 0
    %p100 = por %p98, %p99
    %p101 = scmp.ne.s32.totalorder %s89, %s90
    %p102 = scmp.eq.s32.totalorder %s17, 1
    %p103 = por %p101, %p102
    %p105 = scmp.ne.s32.totalorder %s90, %s104
    %p106 = scmp.eq.s32.totalorder %s17, 0
    %p107 = por %p105, %p106
    %s109 = sadd.s32 %s108, 1
    %p112 = scmp.eq.s32.totalorder %s11, 1
    %p113 = scmp.ne.s32.totalorder %s108, %s110
    %p114 = scmp.eq.s32.totalorder %s11, 0
    %p115 = por %p113, %p114
    %p116 = scmp.ne.s32.totalorder %s108, %s110
    %p117 = scmp.eq.s32.totalorder %s16, 1
    %p118 = por %p116, %p117
    %p119 = scmp.ne.s32.totalorder %s110, %s111
    %p120 = scmp.eq.s32.totalorder %s16, 0
    %p121 = por %p119, %p120
    %p122 = scmp.ne.s32.totalorder %s110, %s111
    %p123 = scmp.eq.s32.totalorder %s17, 1
    %p124 = por %p122, %p123
    %p126 = scmp.ne.s32.totalorder %s111, %s125
    %p127 = scmp.eq.s32.totalorder %s17, 0
    %p128 = por %p126, %p127
    %s129 = ssub.s32 %s11, %s18
    %p130 = scmp.eq.s32.totalorder %s129, 0
    %s132 = sadd.s32 %s131, 1
    %s133 = scalar_select %p130, %s131, %s132
    %p136 = pneg %p130
    %p137 = scmp.eq.s32.totalorder %s11, 1
    %p138 = por %p136, %p137
    %p139 = scmp.ne.s32.totalorder %s131, %s134
    %p140 = scmp.eq.s32.totalorder %s11, 0
    %p141 = por %p139, %p140
    %p142 = scmp.ne.s32.totalorder %s131, %s134
    %p143 = scmp.eq.s32.totalorder %s16, 1
    %p144 = por %p142, %p143
    %p145 = scmp.ne.s32.totalorder %s134, %s135
    %p146 = scmp.eq.s32.totalorder %s16, 0
    %p147 = por %p145, %p146
    %p148 = scmp.ne.s32.totalorder %s134, %s135
    %p149 = scmp.eq.s32.totalorder %s17, 1
    %p150 = por %p148, %p149
    %p152 = scmp.ne.s32.totalorder %s135, %s151
    %p153 = scmp.eq.s32.totalorder %s17, 0
    %p154 = por %p152, %p153
    %p155 = scmp.le.s32.totalorder 1, %s11
    %p156 = scmp.lt.s32.totalorder %s11, 3
    %p157 = pnand %p155, %p156
    %p158 = pneg %p157
    // Predicated region
    $region9: #{_lambda_.10} parent=5 // pred_check
      _
    $region10: #{_lambda_.10} parent=5 // pred_check_branch
      %160 = sbr.rel (%p157) target = $region12
    $region11: #{_lambda_.10} parent=5 // pred_region
      %s161 = ssub.s32 %s11, 1
      // Predicated region
      $region13: #{_lambda_.10} parent=11 // pred_check
        %p162 = pneg %p58
      $region14: #{_lambda_.10} parent=11 // pred_check_branch
        %164 = sbr.rel (%p162) target = $region16
      $region15: #{_lambda_.10} parent=11 // pred_region
        _
      $region16: #{_lambda_.10} parent=11 // pred_fallthru
        _
      // Predicated region
      $region17: #{_lambda_.10} parent=11 // pred_check
        %p165 = pneg %p79
      $region18: #{_lambda_.10} parent=11 // pred_check_branch
        %167 = sbr.rel (%p165) target = $region20
      $region19: #{_lambda_.10} parent=11 // pred_region
        _
      $region20: #{_lambda_.10} parent=11 // pred_fallthru
        _
      // Predicated region
      $region21: #{_lambda_.10} parent=11 // pred_check
        %p168 = pneg %p100
      $region22: #{_lambda_.10} parent=11 // pred_check_branch
        %170 = sbr.rel (%p168) target = $region24
      $region23: #{_lambda_.10} parent=11 // pred_region
        _
      $region24: #{_lambda_.10} parent=11 // pred_fallthru
        _
      // Predicated region
      $region25: #{_lambda_.10} parent=11 // pred_check
        %p171 = pneg %p121
      $region26: #{_lambda_.10} parent=11 // pred_check_branch
        %173 = sbr.rel (%p171) target = $region28
      $region27: #{_lambda_.10} parent=11 // pred_region
        _
      $region28: #{_lambda_.10} parent=11 // pred_fallthru
        _
    $region12: #{_lambda_.10} parent=5 // pred_fallthru
      _
    %p174 = scmp.lt.s32.totalorder %s11, 2
    // Predicated region
    $region29: #{_lambda_.10} parent=5 // pred_check
      %p175 = pneg %p174
    $region30: #{_lambda_.10} parent=5 // pred_check_branch
      %177 = sbr.rel (%p175) target = $region32
    $region31: #{_lambda_.10} parent=5 // pred_region
      // Predicated region
      $region33: #{_lambda_.10} parent=31 // pred_check
        %p178 = pneg %p31
      $region34: #{_lambda_.10} parent=31 // pred_check_branch
        %180 = sbr.rel (%p178) target = $region36
      $region35: #{_lambda_.10} parent=31 // pred_region
        %p181 = scmp.lt.s32.totalorder %s11, 1
        %s182 = scalar_select %p181, %s11, 1
        %s183 = smul.addr %s182, 4
        %s184 = scalar_lea.vmem %s0, %s183
      $region36: #{_lambda_.10} parent=31 // pred_fallthru
        _
    $region32: #{_lambda_.10} parent=5 // pred_fallthru
      _
    %p185 = scmp.le.s32.totalorder 1, %s11
    %p186 = scmp.lt.s32.totalorder %s11, 3
    %p187 = pnand %p185, %p186
    %p188 = pneg %p187
    // Predicated region
    $region37: #{_lambda_.10} parent=5 // pred_check
      _
    $region38: #{_lambda_.10} parent=5 // pred_check_branch
      %190 = sbr.rel (%p187) target = $region40
    $region39: #{_lambda_.10} parent=5 // pred_region
      %s191 = ssub.s32 %s11, 1
      %p192 = scmp.lt.s32.totalorder %s16, 1
      %s193 = scalar_select %p192, %s16, 1
      %s194 = smul.addr %s193, 4
      %s195 = scalar_lea.vmem %s0, %s194
      %p196 = pneg %p37
      %p197 = pneg %p34
      %p198 = pneg %p58
      %p199 = pneg %p55
      %p200 = pneg %p79
      %p201 = pneg %p76
      %p202 = pneg %p100
      %p203 = pneg %p97
      %p204 = pneg %p121
      %p205 = pneg %p118
      %p206 = pneg %p147
      %p207 = pneg %p144
      %p208 = scmp.lt.s32.totalorder %s16, 1
      %s209 = scalar_select %p208, %s16, 1
      %s210 = smul.addr %s209, 4
      %s211 = scalar_lea.vmem %s5, %s210
      %p212 = scmp.lt.s32.totalorder %s16, 1
      %s213 = scalar_select %p212, %s16, 1
      %s214 = smul.addr %s213, 4
      %s215 = scalar_lea.vmem %s0, %s214
      %p216 = scmp.lt.s32.totalorder %s16, 1
      %s217 = scalar_select %p216, %s16, 1
      %s218 = smul.addr %s217, 4
      %s219 = scalar_lea.vmem %s5, %s218
      %v221 = vld [vmem:[%s215] sm:$0xf]
      %v223 = vunpack.c.l.b16 %v221
      %v224 = vpack.c.b16 %v223, %v223
      %v226 = vshrl.u32 %v224, 16
      %v228 = vshll.u32 %v224, 16
      %v230 = vrot.slane %v228, 1
      %v231 = vor.u32 %v226, %v230
      %232 = vrot.lane.b32.xlu0 %v231, 32
      %v233 = vpop.permute.xlu0 %232
      %v234 = vrot.slane %v224, 1
      %235 = vrot.lane.b32.xlu0 %v234, 64
      %v236 = vpop.permute.xlu0 %235
      %vm237 = vcmask 261120
      %v240 = vsel %vm237, %v221, %v233
      %vm241 = vcmask 523264
      %v243 = vsel %vm241, %v240, %v236
      %v244 = vld [vmem:[%s1] sm:$0xf]
      %v245 = vld [vmem:[%s1 + $0x4] sm:$0xf]
      %v246 = vld [vmem:[%s1 + $0x8] sm:$0xf]
      %v247 = vld [vmem:[%s1 + $0xc] sm:$0xf]
      %v248 = vld [vmem:[%s1 + $0x10] sm:$0xf]
      %v249 = vld [vmem:[%s1 + $0x14] sm:$0xf]
      %v250 = vld [vmem:[%s1 + $0x18] sm:$0xf]
      %v251 = vld [vmem:[%s1 + $0x1c] sm:$0xf]
      %v252 = vld [vmem:[%s1 + $0x20] sm:$0xf]
      %v253 = vld [vmem:[%s1 + $0x24] sm:$0xf]
      %v254 = vld [vmem:[%s1 + $0x28] sm:$0xf]
      %v255 = vld [vmem:[%s1 + $0x2c] sm:$0xf]
      %v256 = vld [vmem:[%s2] sm:$0x1]
      %v258 = vlaneseq
      %v259 = vshrl.u32 %v258, 7
      %v260 = vsub.s32 0, %v259
      %v261 = vrot.slane %v256, %v260
      %v275 = vunpack.c.l.b16 %v244
      %v276 = vunpack.c.l.b16 %v245
      %v277 = vunpack.c.l.b16 %v246
      %v278 = vunpack.c.l.b16 %v247
      %v279 = vunpack.c.l.b16 %v248
      %v280 = vunpack.c.l.b16 %v249
      %v281 = vunpack.c.l.b16 %v250
      %v282 = vunpack.c.l.b16 %v251
      %v283 = vunpack.c.l.b16 %v252
      %v284 = vunpack.c.l.b16 %v253
      %v285 = vunpack.c.l.b16 %v254
      %v286 = vunpack.c.l.b16 %v255
      %v287 = vpack.c.b16 %v276, %v275
      %v288 = vpack.c.b16 %v278, %v277
      %v289 = vpack.c.b16 %v280, %v279
      %v290 = vpack.c.b16 %v282, %v281
      %v291 = vpack.c.b16 %v284, %v283
      %v292 = vpack.c.b16 %v286, %v285
      %vm299 = vcmask 785408
      %v300 = vsel %vm299, %v243, 0
      %302 = vmatprep.subr.bf16.mxu0 0
      %303 = vmatpush1.bf16.msra.mxu0 0
      %304 = vmatprep.subr.bf16.mxu0 0
      %305 = vmatpush1.bf16.msra.mxu0 0
      %306 = vmatprep.subr.bf16.mxu0 0
      %307 = vmatpush1.bf16.msra.mxu0 %v292
      %308 = vmatprep.subr.bf16.mxu0 0
      %309 = vmatpush1.bf16.msra.mxu0 %v291
      %310 = vmatprep.subr.bf16.mxu0 0
      %311 = vmatpush1.bf16.msra.mxu0 %v290
      %312 = vmatprep.subr.bf16.mxu0 0
      %313 = vmatpush1.bf16.msra.mxu0 %v289
      %314 = vmatprep.subr.bf16.mxu0 0
      %315 = vmatpush1.bf16.msra.mxu0 %v288
      %316 = vmatprep.subr.bf16.mxu0 0
      %317 = vmatpush1.bf16.msra.mxu0 %v287
      %318 = vmatprep.subr.bf16.mxu0 0
      %319 = vmatpush2.bf16.msra.mxu0 0
      %320 = vmatprep.subr.bf16.mxu0 0
      %321 = vmatpush2.bf16.msra.mxu0 0
      %322 = vmatprep.subr.bf16.mxu0 0
      %323 = vmatpush2.bf16.msra.mxu0 0
      %324 = vmatprep.subr.bf16.mxu0 0
      %325 = vmatpush2.bf16.msra.mxu0 0
      %326 = vmatprep.subr.bf16.mxu0 0
      %327 = vmatpush2.bf16.msra.mxu0 0
      %328 = vmatprep.subr.bf16.mxu0 0
      %329 = vmatpush2.bf16.msra.mxu0 0
      %330 = vmatprep.subr.bf16.mxu0 0
      %331 = vmatpush2.bf16.msra.mxu0 0
      %332 = vmatprep.subr.bf16.mxu0 0
      %333 = vmatpush2.bf16.msra.mxu0 0
      %334 = vmatprep.mubr.bf16.mxu0 0
      %335 = vmatmul.mubr.bf16.gmra.mxu0 %v300
      %v336 = vpop.f32.mrf.mxu0
      %v337 = vadd.f32 %v261, %v336
      %v338 = vpop.f32.mrf.mxu0
      %v339 = vpop.f32.mrf.mxu0
      %v340 = vpop.f32.mrf.mxu0
      %341 = vdwg.mxu0
      %v342 = vmax.f32 %v337, 0.0
      %v343 = vld [vmem:[%s3] sm:$0x1]
      %v344 = vld [vmem:[%s4] sm:$0x1]
      %vm345 = vcmask 259072
      %v346 = vsel %vm345, %v342, 0.0
      %347 = vadd.xlane.f32.xlu0 %v346
      %v348 = vpop.xlane.xlu0 %347
      %v349 = vrcp.pop 32.0
      %v350 = vmul.f32 %v348, %v349
      %v351 = vsub.f32 %v342, %v350
      %v352 = vmul.f32 %v351, %v351
      %v353 = vsel %vm345, %v352, 0.0
      %354 = vadd.xlane.f32.xlu0 %v353
      %v355 = vpop.xlane.xlu0 %354
      %v356 = vmul.f32 %v355, %v349
      %v357 = vadd.f32 %v356, 1e-05
      %v358 = vrsqrt.pop %v357
      %v359 = vmul.f32 %v351, %v358
      %v361 = vlaneseq
      %v362 = vshrl.u32 %v361, 7
      %v363 = vsub.s32 0, %v362
      %v364 = vrot.slane %v343, %v363
      %v366 = vmul.f32 %v359, %v364
      %v368 = vlaneseq
      %v369 = vshrl.u32 %v368, 7
      %v370 = vsub.s32 0, %v369
      %v371 = vrot.slane %v344, %v370
      %v373 = vadd.f32 %v366, %v371
      %v374 = vpack.c.bf16 %v373, %v373
      %vm375 = vcmask 256000
      %376 = vst.msk [vmem:[%s219] sm:$0x7] %vm375, %v374
      %p377 = scmp.lt.s32.totalorder %s16, 1
      %s378 = scalar_select %p377, %s16, 1
      %s379 = smul.addr %s378, 4
      %s380 = scalar_lea.vmem %s5, %s379
      // Predicated region
      $region41: #{_lambda_.10} parent=39 // pred_check
        %p381 = pneg %p144
      $region42: #{_lambda_.10} parent=39 // pred_check_branch
        %383 = sbr.rel (%p381) target = $region44
      $region43: #{_lambda_.10} parent=39 // pred_region
        _
      $region44: #{_lambda_.10} parent=39 // pred_fallthru
        _
    $region40: #{_lambda_.10} parent=5 // pred_fallthru
      _
    %p384 = scmp.le.s32.totalorder 2, %s11
    // Predicated region
    $region45: #{_lambda_.10} parent=5 // pred_check
      %p385 = pneg %p384
    $region46: #{_lambda_.10} parent=5 // pred_check_branch
      %387 = sbr.rel (%p385) target = $region48
    $region47: #{_lambda_.10} parent=5 // pred_region
      %s388 = ssub.s32 %s11, 2
      // Predicated region
      $region49: #{_lambda_.10} parent=47 // pred_check
        %p389 = pneg %p150
      $region50: #{_lambda_.10} parent=47 // pred_check_branch
        %391 = sbr.rel (%p389) target = $region52
      $region51: #{_lambda_.10} parent=47 // pred_region
        %p392 = scmp.lt.s32.totalorder %s17, 1
        %s393 = scalar_select %p392, %s17, 1
        %s394 = smul.addr %s393, 4
        %s395 = scalar_lea.vmem %s5, %s394
      $region52: #{_lambda_.10} parent=47 // pred_fallthru
        _
    $region48: #{_lambda_.10} parent=5 // pred_fallthru
      _
  $region6: #{_lambda_.10} parent=0 // loop_footer
    %s15 = sadd.s32 1, %s11
  $region7: #{_lambda_.10} parent=0 // loop_footer_branch
    %10 = sbr.rel target = $region3
  $region8: #{_lambda_.10} parent=0 // loop_exit
    _

// kernel: _lambda_.12
$region0: #{_lambda_.12}
  #allocation0 [shape = 'u32[]', space=smem, size = 0x4, offset = 0x4, fixed_abs, tag = 'smem constant byte address 0x4 - core index']
  #allocation1 [shape = 'u32[144,128]{1,0:T(1,128)}', space=vmem, size = 0x12000, scoped, tag = 'internal scratch']
  %s0 = inlined_call_operand.vmem [shape: bf16[12,32], index: 0, kind: input, shape index: {}]
  %s1 = inlined_call_operand.vmem [shape: bf16[32,128], index: 1, kind: input, shape index: {}]
  %s2 = inlined_call_operand.vmem [shape: f32[1,128], index: 2, kind: input, shape index: {}]
  %s3 = inlined_call_operand.vmem [shape: bf16[128,32], index: 3, kind: input, shape index: {}]
  %s4 = inlined_call_operand.vmem [shape: f32[1,32], index: 4, kind: input, shape index: {}]
  %s5 = inlined_call_operand.vmem [shape: f32[1,32], index: 5, kind: input, shape index: {}]
  %s6 = inlined_call_operand.vmem [shape: f32[1,32], index: 6, kind: input, shape index: {}]
  %s7 = inlined_call_operand.vmem [shape: bf16[12,32], index: 7, kind: output, shape index: {}]
  %s8 = sld [smem:[#allocation0]]
  $region38: #{_lambda_.12} parent=0
    _
  %s10 = ssub.s32 1, %s8
  %s11 = scalar_select 0, %s10, %s8
  // Predicated region
  $region2: #{_lambda_.12} parent=0 // pred_check
    _
  $region3: #{_lambda_.12} parent=0 // pred_check_branch
    %13 = sbr.rel (0) target = $region5
  $region4: #{_lambda_.12} parent=0 // pred_region
    _
  $region5: #{_lambda_.12} parent=0 // pred_fallthru
    _
  // Predicated region
  $region6: #{_lambda_.12} parent=0 // pred_check
    _
  $region7: #{_lambda_.12} parent=0 // pred_check_branch
    %15 = sbr.rel (0) target = $region9
  $region8: #{_lambda_.12} parent=0 // pred_region
    _
  $region9: #{_lambda_.12} parent=0 // pred_fallthru
    _
  // Predicated region
  $region10: #{_lambda_.12} parent=0 // pred_check
    _
  $region11: #{_lambda_.12} parent=0 // pred_check_branch
    %17 = sbr.rel (0) target = $region13
  $region12: #{_lambda_.12} parent=0 // pred_region
    _
  $region13: #{_lambda_.12} parent=0 // pred_fallthru
    _
  // Predicated region
  $region14: #{_lambda_.12} parent=0 // pred_check
    _
  $region15: #{_lambda_.12} parent=0 // pred_check_branch
    %19 = sbr.rel (0) target = $region17
  $region16: #{_lambda_.12} parent=0 // pred_region
    _
  $region17: #{_lambda_.12} parent=0 // pred_fallthru
    _
  // Predicated region
  $region18: #{_lambda_.12} parent=0 // pred_check
    _
  $region19: #{_lambda_.12} parent=0 // pred_check_branch
    %21 = sbr.rel (0) target = $region21
  $region20: #{_lambda_.12} parent=0 // pred_region
    _
  $region21: #{_lambda_.12} parent=0 // pred_fallthru
    _
  // Predicated region
  $region22: #{_lambda_.12} parent=0 // pred_check
    _
  $region23: #{_lambda_.12} parent=0 // pred_check_branch
    %23 = sbr.rel (0) target = $region25
  $region24: #{_lambda_.12} parent=0 // pred_region
    _
  $region25: #{_lambda_.12} parent=0 // pred_fallthru
    _
  // Predicated region
  $region26: #{_lambda_.12} parent=0 // pred_check
    _
  $region27: #{_lambda_.12} parent=0 // pred_check_branch
    %25 = sbr.rel (0) target = $region29
  $region28: #{_lambda_.12} parent=0 // pred_region
    _
  $region29: #{_lambda_.12} parent=0 // pred_fallthru
    _
  %v27 = vld [vmem:[%s0] sm:$0xf]
  %v28 = vld [vmem:[%s0 + $0x4] sm:$0x3]
  %v29 = vld [vmem:[%s1] sm:$0xf]
  %v30 = vld [vmem:[%s1 + $0x4] sm:$0xf]
  %v31 = vld [vmem:[%s1 + $0x8] sm:$0xf]
  %v32 = vld [vmem:[%s1 + $0xc] sm:$0xf]
  %v33 = vld [vmem:[%s2] sm:$0x1]
  %v35 = vlaneseq
  %v36 = vshrl.u32 %v35, 7
  %v37 = vsub.s32 0, %v36
  %v38 = vrot.slane %v33, %v37
  %v42 = vunpack.c.l.b16 %v27
  %v43 = vunpack.c.l.b16 %v28
  %v44 = vpack.c.b16 %v43, %v42
  %v49 = vunpack.c.l.b16 %v29
  %v50 = vunpack.c.l.b16 %v30
  %v51 = vunpack.c.l.b16 %v31
  %v52 = vunpack.c.l.b16 %v32
  %v53 = vpack.c.b16 %v50, %v49
  %v54 = vpack.c.b16 %v52, %v51
  %vm57 = vcmask 261120
  %v59 = vsel %vm57, %v44, 0
  %61 = vmatprep.subr.bf16.mxu0 0
  %62 = vmatpush1.bf16.msra.mxu0 0
  %63 = vmatprep.subr.bf16.mxu0 0
  %64 = vmatpush1.bf16.msra.mxu0 0
  %65 = vmatprep.subr.bf16.mxu0 0
  %66 = vmatpush1.bf16.msra.mxu0 0
  %67 = vmatprep.subr.bf16.mxu0 0
  %68 = vmatpush1.bf16.msra.mxu0 0
  %69 = vmatprep.subr.bf16.mxu0 0
  %70 = vmatpush1.bf16.msra.mxu0 0
  %71 = vmatprep.subr.bf16.mxu0 0
  %72 = vmatpush1.bf16.msra.mxu0 0
  %73 = vmatprep.subr.bf16.mxu0 0
  %74 = vmatpush1.bf16.msra.mxu0 %v54
  %75 = vmatprep.subr.bf16.mxu0 0
  %76 = vmatpush1.bf16.msra.mxu0 %v53
  %77 = vmatprep.subr.bf16.mxu0 0
  %78 = vmatpush2.bf16.msra.mxu0 0
  %79 = vmatprep.subr.bf16.mxu0 0
  %80 = vmatpush2.bf16.msra.mxu0 0
  %81 = vmatprep.subr.bf16.mxu0 0
  %82 = vmatpush2.bf16.msra.mxu0 0
  %83 = vmatprep.subr.bf16.mxu0 0
  %84 = vmatpush2.bf16.msra.mxu0 0
  %85 = vmatprep.subr.bf16.mxu0 0
  %86 = vmatpush2.bf16.msra.mxu0 0
  %87 = vmatprep.subr.bf16.mxu0 0
  %88 = vmatpush2.bf16.msra.mxu0 0
  %89 = vmatprep.subr.bf16.mxu0 0
  %90 = vmatpush2.bf16.msra.mxu0 0
  %91 = vmatprep.subr.bf16.mxu0 0
  %92 = vmatpush2.bf16.msra.mxu0 0
  %93 = vmatprep.mubr.bf16.mxu0 0
  %94 = vmatmul.mubr.bf16.gmra.mxu0 %v59
  %v95 = vpop.f32.mrf.mxu0
  %v96 = vadd.f32 %v38, %v95
  %v97 = vpop.f32.mrf.mxu0
  %v98 = vpop.f32.mrf.mxu0
  %v99 = vadd.f32 %v38, %v98
  %v100 = vpop.f32.mrf.mxu0
  %101 = vdwg.mxu0
  %v102 = vmax.f32 %v96, 0.0
  %v103 = vmax.f32 %v99, 0.0
  %v104 = vld [vmem:[%s3] sm:$0xf]
  %v105 = vld [vmem:[%s3 + $0x4] sm:$0xf]
  %v106 = vld [vmem:[%s3 + $0x8] sm:$0xf]
  %v107 = vld [vmem:[%s3 + $0xc] sm:$0xf]
  %v108 = vld [vmem:[%s3 + $0x10] sm:$0xf]
  %v109 = vld [vmem:[%s3 + $0x14] sm:$0xf]
  %v110 = vld [vmem:[%s3 + $0x18] sm:$0xf]
  %v111 = vld [vmem:[%s3 + $0x1c] sm:$0xf]
  %v112 = vld [vmem:[%s3 + $0x20] sm:$0xf]
  %v113 = vld [vmem:[%s3 + $0x24] sm:$0xf]
  %v114 = vld [vmem:[%s3 + $0x28] sm:$0xf]
  %v115 = vld [vmem:[%s3 + $0x2c] sm:$0xf]
  %v116 = vld [vmem:[%s3 + $0x30] sm:$0xf]
  %v117 = vld [vmem:[%s3 + $0x34] sm:$0xf]
  %v118 = vld [vmem:[%s3 + $0x38] sm:$0xf]
  %v119 = vld [vmem:[%s3 + $0x3c] sm:$0xf]
  %v120 = vpack.c.bf16 %v103, %v102
  %v121 = vld [vmem:[%s4] sm:$0x1]
  %v123 = vlaneseq
  %v124 = vshrl.u32 %v123, 7
  %v125 = vsub.s32 0, %v124
  %v126 = vrot.slane %v121, %v125
  %v144 = vunpack.c.l.b16 %v104
  %v145 = vunpack.c.l.b16 %v105
  %v146 = vunpack.c.l.b16 %v106
  %v147 = vunpack.c.l.b16 %v107
  %v148 = vunpack.c.l.b16 %v108
  %v149 = vunpack.c.l.b16 %v109
  %v150 = vunpack.c.l.b16 %v110
  %v151 = vunpack.c.l.b16 %v111
  %v152 = vunpack.c.l.b16 %v112
  %v153 = vunpack.c.l.b16 %v113
  %v154 = vunpack.c.l.b16 %v114
  %v155 = vunpack.c.l.b16 %v115
  %v156 = vunpack.c.l.b16 %v116
  %v157 = vunpack.c.l.b16 %v117
  %v158 = vunpack.c.l.b16 %v118
  %v159 = vunpack.c.l.b16 %v119
  %v160 = vpack.c.b16 %v145, %v144
  %v161 = vpack.c.b16 %v147, %v146
  %v162 = vpack.c.b16 %v149, %v148
  %v163 = vpack.c.b16 %v151, %v150
  %v164 = vpack.c.b16 %v153, %v152
  %v165 = vpack.c.b16 %v155, %v154
  %v166 = vpack.c.b16 %v157, %v156
  %v167 = vpack.c.b16 %v159, %v158
  %176 = vmatprep.subr.bf16.mxu0 0
  %177 = vmatpush1.bf16.msra.mxu0 %v167
  %178 = vmatprep.subr.bf16.mxu0 0
  %179 = vmatpush1.bf16.msra.mxu0 %v166
  %180 = vmatprep.subr.bf16.mxu0 0
  %181 = vmatpush1.bf16.msra.mxu0 %v165
  %182 = vmatprep.subr.bf16.mxu0 0
  %183 = vmatpush1.bf16.msra.mxu0 %v164
  %184 = vmatprep.subr.bf16.mxu0 0
  %185 = vmatpush1.bf16.msra.mxu0 %v163
  %186 = vmatprep.subr.bf16.mxu0 0
  %187 = vmatpush1.bf16.msra.mxu0 %v162
  %188 = vmatprep.subr.bf16.mxu0 0
  %189 = vmatpush1.bf16.msra.mxu0 %v161
  %190 = vmatprep.subr.bf16.mxu0 0
  %191 = vmatpush1.bf16.msra.mxu0 %v160
  %192 = vmatprep.subr.bf16.mxu0 0
  %193 = vmatpush2.bf16.msra.mxu0 0
  %194 = vmatprep.subr.bf16.mxu0 0
  %195 = vmatpush2.bf16.msra.mxu0 0
  %196 = vmatprep.subr.bf16.mxu0 0
  %197 = vmatpush2.bf16.msra.mxu0 0
  %198 = vmatprep.subr.bf16.mxu0 0
  %199 = vmatpush2.bf16.msra.mxu0 0
  %200 = vmatprep.subr.bf16.mxu0 0
  %201 = vmatpush2.bf16.msra.mxu0 0
  %202 = vmatprep.subr.bf16.mxu0 0
  %203 = vmatpush2.bf16.msra.mxu0 0
  %204 = vmatprep.subr.bf16.mxu0 0
  %205 = vmatpush2.bf16.msra.mxu0 0
  %206 = vmatprep.subr.bf16.mxu0 0
  %207 = vmatpush2.bf16.msra.mxu0 0
  %208 = vmatprep.mubr.bf16.mxu0 0
  %209 = vmatmul.mubr.bf16.gmra.mxu0 %v120
  %v210 = vpop.f32.mrf.mxu0
  %v211 = vadd.f32 %v126, %v210
  %v212 = vpop.f32.mrf.mxu0
  %v213 = vpop.f32.mrf.mxu0
  %v214 = vadd.f32 %v126, %v213
  %v215 = vpop.f32.mrf.mxu0
  %216 = vdwg.mxu0
  %v217 = vunpack.c.l.bf16 %v27
  %v218 = vunpack.c.l.bf16 %v28
  %v219 = vadd.f32 %v211, %v217
  %v220 = vadd.f32 %v214, %v218
  %v221 = vld [vmem:[%s5] sm:$0x1]
  %v222 = vld [vmem:[%s6] sm:$0x1]
  %v223 = vsel %vm57, %v219, 0.0
  %224 = vadd.xlane.f32.xlu0 %v223
  %v225 = vpop.xlane.xlu0 %224
  %vm226 = vcmask 257024
  %v227 = vsel %vm226, %v220, 0.0
  %228 = vadd.xlane.f32.xlu0 %v227
  %v229 = vpop.xlane.xlu0 %228
  %v230 = vrcp.pop 32.0
  %v231 = vmul.f32 %v225, %v230
  %v232 = vmul.f32 %v229, %v230
  %v233 = vsub.f32 %v219, %v231
  %v234 = vsub.f32 %v220, %v232
  %v235 = vmul.f32 %v233, %v233
  %v236 = vmul.f32 %v234, %v234
  %v237 = vsel %vm57, %v235, 0.0
  %238 = vadd.xlane.f32.xlu0 %v237
  %v239 = vpop.xlane.xlu0 %238
  %v240 = vsel %vm226, %v236, 0.0
  %241 = vadd.xlane.f32.xlu0 %v240
  %v242 = vpop.xlane.xlu0 %241
  %v243 = vmul.f32 %v239, %v230
  %v244 = vmul.f32 %v242, %v230
  %v245 = vadd.f32 %v243, 1e-05
  %v246 = vadd.f32 %v244, 1e-05
  %v247 = vrsqrt.pop %v245
  %v248 = vrsqrt.pop %v246
  %v249 = vmul.f32 %v233, %v247
  %v250 = vmul.f32 %v234, %v248
  %v252 = vlaneseq
  %v253 = vshrl.u32 %v252, 7
  %v254 = vsub.s32 0, %v253
  %v255 = vrot.slane %v221, %v254
  %v257 = vmul.f32 %v249, %v255
  %v258 = vmul.f32 %v250, %v255
  %v260 = vlaneseq
  %v261 = vshrl.u32 %v260, 7
  %v262 = vsub.s32 0, %v261
  %v263 = vrot.slane %v222, %v262
  %v265 = vadd.f32 %v257, %v263
  %v266 = vadd.f32 %v258, %v263
  %v267 = vpack.c.bf16 %v266, %v265
  %v269 = vunpack.c.l.b16 %v267
  %v270 = vunpack.c.h.b16 %v267
  %v271 = vpack.c.b16 %v269, %v269
  %v272 = vpack.c.b16 %v270, %v270
  %275 = vst.msk [vmem:[%s7] sm:$0xf] %vm226, %v271
  %vm276 = vcmask 254976
  %277 = vst.msk [vmem:[%s7 + $0x4] sm:$0x3] %vm276, %v272
  // Predicated region
  $region30: #{_lambda_.12} parent=0 // pred_check
    _
  $region31: #{_lambda_.12} parent=0 // pred_check_branch
    %279 = sbr.rel (0) target = $region33
  $region32: #{_lambda_.12} parent=0 // pred_region
    _
  $region33: #{_lambda_.12} parent=0 // pred_fallthru
    _
  // Predicated region
  $region34: #{_lambda_.12} parent=0 // pred_check
    _
  $region35: #{_lambda_.12} parent=0 // pred_check_branch
    %281 = sbr.rel (0) target = $region37
  $region36: #{_lambda_.12} parent=0 // pred_region
    _
  $region37: #{_lambda_.12} parent=0 // pred_fallthru
    _

// kernel: _lambda_.11
$region0: #{_lambda_.11}
  #allocation0 [shape = 'u32[]', space=smem, size = 0x4, offset = 0x4, fixed_abs, tag = 'smem constant byte address 0x4 - core index']
  #allocation1 [shape = 'u32[144,128]{1,0:T(1,128)}', space=vmem, size = 0x12000, scoped, tag = 'internal scratch']
  #allocation2 [shape = 'bf16[6,32]{1,0:T(8,128)(2,1)}', space=vmem, size = 0x800, scoped, tag = 'scratch operand']
  %s0 = inlined_call_operand.vmem [shape: bf16[2,6,32], index: 0, kind: input, shape index: {}]
  %s1 = inlined_call_operand.vmem [shape: bf16[32,96], index: 1, kind: input, shape index: {}]
  %s2 = inlined_call_operand.vmem [shape: f32[1,96], index: 2, kind: input, shape index: {}]
  %s3 = inlined_call_operand.vmem [shape: bf16[32,32], index: 3, kind: input, shape index: {}]
  %s4 = inlined_call_operand.vmem [shape: f32[1,32], index: 4, kind: input, shape index: {}]
  %s5 = inlined_call_operand.vmem [shape: f32[1,32], index: 5, kind: input, shape index: {}]
  %s6 = inlined_call_operand.vmem [shape: f32[1,32], index: 6, kind: input, shape index: {}]
  %s7 = inlined_call_operand.vmem [shape: bf16[2,6,32], index: 7, kind: output, shape index: {}]
  %s8 = sld [smem:[#allocation0]]
  $region61: #{_lambda_.11} parent=0
    _
  %s10 = ssub.s32 1, %s8
  %s11 = scalar_select 0, %s10, %s8
  loop: start=0, step=1, limit=4
  $region2: #{_lambda_.11} parent=0 // loop_pre_header
    _
  $region3: #{_lambda_.11} parent=0 // loop_header
    %s13 = sphi 0, %s17
    %p14 = scmp.ge.s32.totalorder %s13, 4
    %s23 = sphi 0, %s25
    %s26 = sphi 0, %s23
    %s27 = sphi 0, %s26
    %s43 = sphi 0, %s27
    %s47 = sphi 0, %s47
    %s49 = sphi 0, %s47
    %s50 = sphi 0, %s49
    %s64 = sphi 0, %s50
    %s68 = sphi 0, %s68
    %s70 = sphi 0, %s68
    %s71 = sphi 0, %s70
    %s85 = sphi 0, %s71
    %s89 = sphi 0, %s89
    %s91 = sphi 0, %s89
    %s92 = sphi 0, %s91
    %s106 = sphi 0, %s92
    %s110 = sphi 0, %s110
    %s112 = sphi 0, %s110
    %s113 = sphi 0, %s112
    %s127 = sphi 0, %s113
    %s131 = sphi 0, %s131
    %s133 = sphi 0, %s131
    %s134 = sphi 0, %s133
    %s148 = sphi 0, %s134
    %s152 = sphi 0, %s152
    %s154 = sphi 0, %s152
    %s155 = sphi 0, %s154
    %s169 = sphi 0, %s155
    %s175 = sphi 0, %s177
    %s178 = sphi 0, %s175
    %s179 = sphi 0, %s178
    %s195 = sphi 0, %s179
  $region4: #{_lambda_.11} parent=0 // loop_header_branch
    %16 = sbr.rel (%p14) target = $region8
  $region5: #{_lambda_.11} parent=0 // loop_body
    %s18 = ssub.s32 %s13, 1
    %s19 = ssub.s32 %s13, 2
    %s20 = sadd.s32 %s13, 1
    %s21 = ssub.s32 %s13, %s20
    %p22 = scmp.eq.s32.totalorder %s21, 0
    %s24 = sadd.s32 %s23, 1
    %s25 = scalar_select %p22, %s23, %s24
    %p28 = pneg %p22
    %p29 = scmp.eq.s32.totalorder %s13, 1
    %p30 = por %p28, %p29
    %p31 = scmp.ne.s32.totalorder %s23, %s26
    %p32 = scmp.eq.s32.totalorder %s13, 0
    %p33 = por %p31, %p32
    %p34 = scmp.ne.s32.totalorder %s23, %s26
    %p35 = scmp.eq.s32.totalorder %s18, 1
    %p36 = por %p34, %p35
    %p37 = scmp.ne.s32.totalorder %s26, %s27
    %p38 = scmp.eq.s32.totalorder %s18, 0
    %p39 = por %p37, %p38
    %p40 = scmp.ne.s32.totalorder %s26, %s27
    %p41 = scmp.eq.s32.totalorder %s19, 1
    %p42 = por %p40, %p41
    %p44 = scmp.ne.s32.totalorder %s27, %s43
    %p45 = scmp.eq.s32.totalorder %s19, 0
    %p46 = por %p44, %p45
    %s48 = sadd.s32 %s47, 1
    %p51 = scmp.eq.s32.totalorder %s13, 1
    %p52 = scmp.ne.s32.totalorder %s47, %s49
    %p53 = scmp.eq.s32.totalorder %s13, 0
    %p54 = por %p52, %p53
    %p55 = scmp.ne.s32.totalorder %s47, %s49
    %p56 = scmp.eq.s32.totalorder %s18, 1
    %p57 = por %p55, %p56
    %p58 = scmp.ne.s32.totalorder %s49, %s50
    %p59 = scmp.eq.s32.totalorder %s18, 0
    %p60 = por %p58, %p59
    %p61 = scmp.ne.s32.totalorder %s49, %s50
    %p62 = scmp.eq.s32.totalorder %s19, 1
    %p63 = por %p61, %p62
    %p65 = scmp.ne.s32.totalorder %s50, %s64
    %p66 = scmp.eq.s32.totalorder %s19, 0
    %p67 = por %p65, %p66
    %s69 = sadd.s32 %s68, 1
    %p72 = scmp.eq.s32.totalorder %s13, 1
    %p73 = scmp.ne.s32.totalorder %s68, %s70
    %p74 = scmp.eq.s32.totalorder %s13, 0
    %p75 = por %p73, %p74
    %p76 = scmp.ne.s32.totalorder %s68, %s70
    %p77 = scmp.eq.s32.totalorder %s18, 1
    %p78 = por %p76, %p77
    %p79 = scmp.ne.s32.totalorder %s70, %s71
    %p80 = scmp.eq.s32.totalorder %s18, 0
    %p81 = por %p79, %p80
    %p82 = scmp.ne.s32.totalorder %s70, %s71
    %p83 = scmp.eq.s32.totalorder %s19, 1
    %p84 = por %p82, %p83
    %p86 = scmp.ne.s32.totalorder %s71, %s85
    %p87 = scmp.eq.s32.totalorder %s19, 0
    %p88 = por %p86, %p87
    %s90 = sadd.s32 %s89, 1
    %p93 = scmp.eq.s32.totalorder %s13, 1
    %p94 = scmp.ne.s32.totalorder %s89, %s91
    %p95 = scmp.eq.s32.totalorder %s13, 0
    %p96 = por %p94, %p95
    %p97 = scmp.ne.s32.totalorder %s89, %s91
    %p98 = scmp.eq.s32.totalorder %s18, 1
    %p99 = por %p97, %p98
    %p100 = scmp.ne.s32.totalorder %s91, %s92
    %p101 = scmp.eq.s32.totalorder %s18, 0
    %p102 = por %p100, %p101
    %p103 = scmp.ne.s32.totalorder %s91, %s92
    %p104 = scmp.eq.s32.totalorder %s19, 1
    %p105 = por %p103, %p104
    %p107 = scmp.ne.s32.totalorder %s92, %s106
    %p108 = scmp.eq.s32.totalorder %s19, 0
    %p109 = por %p107, %p108
    %s111 = sadd.s32 %s110, 1
    %p114 = scmp.eq.s32.totalorder %s13, 1
    %p115 = scmp.ne.s32.totalorder %s110, %s112
    %p116 = scmp.eq.s32.totalorder %s13, 0
    %p117 = por %p115, %p116
    %p118 = scmp.ne.s32.totalorder %s110, %s112
    %p119 = scmp.eq.s32.totalorder %s18, 1
    %p120 = por %p118, %p119
    %p121 = scmp.ne.s32.totalorder %s112, %s113
    %p122 = scmp.eq.s32.totalorder %s18, 0
    %p123 = por %p121, %p122
    %p124 = scmp.ne.s32.totalorder %s112, %s113
    %p125 = scmp.eq.s32.totalorder %s19, 1
    %p126 = por %p124, %p125
    %p128 = scmp.ne.s32.totalorder %s113, %s127
    %p129 = scmp.eq.s32.totalorder %s19, 0
    %p130 = por %p128, %p129
    %s132 = sadd.s32 %s131, 1
    %p135 = scmp.eq.s32.totalorder %s13, 1
    %p136 = scmp.ne.s32.totalorder %s131, %s133
    %p137 = scmp.eq.s32.totalorder %s13, 0
    %p138 = por %p136, %p137
    %p139 = scmp.ne.s32.totalorder %s131, %s133
    %p140 = scmp.eq.s32.totalorder %s18, 1
    %p141 = por %p139, %p140
    %p142 = scmp.ne.s32.totalorder %s133, %s134
    %p143 = scmp.eq.s32.totalorder %s18, 0
    %p144 = por %p142, %p143
    %p145 = scmp.ne.s32.totalorder %s133, %s134
    %p146 = scmp.eq.s32.totalorder %s19, 1
    %p147 = por %p145, %p146
    %p149 = scmp.ne.s32.totalorder %s134, %s148
    %p150 = scmp.eq.s32.totalorder %s19, 0
    %p151 = por %p149, %p150
    %s153 = sadd.s32 %s152, 1
    %p156 = scmp.eq.s32.totalorder %s13, 1
    %p157 = scmp.ne.s32.totalorder %s152, %s154
    %p158 = scmp.eq.s32.totalorder %s13, 0
    %p159 = por %p157, %p158
    %p160 = scmp.ne.s32.totalorder %s152, %s154
    %p161 = scmp.eq.s32.totalorder %s18, 1
    %p162 = por %p160, %p161
    %p163 = scmp.ne.s32.totalorder %s154, %s155
    %p164 = scmp.eq.s32.totalorder %s18, 0
    %p165 = por %p163, %p164
    %p166 = scmp.ne.s32.totalorder %s154, %s155
    %p167 = scmp.eq.s32.totalorder %s19, 1
    %p168 = por %p166, %p167
    %p170 = scmp.ne.s32.totalorder %s155, %s169
    %p171 = scmp.eq.s32.totalorder %s19, 0
    %p172 = por %p170, %p171
    %s173 = ssub.s32 %s13, %s20
    %p174 = scmp.eq.s32.totalorder %s173, 0
    %s176 = sadd.s32 %s175, 1
    %s177 = scalar_select %p174, %s175, %s176
    %p180 = pneg %p174
    %p181 = scmp.eq.s32.totalorder %s13, 1
    %p182 = por %p180, %p181
    %p183 = scmp.ne.s32.totalorder %s175, %s178
    %p184 = scmp.eq.s32.totalorder %s13, 0
    %p185 = por %p183, %p184
    %p186 = scmp.ne.s32.totalorder %s175, %s178
    %p187 = scmp.eq.s32.totalorder %s18, 1
    %p188 = por %p186, %p187
    %p189 = scmp.ne.s32.totalorder %s178, %s179
    %p190 = scmp.eq.s32.totalorder %s18, 0
    %p191 = por %p189, %p190
    %p192 = scmp.ne.s32.totalorder %s178, %s179
    %p193 = scmp.eq.s32.totalorder %s19, 1
    %p194 = por %p192, %p193
    %p196 = scmp.ne.s32.totalorder %s179, %s195
    %p197 = scmp.eq.s32.totalorder %s19, 0
    %p198 = por %p196, %p197
    %p199 = scmp.le.s32.totalorder 1, %s13
    %p200 = scmp.lt.s32.totalorder %s13, 3
    %p201 = pnand %p199, %p200
    %p202 = pneg %p201
    // Predicated region
    $region9: #{_lambda_.11} parent=5 // pred_check
      _
    $region10: #{_lambda_.11} parent=5 // pred_check_branch
      %204 = sbr.rel (%p201) target = $region12
    $region11: #{_lambda_.11} parent=5 // pred_region
      %s205 = ssub.s32 %s13, 1
      // Predicated region
      $region13: #{_lambda_.11} parent=11 // pred_check
        %p206 = pneg %p60
      $region14: #{_lambda_.11} parent=11 // pred_check_branch
        %208 = sbr.rel (%p206) target = $region16
      $region15: #{_lambda_.11} parent=11 // pred_region
        _
      $region16: #{_lambda_.11} parent=11 // pred_fallthru
        _
      // Predicated region
      $region17: #{_lambda_.11} parent=11 // pred_check
        %p209 = pneg %p81
      $region18: #{_lambda_.11} parent=11 // pred_check_branch
        %211 = sbr.rel (%p209) target = $region20
      $region19: #{_lambda_.11} parent=11 // pred_region
        _
      $region20: #{_lambda_.11} parent=11 // pred_fallthru
        _
      // Predicated region
      $region21: #{_lambda_.11} parent=11 // pred_check
        %p212 = pneg %p102
      $region22: #{_lambda_.11} parent=11 // pred_check_branch
        %214 = sbr.rel (%p212) target = $region24
      $region23: #{_lambda_.11} parent=11 // pred_region
        _
      $region24: #{_lambda_.11} parent=11 // pred_fallthru
        _
      // Predicated region
      $region25: #{_lambda_.11} parent=11 // pred_check
        %p215 = pneg %p123
      $region26: #{_lambda_.11} parent=11 // pred_check_branch
        %217 = sbr.rel (%p215) target = $region28
      $region27: #{_lambda_.11} parent=11 // pred_region
        _
      $region28: #{_lambda_.11} parent=11 // pred_fallthru
        _
      // Predicated region
      $region29: #{_lambda_.11} parent=11 // pred_check
        %p218 = pneg %p144
      $region30: #{_lambda_.11} parent=11 // pred_check_branch
        %220 = sbr.rel (%p218) target = $region32
      $region31: #{_lambda_.11} parent=11 // pred_region
        _
      $region32: #{_lambda_.11} parent=11 // pred_fallthru
        _
      // Predicated region
      $region33: #{_lambda_.11} parent=11 // pred_check
        %p221 = pneg %p165
      $region34: #{_lambda_.11} parent=11 // pred_check_branch
        %223 = sbr.rel (%p221) target = $region36
      $region35: #{_lambda_.11} parent=11 // pred_region
        _
      $region36: #{_lambda_.11} parent=11 // pred_fallthru
        _
    $region12: #{_lambda_.11} parent=5 // pred_fallthru
      _
    %p224 = scmp.lt.s32.totalorder %s13, 2
    // Predicated region
    $region37: #{_lambda_.11} parent=5 // pred_check
      %p225 = pneg %p224
    $region38: #{_lambda_.11} parent=5 // pred_check_branch
      %227 = sbr.rel (%p225) target = $region40
    $region39: #{_lambda_.11} parent=5 // pred_region
      // Predicated region
      $region41: #{_lambda_.11} parent=39 // pred_check
        %p228 = pneg %p33
      $region42: #{_lambda_.11} parent=39 // pred_check_branch
        %230 = sbr.rel (%p228) target = $region44
      $region43: #{_lambda_.11} parent=39 // pred_region
        %p231 = scmp.lt.s32.totalorder %s13, 1
        %s232 = scalar_select %p231, %s13, 1
        %s233 = smul.addr %s232, 4
        %s234 = scalar_lea.vmem %s0, %s233
      $region44: #{_lambda_.11} parent=39 // pred_fallthru
        _
    $region40: #{_lambda_.11} parent=5 // pred_fallthru
      _
    %p235 = scmp.le.s32.totalorder 1, %s13
    %p236 = scmp.lt.s32.totalorder %s13, 3
    %p237 = pnand %p235, %p236
    %p238 = pneg %p237
    // Predicated region
    $region45: #{_lambda_.11} parent=5 // pred_check
      _
    $region46: #{_lambda_.11} parent=5 // pred_check_branch
      %240 = sbr.rel (%p237) target = $region48
    $region47: #{_lambda_.11} parent=5 // pred_region
      %s241 = ssub.s32 %s13, 1
      %p242 = scmp.lt.s32.totalorder %s18, 1
      %s243 = scalar_select %p242, %s18, 1
      %s244 = smul.addr %s243, 4
      %s245 = scalar_lea.vmem %s0, %s244
      %p246 = pneg %p39
      %p247 = pneg %p36
      %p248 = pneg %p60
      %p249 = pneg %p57
      %p250 = pneg %p81
      %p251 = pneg %p78
      %p252 = pneg %p102
      %p253 = pneg %p99
      %p254 = pneg %p123
      %p255 = pneg %p120
      %p256 = pneg %p144
      %p257 = pneg %p141
      %p258 = pneg %p165
      %p259 = pneg %p162
      %p260 = pneg %p191
      %p261 = pneg %p188
      %p262 = scmp.lt.s32.totalorder %s18, 1
      %s263 = scalar_select %p262, %s18, 1
      %s264 = smul.addr %s263, 4
      %s265 = scalar_lea.vmem %s7, %s264
      %p266 = scmp.lt.s32.totalorder %s18, 1
      %s267 = scalar_select %p266, %s18, 1
      %s268 = smul.addr %s267, 4
      %s269 = scalar_lea.vmem %s0, %s268
      %p270 = scmp.lt.s32.totalorder %s18, 1
      %s271 = scalar_select %p270, %s18, 1
      %s272 = smul.addr %s271, 4
      %s273 = scalar_lea.vmem %s7, %s272
      %v275 = vld [vmem:[%s269] sm:$0x7]
      %v276 = vld [vmem:[%s1] sm:$0xf]
      %v277 = vld [vmem:[%s1 + $0x4] sm:$0xf]
      %v278 = vld [vmem:[%s1 + $0x8] sm:$0xf]
      %v279 = vld [vmem:[%s1 + $0xc] sm:$0xf]
      %v280 = vld [vmem:[%s2] sm:$0x1]
      %v282 = vlaneseq
      %v283 = vshrl.u32 %v282, 7
      %v284 = vsub.s32 0, %v283
      %v285 = vrot.slane %v280, %v284
      %v291 = vunpack.c.l.b16 %v276
      %v292 = vunpack.c.l.b16 %v277
      %v293 = vunpack.c.l.b16 %v278
      %v294 = vunpack.c.l.b16 %v279
      %v295 = vpack.c.b16 %v292, %v291
      %v296 = vpack.c.b16 %v294, %v293
      %vm299 = vcmask 261120
      %v301 = vsel %vm299, %v275, 0
      %303 = vmatprep.subr.bf16.mxu0 0
      %304 = vmatpush1.bf16.msra.mxu0 0
      %305 = vmatprep.subr.bf16.mxu0 0
      %306 = vmatpush1.bf16.msra.mxu0 0
      %307 = vmatprep.subr.bf16.mxu0 0
      %308 = vmatpush1.bf16.msra.mxu0 0
      %309 = vmatprep.subr.bf16.mxu0 0
      %310 = vmatpush1.bf16.msra.mxu0 0
      %311 = vmatprep.subr.bf16.mxu0 0
      %312 = vmatpush1.bf16.msra.mxu0 0
      %313 = vmatprep.subr.bf16.mxu0 0
      %314 = vmatpush1.bf16.msra.mxu0 0
      %315 = vmatprep.subr.bf16.mxu0 0
      %316 = vmatpush1.bf16.msra.mxu0 %v296
      %317 = vmatprep.subr.bf16.mxu0 0
      %318 = vmatpush1.bf16.msra.mxu0 %v295
      %319 = vmatprep.subr.bf16.mxu0 0
      %320 = vmatpush2.bf16.msra.mxu0 0
      %321 = vmatprep.subr.bf16.mxu0 0
      %322 = vmatpush2.bf16.msra.mxu0 0
      %323 = vmatprep.subr.bf16.mxu0 0
      %324 = vmatpush2.bf16.msra.mxu0 0
      %325 = vmatprep.subr.bf16.mxu0 0
      %326 = vmatpush2.bf16.msra.mxu0 0
      %327 = vmatprep.subr.bf16.mxu0 0
      %328 = vmatpush2.bf16.msra.mxu0 0
      %329 = vmatprep.subr.bf16.mxu0 0
      %330 = vmatpush2.bf16.msra.mxu0 0
      %331 = vmatprep.subr.bf16.mxu0 0
      %332 = vmatpush2.bf16.msra.mxu0 0
      %333 = vmatprep.subr.bf16.mxu0 0
      %334 = vmatpush2.bf16.msra.mxu0 0
      %335 = vmatprep.mubr.bf16.mxu0 0
      %336 = vmatmul.mubr.bf16.gmra.mxu0 %v301
      %v337 = vpop.f32.mrf.mxu0
      %v338 = vadd.f32 %v285, %v337
      %v339 = vpop.f32.mrf.mxu0
      %v340 = vpop.f32.mrf.mxu0
      %v341 = vpop.f32.mrf.mxu0
      %342 = vdwg.mxu0
      %v343 = vmul.f32 %v338, 0.35355338
      %v344 = vpack.c.bf16 %v343, %v343
      %v345 = vpack.c.bf16 %v338, %v338
      %347 = vrot.lane.b32.xlu0 %v345, 96
      %v348 = vpop.permute.xlu0 %347
      %vm349 = vcmask 64512
      %v351 = vsel %vm349, %v344, 0
      %v354 = vsel %vm349, %v348, 0
      %356 = vmatprep.subr.bf16.mxu0 0
      %357 = vmatpush1.bf16.xpose.msra.mxu0 0
      %358 = vmatprep.subr.bf16.mxu0 0
      %359 = vmatpush1.bf16.xpose.msra.mxu0 0
      %360 = vmatprep.subr.bf16.mxu0 0
      %361 = vmatpush1.bf16.xpose.msra.mxu0 0
      %362 = vmatprep.subr.bf16.mxu0 0
      %363 = vmatpush1.bf16.xpose.msra.mxu0 0
      %364 = vmatprep.subr.bf16.mxu0 0
      %365 = vmatpush1.bf16.xpose.msra.mxu0 0
      %366 = vmatprep.subr.bf16.mxu0 0
      %367 = vmatpush1.bf16.xpose.msra.mxu0 0
      %368 = vmatprep.subr.bf16.mxu0 0
      %369 = vmatpush1.bf16.xpose.msra.mxu0 0
      %370 = vmatprep.subr.bf16.mxu0 0
      %371 = vmatpush1.bf16.xpose.msra.mxu0 %v354
      %372 = vmatprep.subr.bf16.mxu0 0
      %373 = vmatpush2.bf16.xpose.msra.mxu0 0
      %374 = vmatprep.subr.bf16.mxu0 0
      %375 = vmatpush2.bf16.xpose.msra.mxu0 0
      %376 = vmatprep.subr.bf16.mxu0 0
      %377 = vmatpush2.bf16.xpose.msra.mxu0 0
      %378 = vmatprep.subr.bf16.mxu0 0
      %379 = vmatpush2.bf16.xpose.msra.mxu0 0
      %380 = vmatprep.subr.bf16.mxu0 0
      %381 = vmatpush2.bf16.xpose.msra.mxu0 0
      %382 = vmatprep.subr.bf16.mxu0 0
      %383 = vmatpush2.bf16.xpose.msra.mxu0 0
      %384 = vmatprep.subr.bf16.mxu0 0
      %385 = vmatpush2.bf16.xpose.msra.mxu0 0
      %386 = vmatprep.subr.bf16.mxu0 0
      %387 = vmatpush2.bf16.xpose.msra.mxu0 0
      %388 = vmatprep.mubr.bf16.mxu0 0
      %389 = vmatmul.mubr.bf16.gmra.mxu0 %v351
      %v390 = vpop.f32.mrf.mxu0
      %v391 = vadd.f32 0.0, %v390
      %v392 = vpop.f32.mrf.mxu0
      %v393 = vpop.f32.mrf.mxu0
      %v394 = vpop.f32.mrf.mxu0
      %395 = vdwg.mxu0
      %vm396 = vcmask 46080
      %v397 = vsel %vm396, %v391, -inf
      %398 = vmax.xlane.f32.xlu0 %v397
      %v399 = vpop.xlane.xlu0 %398
      %v400 = vsub.f32 %v391, %v399
      %v401 = vmul.f32 %v400, 1.442695
      %v402 = vpow.pop %v401
      %v403 = vsel %vm396, %v402, 0.0
      %404 = vadd.xlane.f32.xlu0 %v403
      %v405 = vpop.xlane.xlu0 %404
      %v406 = vrcp.pop %v405
      %v407 = vmul.f32 %v402, %v406
      %v408 = vpack.c.bf16 %v407, %v407
      %409 = vrot.lane.b32.xlu0 %v345, 64
      %v410 = vpop.permute.xlu0 %409
      %vm411 = vcmask 48128
      %v413 = vsel %vm411, %v408, 0
      %vm415 = vcmask 1042432
      %v417 = vsel %vm415, %v410, 0
      %419 = vmatprep.subr.bf16.mxu0 0
      %420 = vmatpush1.bf16.msra.mxu0 0
      %421 = vmatprep.subr.bf16.mxu0 0
      %422 = vmatpush1.bf16.msra.mxu0 0
      %423 = vmatprep.subr.bf16.mxu0 0
      %424 = vmatpush1.bf16.msra.mxu0 0
      %425 = vmatprep.subr.bf16.mxu0 0
      %426 = vmatpush1.bf16.msra.mxu0 0
      %427 = vmatprep.subr.bf16.mxu0 0
      %428 = vmatpush1.bf16.msra.mxu0 0
      %429 = vmatprep.subr.bf16.mxu0 0
      %430 = vmatpush1.bf16.msra.mxu0 0
      %431 = vmatprep.subr.bf16.mxu0 0
      %432 = vmatpush1.bf16.msra.mxu0 0
      %433 = vmatprep.subr.bf16.mxu0 0
      %434 = vmatpush1.bf16.msra.mxu0 %v417
      %435 = vmatprep.subr.bf16.mxu0 0
      %436 = vmatpush2.bf16.msra.mxu0 0
      %437 = vmatprep.subr.bf16.mxu0 0
      %438 = vmatpush2.bf16.msra.mxu0 0
      %439 = vmatprep.subr.bf16.mxu0 0
      %440 = vmatpush2.bf16.msra.mxu0 0
      %441 = vmatprep.subr.bf16.mxu0 0
      %442 = vmatpush2.bf16.msra.mxu0 0
      %443 = vmatprep.subr.bf16.mxu0 0
      %444 = vmatpush2.bf16.msra.mxu0 0
      %445 = vmatprep.subr.bf16.mxu0 0
      %446 = vmatpush2.bf16.msra.mxu0 0
      %447 = vmatprep.subr.bf16.mxu0 0
      %448 = vmatpush2.bf16.msra.mxu0 0
      %449 = vmatprep.subr.bf16.mxu0 0
      %450 = vmatpush2.bf16.msra.mxu0 0
      %451 = vmatprep.mubr.bf16.mxu0 0
      %452 = vmatmul.mubr.bf16.gmra.mxu0 %v413
      %v453 = vpop.f32.mrf.mxu0
      %v454 = vadd.f32 0.0, %v453
      %v455 = vpop.f32.mrf.mxu0
      %v456 = vpop.f32.mrf.mxu0
      %v457 = vpop.f32.mrf.mxu0
      %458 = vdwg.mxu0
      %v459 = vpack.c.bf16 %v454, %v454
      %vm460 = vcmask 59392
      %461 = vst.msk [vmem:[#allocation2] sm:$0x7] %vm460, %v459
      %463 = vrot.lane.b32.xlu0 %v344, 120
      %v464 = vpop.permute.xlu0 %463
      %465 = vrot.lane.b32.xlu0 %v345, 88
      %v466 = vpop.permute.xlu0 %465
      %v468 = vsel %vm349, %v464, 0
      %v471 = vsel %vm349, %v466, 0
      %473 = vmatprep.subr.bf16.mxu0 0
      %474 = vmatpush1.bf16.xpose.msra.mxu0 0
      %475 = vmatprep.subr.bf16.mxu0 0
      %476 = vmatpush1.bf16.xpose.msra.mxu0 0
      %477 = vmatprep.subr.bf16.mxu0 0
      %478 = vmatpush1.bf16.xpose.msra.mxu0 0
      %479 = vmatprep.subr.bf16.mxu0 0
      %480 = vmatpush1.bf16.xpose.msra.mxu0 0
      %481 = vmatprep.subr.bf16.mxu0 0
      %482 = vmatpush1.bf16.xpose.msra.mxu0 0
      %483 = vmatprep.subr.bf16.mxu0 0
      %484 = vmatpush1.bf16.xpose.msra.mxu0 0
      %485 = vmatprep.subr.bf16.mxu0 0
      %486 = vmatpush1.bf16.xpose.msra.mxu0 0
      %487 = vmatprep.subr.bf16.mxu0 0
      %488 = vmatpush1.bf16.xpose.msra.mxu0 %v471
      %489 = vmatprep.subr.bf16.mxu0 0
      %490 = vmatpush2.bf16.xpose.msra.mxu0 0
      %491 = vmatprep.subr.bf16.mxu0 0
      %492 = vmatpush2.bf16.xpose.msra.mxu0 0
      %493 = vmatprep.subr.bf16.mxu0 0
      %494 = vmatpush2.bf16.xpose.msra.mxu0 0
      %495 = vmatprep.subr.bf16.mxu0 0
      %496 = vmatpush2.bf16.xpose.msra.mxu0 0
      %497 = vmatprep.subr.bf16.mxu0 0
      %498 = vmatpush2.bf16.xpose.msra.mxu0 0
      %499 = vmatprep.subr.bf16.mxu0 0
      %500 = vmatpush2.bf16.xpose.msra.mxu0 0
      %501 = vmatprep.subr.bf16.mxu0 0
      %502 = vmatpush2.bf16.xpose.msra.mxu0 0
      %503 = vmatprep.subr.bf16.mxu0 0
      %504 = vmatpush2.bf16.xpose.msra.mxu0 0
      %505 = vmatprep.mubr.bf16.mxu0 0
      %506 = vmatmul.mubr.bf16.gmra.mxu0 %v468
      %v507 = vpop.f32.mrf.mxu0
      %v508 = vadd.f32 0.0, %v507
      %v509 = vpop.f32.mrf.mxu0
      %v510 = vpop.f32.mrf.mxu0
      %v511 = vpop.f32.mrf.mxu0
      %512 = vdwg.mxu0
      %v513 = vsel %vm396, %v508, -inf
      %514 = vmax.xlane.f32.xlu0 %v513
      %v515 = vpop.xlane.xlu0 %514
      %v516 = vsub.f32 %v508, %v515
      %v517 = vmul.f32 %v516, 1.442695
      %v518 = vpow.pop %v517
      %v519 = vsel %vm396, %v518, 0.0
      %520 = vadd.xlane.f32.xlu0 %v519
      %v521 = vpop.xlane.xlu0 %520
      %v522 = vrcp.pop %v521
      %v523 = vmul.f32 %v518, %v522
      %v524 = vpack.c.bf16 %v523, %v523
      %525 = vrot.lane.b32.xlu0 %v345, 56
      %v526 = vpop.permute.xlu0 %525
      %v528 = vsel %vm411, %v524, 0
      %v531 = vsel %vm415, %v526, 0
      %533 = vmatprep.subr.bf16.mxu0 0
      %534 = vmatpush1.bf16.msra.mxu0 0
      %535 = vmatprep.subr.bf16.mxu0 0
      %536 = vmatpush1.bf16.msra.mxu0 0
      %537 = vmatprep.subr.bf16.mxu0 0
      %538 = vmatpush1.bf16.msra.mxu0 0
      %539 = vmatprep.subr.bf16.mxu0 0
      %540 = vmatpush1.bf16.msra.mxu0 0
      %541 = vmatprep.subr.bf16.mxu0 0
      %542 = vmatpush1.bf16.msra.mxu0 0
      %543 = vmatprep.subr.bf16.mxu0 0
      %544 = vmatpush1.bf16.msra.mxu0 0
      %545 = vmatprep.subr.bf16.mxu0 0
      %546 = vmatpush1.bf16.msra.mxu0 0
      %547 = vmatprep.subr.bf16.mxu0 0
      %548 = vmatpush1.bf16.msra.mxu0 %v531
      %549 = vmatprep.subr.bf16.mxu0 0
      %550 = vmatpush2.bf16.msra.mxu0 0
      %551 = vmatprep.subr.bf16.mxu0 0
      %552 = vmatpush2.bf16.msra.mxu0 0
      %553 = vmatprep.subr.bf16.mxu0 0
      %554 = vmatpush2.bf16.msra.mxu0 0
      %555 = vmatprep.subr.bf16.mxu0 0
      %556 = vmatpush2.bf16.msra.mxu0 0
      %557 = vmatprep.subr.bf16.mxu0 0
      %558 = vmatpush2.bf16.msra.mxu0 0
      %559 = vmatprep.subr.bf16.mxu0 0
      %560 = vmatpush2.bf16.msra.mxu0 0
      %561 = vmatprep.subr.bf16.mxu0 0
      %562 = vmatpush2.bf16.msra.mxu0 0
      %563 = vmatprep.subr.bf16.mxu0 0
      %564 = vmatpush2.bf16.msra.mxu0 0
      %565 = vmatprep.mubr.bf16.mxu0 0
      %566 = vmatmul.mubr.bf16.gmra.mxu0 %v528
      %v567 = vpop.f32.mrf.mxu0
      %v568 = vadd.f32 0.0, %v567
      %v569 = vpop.f32.mrf.mxu0
      %v570 = vpop.f32.mrf.mxu0
      %v571 = vpop.f32.mrf.mxu0
      %572 = vdwg.mxu0
      %v573 = vpack.c.bf16 %v568, %v568
      %v575 = vunpack.c.l.b16 %v573
      %v576 = vpack.c.b16 %v575, %v575
      %577 = vrot.lane.b32.xlu0 %v576, 8
      %v578 = vpop.permute.xlu0 %577
      %vm580 = vcmask 124992
      %581 = vst.msk [vmem:[#allocation2] sm:$0x7] %vm580, %v578
      %582 = vrot.lane.b32.xlu0 %v344, 112
      %v583 = vpop.permute.xlu0 %582
      %584 = vrot.lane.b32.xlu0 %v345, 80
      %v585 = vpop.permute.xlu0 %584
      %v587 = vsel %vm349, %v583, 0
      %v590 = vsel %vm349, %v585, 0
      %592 = vmatprep.subr.bf16.mxu0 0
      %593 = vmatpush1.bf16.xpose.msra.mxu0 0
      %594 = vmatprep.subr.bf16.mxu0 0
      %595 = vmatpush1.bf16.xpose.msra.mxu0 0
      %596 = vmatprep.subr.bf16.mxu0 0
      %597 = vmatpush1.bf16.xpose.msra.mxu0 0
      %598 = vmatprep.subr.bf16.mxu0 0
      %599 = vmatpush1.bf16.xpose.msra.mxu0 0
      %600 = vmatprep.subr.bf16.mxu0 0
      %601 = vmatpush1.bf16.xpose.msra.mxu0 0
      %602 = vmatprep.subr.bf16.mxu0 0
      %603 = vmatpush1.bf16.xpose.msra.mxu0 0
      %604 = vmatprep.subr.bf16.mxu0 0
      %605 = vmatpush1.bf16.xpose.msra.mxu0 0
      %606 = vmatprep.subr.bf16.mxu0 0
      %607 = vmatpush1.bf16.xpose.msra.mxu0 %v590
      %608 = vmatprep.subr.bf16.mxu0 0
      %609 = vmatpush2.bf16.xpose.msra.mxu0 0
      %610 = vmatprep.subr.bf16.mxu0 0
      %611 = vmatpush2.bf16.xpose.msra.mxu0 0
      %612 = vmatprep.subr.bf16.mxu0 0
      %613 = vmatpush2.bf16.xpose.msra.mxu0 0
      %614 = vmatprep.subr.bf16.mxu0 0
      %615 = vmatpush2.bf16.xpose.msra.mxu0 0
      %616 = vmatprep.subr.bf16.mxu0 0
      %617 = vmatpush2.bf16.xpose.msra.mxu0 0
      %618 = vmatprep.subr.bf16.mxu0 0
      %619 = vmatpush2.bf16.xpose.msra.mxu0 0
      %620 = vmatprep.subr.bf16.mxu0 0
      %621 = vmatpush2.bf16.xpose.msra.mxu0 0
      %622 = vmatprep.subr.bf16.mxu0 0
      %623 = vmatpush2.bf16.xpose.msra.mxu0 0
      %624 = vmatprep.mubr.bf16.mxu0 0
      %625 = vmatmul.mubr.bf16.gmra.mxu0 %v587
      %v626 = vpop.f32.mrf.mxu0
      %v627 = vadd.f32 0.0, %v626
      %v628 = vpop.f32.mrf.mxu0
      %v629 = vpop.f32.mrf.mxu0
      %v630 = vpop.f32.mrf.mxu0
      %631 = vdwg.mxu0
      %v632 = vsel %vm396, %v627, -inf
      %633 = vmax.xlane.f32.xlu0 %v632
      %v634 = vpop.xlane.xlu0 %633
      %v635 = vsub.f32 %v627, %v634
      %v636 = vmul.f32 %v635, 1.442695
      %v637 = vpow.pop %v636
      %v638 = vsel %vm396, %v637, 0.0
      %639 = vadd.xlane.f32.xlu0 %v638
      %v640 = vpop.xlane.xlu0 %639
      %v641 = vrcp.pop %v640
      %v642 = vmul.f32 %v637, %v641
      %v643 = vpack.c.bf16 %v642, %v642
      %644 = vrot.lane.b32.xlu0 %v345, 48
      %v645 = vpop.permute.xlu0 %644
      %v647 = vsel %vm411, %v643, 0
      %v650 = vsel %vm415, %v645, 0
      %652 = vmatprep.subr.bf16.mxu0 0
      %653 = vmatpush1.bf16.msra.mxu0 0
      %654 = vmatprep.subr.bf16.mxu0 0
      %655 = vmatpush1.bf16.msra.mxu0 0
      %656 = vmatprep.subr.bf16.mxu0 0
      %657 = vmatpush1.bf16.msra.mxu0 0
      %658 = vmatprep.subr.bf16.mxu0 0
      %659 = vmatpush1.bf16.msra.mxu0 0
      %660 = vmatprep.subr.bf16.mxu0 0
      %661 = vmatpush1.bf16.msra.mxu0 0
      %662 = vmatprep.subr.bf16.mxu0 0
      %663 = vmatpush1.bf16.msra.mxu0 0
      %664 = vmatprep.subr.bf16.mxu0 0
      %665 = vmatpush1.bf16.msra.mxu0 0
      %666 = vmatprep.subr.bf16.mxu0 0
      %667 = vmatpush1.bf16.msra.mxu0 %v650
      %668 = vmatprep.subr.bf16.mxu0 0
      %669 = vmatpush2.bf16.msra.mxu0 0
      %670 = vmatprep.subr.bf16.mxu0 0
      %671 = vmatpush2.bf16.msra.mxu0 0
      %672 = vmatprep.subr.bf16.mxu0 0
      %673 = vmatpush2.bf16.msra.mxu0 0
      %674 = vmatprep.subr.bf16.mxu0 0
      %675 = vmatpush2.bf16.msra.mxu0 0
      %676 = vmatprep.subr.bf16.mxu0 0
      %677 = vmatpush2.bf16.msra.mxu0 0
      %678 = vmatprep.subr.bf16.mxu0 0
      %679 = vmatpush2.bf16.msra.mxu0 0
      %680 = vmatprep.subr.bf16.mxu0 0
      %681 = vmatpush2.bf16.msra.mxu0 0
      %682 = vmatprep.subr.bf16.mxu0 0
      %683 = vmatpush2.bf16.msra.mxu0 0
      %684 = vmatprep.mubr.bf16.mxu0 0
      %685 = vmatmul.mubr.bf16.gmra.mxu0 %v647
      %v686 = vpop.f32.mrf.mxu0
      %v687 = vadd.f32 0.0, %v686
      %v688 = vpop.f32.mrf.mxu0
      %v689 = vpop.f32.mrf.mxu0
      %v690 = vpop.f32.mrf.mxu0
      %691 = vdwg.mxu0
      %v692 = vpack.c.bf16 %v687, %v687
      %v694 = vunpack.c.l.b16 %v692
      %v695 = vpack.c.b16 %v694, %v694
      %696 = vrot.lane.b32.xlu0 %v695, 16
      %v697 = vpop.permute.xlu0 %696
      %vm699 = vcmask 190592
      %700 = vst.msk [vmem:[#allocation2] sm:$0x7] %vm699, %v697
      %701 = vrot.lane.b32.xlu0 %v344, 104
      %v702 = vpop.permute.xlu0 %701
      %703 = vrot.lane.b32.xlu0 %v345, 72
      %v704 = vpop.permute.xlu0 %703
      %v706 = vsel %vm349, %v702, 0
      %v709 = vsel %vm349, %v704, 0
      %711 = vmatprep.subr.bf16.mxu0 0
      %712 = vmatpush1.bf16.xpose.msra.mxu0 0
      %713 = vmatprep.subr.bf16.mxu0 0
      %714 = vmatpush1.bf16.xpose.msra.mxu0 0
      %715 = vmatprep.subr.bf16.mxu0 0
      %716 = vmatpush1.bf16.xpose.msra.mxu0 0
      %717 = vmatprep.subr.bf16.mxu0 0
      %718 = vmatpush1.bf16.xpose.msra.mxu0 0
      %719 = vmatprep.subr.bf16.mxu0 0
      %720 = vmatpush1.bf16.xpose.msra.mxu0 0
      %721 = vmatprep.subr.bf16.mxu0 0
      %722 = vmatpush1.bf16.xpose.msra.mxu0 0
      %723 = vmatprep.subr.bf16.mxu0 0
      %724 = vmatpush1.bf16.xpose.msra.mxu0 0
      %725 = vmatprep.subr.bf16.mxu0 0
      %726 = vmatpush1.bf16.xpose.msra.mxu0 %v709
      %727 = vmatprep.subr.bf16.mxu0 0
      %728 = vmatpush2.bf16.xpose.msra.mxu0 0
      %729 = vmatprep.subr.bf16.mxu0 0
      %730 = vmatpush2.bf16.xpose.msra.mxu0 0
      %731 = vmatprep.subr.bf16.mxu0 0
      %732 = vmatpush2.bf16.xpose.msra.mxu0 0
      %733 = vmatprep.subr.bf16.mxu0 0
      %734 = vmatpush2.bf16.xpose.msra.mxu0 0
      %735 = vmatprep.subr.bf16.mxu0 0
      %736 = vmatpush2.bf16.xpose.msra.mxu0 0
      %737 = vmatprep.subr.bf16.mxu0 0
      %738 = vmatpush2.bf16.xpose.msra.mxu0 0
      %739 = vmatprep.subr.bf16.mxu0 0
      %740 = vmatpush2.bf16.xpose.msra.mxu0 0
      %741 = vmatprep.subr.bf16.mxu0 0
      %742 = vmatpush2.bf16.xpose.msra.mxu0 0
      %743 = vmatprep.mubr.bf16.mxu0 0
      %744 = vmatmul.mubr.bf16.gmra.mxu0 %v706
      %v745 = vpop.f32.mrf.mxu0
      %v746 = vadd.f32 0.0, %v745
      %v747 = vpop.f32.mrf.mxu0
      %v748 = vpop.f32.mrf.mxu0
      %v749 = vpop.f32.mrf.mxu0
      %750 = vdwg.mxu0
      %v751 = vsel %vm396, %v746, -inf
      %752 = vmax.xlane.f32.xlu0 %v751
      %v753 = vpop.xlane.xlu0 %752
      %v754 = vsub.f32 %v746, %v753
      %v755 = vmul.f32 %v754, 1.442695
      %v756 = vpow.pop %v755
      %v757 = vsel %vm396, %v756, 0.0
      %758 = vadd.xlane.f32.xlu0 %v757
      %v759 = vpop.xlane.xlu0 %758
      %v760 = vrcp.pop %v759
      %v761 = vmul.f32 %v756, %v760
      %v762 = vpack.c.bf16 %v761, %v761
      %763 = vrot.lane.b32.xlu0 %v345, 40
      %v764 = vpop.permute.xlu0 %763
      %v766 = vsel %vm411, %v762, 0
      %v769 = vsel %vm415, %v764, 0
      %771 = vmatprep.subr.bf16.mxu0 0
      %772 = vmatpush1.bf16.msra.mxu0 0
      %773 = vmatprep.subr.bf16.mxu0 0
      %774 = vmatpush1.bf16.msra.mxu0 0
      %775 = vmatprep.subr.bf16.mxu0 0
      %776 = vmatpush1.bf16.msra.mxu0 0
      %777 = vmatprep.subr.bf16.mxu0 0
      %778 = vmatpush1.bf16.msra.mxu0 0
      %779 = vmatprep.subr.bf16.mxu0 0
      %780 = vmatpush1.bf16.msra.mxu0 0
      %781 = vmatprep.subr.bf16.mxu0 0
      %782 = vmatpush1.bf16.msra.mxu0 0
      %783 = vmatprep.subr.bf16.mxu0 0
      %784 = vmatpush1.bf16.msra.mxu0 0
      %785 = vmatprep.subr.bf16.mxu0 0
      %786 = vmatpush1.bf16.msra.mxu0 %v769
      %787 = vmatprep.subr.bf16.mxu0 0
      %788 = vmatpush2.bf16.msra.mxu0 0
      %789 = vmatprep.subr.bf16.mxu0 0
      %790 = vmatpush2.bf16.msra.mxu0 0
      %791 = vmatprep.subr.bf16.mxu0 0
      %792 = vmatpush2.bf16.msra.mxu0 0
      %793 = vmatprep.subr.bf16.mxu0 0
      %794 = vmatpush2.bf16.msra.mxu0 0
      %795 = vmatprep.subr.bf16.mxu0 0
      %796 = vmatpush2.bf16.msra.mxu0 0
      %797 = vmatprep.subr.bf16.mxu0 0
      %798 = vmatpush2.bf16.msra.mxu0 0
      %799 = vmatprep.subr.bf16.mxu0 0
      %800 = vmatpush2.bf16.msra.mxu0 0
      %801 = vmatprep.subr.bf16.mxu0 0
      %802 = vmatpush2.bf16.msra.mxu0 0
      %803 = vmatprep.mubr.bf16.mxu0 0
      %804 = vmatmul.mubr.bf16.gmra.mxu0 %v766
      %v805 = vpop.f32.mrf.mxu0
      %v806 = vadd.f32 0.0, %v805
      %v807 = vpop.f32.mrf.mxu0
      %v808 = vpop.f32.mrf.mxu0
      %v809 = vpop.f32.mrf.mxu0
      %810 = vdwg.mxu0
      %v811 = vpack.c.bf16 %v806, %v806
      %v813 = vunpack.c.l.b16 %v811
      %v814 = vpack.c.b16 %v813, %v813
      %815 = vrot.lane.b32.xlu0 %v814, 24
      %v816 = vpop.permute.xlu0 %815
      %vm818 = vcmask 256192
      %819 = vst.msk [vmem:[#allocation2] sm:$0x7] %vm818, %v816
      %v820 = vld [vmem:[#allocation2] sm:$0x7]
      %v821 = vld [vmem:[%s3] sm:$0xf]
      %v822 = vld [vmem:[%s3 + $0x4] sm:$0xf]
      %v823 = vld [vmem:[%s3 + $0x8] sm:$0xf]
      %v824 = vld [vmem:[%s3 + $0xc] sm:$0xf]
      %v825 = vld [vmem:[%s4] sm:$0x1]
      %v827 = vlaneseq
      %v828 = vshrl.u32 %v827, 7
      %v829 = vsub.s32 0, %v828
      %v830 = vrot.slane %v825, %v829
      %v836 = vunpack.c.l.b16 %v821
      %v837 = vunpack.c.l.b16 %v822
      %v838 = vunpack.c.l.b16 %v823
      %v839 = vunpack.c.l.b16 %v824
      %v840 = vpack.c.b16 %v837, %v836
      %v841 = vpack.c.b16 %v839, %v838
      %v845 = vsel %vm299, %v820, 0
      %847 = vmatprep.subr.bf16.mxu0 0
      %848 = vmatpush1.bf16.msra.mxu0 0
      %849 = vmatprep.subr.bf16.mxu0 0
      %850 = vmatpush1.bf16.msra.mxu0 0
      %851 = vmatprep.subr.bf16.mxu0 0
      %852 = vmatpush1.bf16.msra.mxu0 0
      %853 = vmatprep.subr.bf16.mxu0 0
      %854 = vmatpush1.bf16.msra.mxu0 0
      %855 = vmatprep.subr.bf16.mxu0 0
      %856 = vmatpush1.bf16.msra.mxu0 0
      %857 = vmatprep.subr.bf16.mxu0 0
      %858 = vmatpush1.bf16.msra.mxu0 0
      %859 = vmatprep.subr.bf16.mxu0 0
      %860 = vmatpush1.bf16.msra.mxu0 %v841
      %861 = vmatprep.subr.bf16.mxu0 0
      %862 = vmatpush1.bf16.msra.mxu0 %v840
      %863 = vmatprep.subr.bf16.mxu0 0
      %864 = vmatpush2.bf16.msra.mxu0 0
      %865 = vmatprep.subr.bf16.mxu0 0
      %866 = vmatpush2.bf16.msra.mxu0 0
      %867 = vmatprep.subr.bf16.mxu0 0
      %868 = vmatpush2.bf16.msra.mxu0 0
      %869 = vmatprep.subr.bf16.mxu0 0
      %870 = vmatpush2.bf16.msra.mxu0 0
      %871 = vmatprep.subr.bf16.mxu0 0
      %872 = vmatpush2.bf16.msra.mxu0 0
      %873 = vmatprep.subr.bf16.mxu0 0
      %874 = vmatpush2.bf16.msra.mxu0 0
      %875 = vmatprep.subr.bf16.mxu0 0
      %876 = vmatpush2.bf16.msra.mxu0 0
      %877 = vmatprep.subr.bf16.mxu0 0
      %878 = vmatpush2.bf16.msra.mxu0 0
      %879 = vmatprep.mubr.bf16.mxu0 0
      %880 = vmatmul.mubr.bf16.gmra.mxu0 %v845
      %v881 = vpop.f32.mrf.mxu0
      %v882 = vadd.f32 %v830, %v881
      %v883 = vpop.f32.mrf.mxu0
      %v884 = vpop.f32.mrf.mxu0
      %v885 = vpop.f32.mrf.mxu0
      %886 = vdwg.mxu0
      %v887 = vunpack.c.l.bf16 %v275
      %v888 = vadd.f32 %v882, %v887
      %v889 = vld [vmem:[%s5] sm:$0x1]
      %v890 = vld [vmem:[%s6] sm:$0x1]
      %vm891 = vcmask 259072
      %v892 = vsel %vm891, %v888, 0.0
      %893 = vadd.xlane.f32.xlu0 %v892
      %v894 = vpop.xlane.xlu0 %893
      %v895 = vrcp.pop 32.0
      %v896 = vmul.f32 %v894, %v895
      %v897 = vsub.f32 %v888, %v896
      %v898 = vmul.f32 %v897, %v897
      %v899 = vsel %vm891, %v898, 0.0
      %900 = vadd.xlane.f32.xlu0 %v899
      %v901 = vpop.xlane.xlu0 %900
      %v902 = vmul.f32 %v901, %v895
      %v903 = vadd.f32 %v902, 1e-05
      %v904 = vrsqrt.pop %v903
      %v905 = vmul.f32 %v897, %v904
      %v907 = vlaneseq
      %v908 = vshrl.u32 %v907, 7
      %v909 = vsub.s32 0, %v908
      %v910 = vrot.slane %v889, %v909
      %v912 = vmul.f32 %v905, %v910
      %v914 = vlaneseq
      %v915 = vshrl.u32 %v914, 7
      %v916 = vsub.s32 0, %v915
      %v917 = vrot.slane %v890, %v916
      %v919 = vadd.f32 %v912, %v917
      %v920 = vpack.c.bf16 %v919, %v919
      %vm921 = vcmask 256000
      %922 = vst.msk [vmem:[%s273] sm:$0x7] %vm921, %v920
      %p923 = scmp.lt.s32.totalorder %s18, 1
      %s924 = scalar_select %p923, %s18, 1
      %s925 = smul.addr %s924, 4
      %s926 = scalar_lea.vmem %s7, %s925
      // Predicated region
      $region49: #{_lambda_.11} parent=47 // pred_check
        %p927 = pneg %p188
      $region50: #{_lambda_.11} parent=47 // pred_check_branch
        %929 = sbr.rel (%p927) target = $region52
      $region51: #{_lambda_.11} parent=47 // pred_region
        _
      $region52: #{_lambda_.11} parent=47 // pred_fallthru
        _
    $region48: #{_lambda_.11} parent=5 // pred_fallthru
      _
    %p930 = scmp.le.s32.totalorder 2, %s13
    // Predicated region
    $region53: #{_lambda_.11} parent=5 // pred_check
      %p931 = pneg %p930
    $region54: #{_lambda_.11} parent=5 // pred_check_branch
      %933 = sbr.rel (%p931) target = $region56
    $region55: #{_lambda_.11} parent=5 // pred_region
      %s934 = ssub.s32 %s13, 2
      // Predicated region
      $region57: #{_lambda_.11} parent=55 // pred_check
        %p935 = pneg %p194
      $region58: #{_lambda_.11} parent=55 // pred_check_branch
        %937 = sbr.rel (%p935) target = $region60
      $region59: #{_lambda_.11} parent=55 // pred_region
        %p938 = scmp.lt.s32.totalorder %s19, 1
        %s939 = scalar_select %p938, %s19, 1
        %s940 = smul.addr %s939, 4
        %s941 = scalar_lea.vmem %s7, %s940
      $region60: #{_lambda_.11} parent=55 // pred_fallthru
        _
    $region56: #{_lambda_.11} parent=5 // pred_fallthru
      _
  $region6: #{_lambda_.11} parent=0 // loop_footer
    %s17 = sadd.s32 1, %s13
  $region7: #{_lambda_.11} parent=0 // loop_footer_branch
    %12 = sbr.rel target = $region3
  $region8: #{_lambda_.11} parent=0 // loop_exit
    _

// kernel: _lambda_.13
$region0: #{_lambda_.13}
  #allocation0 [shape = 'u32[]', space=smem, size = 0x4, offset = 0x4, fixed_abs, tag = 'smem constant byte address 0x4 - core index']
  #allocation1 [shape = 'u32[144,128]{1,0:T(1,128)}', space=vmem, size = 0x12000, scoped, tag = 'internal scratch']
  %s0 = inlined_call_operand.vmem [shape: bf16[2,6,32], index: 0, kind: input, shape index: {}]
  %s1 = inlined_call_operand.vmem [shape: bf16[2,8,32], index: 1, kind: input, shape index: {}]
  %s2 = inlined_call_operand.vmem [shape: bf16[96,32], index: 2, kind: input, shape index: {}]
  %s3 = inlined_call_operand.vmem [shape: f32[1,32], index: 3, kind: input, shape index: {}]
  %s4 = inlined_call_operand.vmem [shape: f32[1,32], index: 4, kind: input, shape index: {}]
  %s5 = inlined_call_operand.vmem [shape: f32[1,32], index: 5, kind: input, shape index: {}]
  %s6 = inlined_call_operand.vmem [shape: bf16[2,8,32], index: 6, kind: output, shape index: {}]
  %s7 = sld [smem:[#allocation0]]
  $region57: #{_lambda_.13} parent=0
    _
  %s9 = ssub.s32 1, %s7
  %s10 = scalar_select 0, %s9, %s7
  loop: start=0, step=1, limit=4
  $region2: #{_lambda_.13} parent=0 // loop_pre_header
    _
  $region3: #{_lambda_.13} parent=0 // loop_header
    %s12 = sphi 0, %s16
    %p13 = scmp.ge.s32.totalorder %s12, 4
    %s22 = sphi 0, %s24
    %s25 = sphi 0, %s22
    %s26 = sphi 0, %s25
    %s42 = sphi 0, %s26
    %s48 = sphi 0, %s50
    %s51 = sphi 0, %s48
    %s52 = sphi 0, %s51
    %s68 = sphi 0, %s52
    %s72 = sphi 0, %s72
    %s74 = sphi 0, %s72
    %s75 = sphi 0, %s74
    %s89 = sphi 0, %s75
    %s93 = sphi 0, %s93
    %s95 = sphi 0, %s93
    %s96 = sphi 0, %s95
    %s110 = sphi 0, %s96
    %s114 = sphi 0, %s114
    %s116 = sphi 0, %s114
    %s117 = sphi 0, %s116
    %s131 = sphi 0, %s117
    %s135 = sphi 0, %s135
    %s137 = sphi 0, %s135
    %s138 = sphi 0, %s137
    %s152 = sphi 0, %s138
    %s158 = sphi 0, %s160
    %s161 = sphi 0, %s158
    %s162 = sphi 0, %s161
    %s178 = sphi 0, %s162
  $region4: #{_lambda_.13} parent=0 // loop_header_branch
    %15 = sbr.rel (%p13) target = $region8
  $region5: #{_lambda_.13} parent=0 // loop_body
    %s17 = ssub.s32 %s12, 1
    %s18 = ssub.s32 %s12, 2
    %s19 = sadd.s32 %s12, 1
    %s20 = ssub.s32 %s12, %s19
    %p21 = scmp.eq.s32.totalorder %s20, 0
    %s23 = sadd.s32 %s22, 1
    %s24 = scalar_select %p21, %s22, %s23
    %p27 = pneg %p21
    %p28 = scmp.eq.s32.totalorder %s12, 1
    %p29 = por %p27, %p28
    %p30 = scmp.ne.s32.totalorder %s22, %s25
    %p31 = scmp.eq.s32.totalorder %s12, 0
    %p32 = por %p30, %p31
    %p33 = scmp.ne.s32.totalorder %s22, %s25
    %p34 = scmp.eq.s32.totalorder %s17, 1
    %p35 = por %p33, %p34
    %p36 = scmp.ne.s32.totalorder %s25, %s26
    %p37 = scmp.eq.s32.totalorder %s17, 0
    %p38 = por %p36, %p37
    %p39 = scmp.ne.s32.totalorder %s25, %s26
    %p40 = scmp.eq.s32.totalorder %s18, 1
    %p41 = por %p39, %p40
    %p43 = scmp.ne.s32.totalorder %s26, %s42
    %p44 = scmp.eq.s32.totalorder %s18, 0
    %p45 = por %p43, %p44
    %s46 = ssub.s32 %s12, %s19
    %p47 = scmp.eq.s32.totalorder %s46, 0
    %s49 = sadd.s32 %s48, 1
    %s50 = scalar_select %p47, %s48, %s49
    %p53 = pneg %p47
    %p54 = scmp.eq.s32.totalorder %s12, 1
    %p55 = por %p53, %p54
    %p56 = scmp.ne.s32.totalorder %s48, %s51
    %p57 = scmp.eq.s32.totalorder %s12, 0
    %p58 = por %p56, %p57
    %p59 = scmp.ne.s32.totalorder %s48, %s51
    %p60 = scmp.eq.s32.totalorder %s17, 1
    %p61 = por %p59, %p60
    %p62 = scmp.ne.s32.totalorder %s51, %s52
    %p63 = scmp.eq.s32.totalorder %s17, 0
    %p64 = por %p62, %p63
    %p65 = scmp.ne.s32.totalorder %s51, %s52
    %p66 = scmp.eq.s32.totalorder %s18, 1
    %p67 = por %p65, %p66
    %p69 = scmp.ne.s32.totalorder %s52, %s68
    %p70 = scmp.eq.s32.totalorder %s18, 0
    %p71 = por %p69, %p70
    %s73 = sadd.s32 %s72, 1
    %p76 = scmp.eq.s32.totalorder %s12, 1
    %p77 = scmp.ne.s32.totalorder %s72, %s74
    %p78 = scmp.eq.s32.totalorder %s12, 0
    %p79 = por %p77, %p78
    %p80 = scmp.ne.s32.totalorder %s72, %s74
    %p81 = scmp.eq.s32.totalorder %s17, 1
    %p82 = por %p80, %p81
    %p83 = scmp.ne.s32.totalorder %s74, %s75
    %p84 = scmp.eq.s32.totalorder %s17, 0
    %p85 = por %p83, %p84
    %p86 = scmp.ne.s32.totalorder %s74, %s75
    %p87 = scmp.eq.s32.totalorder %s18, 1
    %p88 = por %p86, %p87
    %p90 = scmp.ne.s32.totalorder %s75, %s89
    %p91 = scmp.eq.s32.totalorder %s18, 0
    %p92 = por %p90, %p91
    %s94 = sadd.s32 %s93, 1
    %p97 = scmp.eq.s32.totalorder %s12, 1
    %p98 = scmp.ne.s32.totalorder %s93, %s95
    %p99 = scmp.eq.s32.totalorder %s12, 0
    %p100 = por %p98, %p99
    %p101 = scmp.ne.s32.totalorder %s93, %s95
    %p102 = scmp.eq.s32.totalorder %s17, 1
    %p103 = por %p101, %p102
    %p104 = scmp.ne.s32.totalorder %s95, %s96
    %p105 = scmp.eq.s32.totalorder %s17, 0
    %p106 = por %p104, %p105
    %p107 = scmp.ne.s32.totalorder %s95, %s96
    %p108 = scmp.eq.s32.totalorder %s18, 1
    %p109 = por %p107, %p108
    %p111 = scmp.ne.s32.totalorder %s96, %s110
    %p112 = scmp.eq.s32.totalorder %s18, 0
    %p113 = por %p111, %p112
    %s115 = sadd.s32 %s114, 1
    %p118 = scmp.eq.s32.totalorder %s12, 1
    %p119 = scmp.ne.s32.totalorder %s114, %s116
    %p120 = scmp.eq.s32.totalorder %s12, 0
    %p121 = por %p119, %p120
    %p122 = scmp.ne.s32.totalorder %s114, %s116
    %p123 = scmp.eq.s32.totalorder %s17, 1
    %p124 = por %p122, %p123
    %p125 = scmp.ne.s32.totalorder %s116, %s117
    %p126 = scmp.eq.s32.totalorder %s17, 0
    %p127 = por %p125, %p126
    %p128 = scmp.ne.s32.totalorder %s116, %s117
    %p129 = scmp.eq.s32.totalorder %s18, 1
    %p130 = por %p128, %p129
    %p132 = scmp.ne.s32.totalorder %s117, %s131
    %p133 = scmp.eq.s32.totalorder %s18, 0
    %p134 = por %p132, %p133
    %s136 = sadd.s32 %s135, 1
    %p139 = scmp.eq.s32.totalorder %s12, 1
    %p140 = scmp.ne.s32.totalorder %s135, %s137
    %p141 = scmp.eq.s32.totalorder %s12, 0
    %p142 = por %p140, %p141
    %p143 = scmp.ne.s32.totalorder %s135, %s137
    %p144 = scmp.eq.s32.totalorder %s17, 1
    %p145 = por %p143, %p144
    %p146 = scmp.ne.s32.totalorder %s137, %s138
    %p147 = scmp.eq.s32.totalorder %s17, 0
    %p148 = por %p146, %p147
    %p149 = scmp.ne.s32.totalorder %s137, %s138
    %p150 = scmp.eq.s32.totalorder %s18, 1
    %p151 = por %p149, %p150
    %p153 = scmp.ne.s32.totalorder %s138, %s152
    %p154 = scmp.eq.s32.totalorder %s18, 0
    %p155 = por %p153, %p154
    %s156 = ssub.s32 %s12, %s19
    %p157 = scmp.eq.s32.totalorder %s156, 0
    %s159 = sadd.s32 %s158, 1
    %s160 = scalar_select %p157, %s158, %s159
    %p163 = pneg %p157
    %p164 = scmp.eq.s32.totalorder %s12, 1
    %p165 = por %p163, %p164
    %p166 = scmp.ne.s32.totalorder %s158, %s161
    %p167 = scmp.eq.s32.totalorder %s12, 0
    %p168 = por %p166, %p167
    %p169 = scmp.ne.s32.totalorder %s158, %s161
    %p170 = scmp.eq.s32.totalorder %s17, 1
    %p171 = por %p169, %p170
    %p172 = scmp.ne.s32.totalorder %s161, %s162
    %p173 = scmp.eq.s32.totalorder %s17, 0
    %p174 = por %p172, %p173
    %p175 = scmp.ne.s32.totalorder %s161, %s162
    %p176 = scmp.eq.s32.totalorder %s18, 1
    %p177 = por %p175, %p176
    %p179 = scmp.ne.s32.totalorder %s162, %s178
    %p180 = scmp.eq.s32.totalorder %s18, 0
    %p181 = por %p179, %p180
    %p182 = scmp.le.s32.totalorder 1, %s12
    %p183 = scmp.lt.s32.totalorder %s12, 3
    %p184 = pnand %p182, %p183
    %p185 = pneg %p184
    // Predicated region
    $region9: #{_lambda_.13} parent=5 // pred_check
      _
    $region10: #{_lambda_.13} parent=5 // pred_check_branch
      %187 = sbr.rel (%p184) target = $region12
    $region11: #{_lambda_.13} parent=5 // pred_region
      %s188 = ssub.s32 %s12, 1
      // Predicated region
      $region13: #{_lambda_.13} parent=11 // pred_check
        %p189 = pneg %p85
      $region14: #{_lambda_.13} parent=11 // pred_check_branch
        %191 = sbr.rel (%p189) target = $region16
      $region15: #{_lambda_.13} parent=11 // pred_region
        _
      $region16: #{_lambda_.13} parent=11 // pred_fallthru
        _
      // Predicated region
      $region17: #{_lambda_.13} parent=11 // pred_check
        %p192 = pneg %p106
      $region18: #{_lambda_.13} parent=11 // pred_check_branch
        %194 = sbr.rel (%p192) target = $region20
      $region19: #{_lambda_.13} parent=11 // pred_region
        _
      $region20: #{_lambda_.13} parent=11 // pred_fallthru
        _
      // Predicated region
      $region21: #{_lambda_.13} parent=11 // pred_check
        %p195 = pneg %p127
      $region22: #{_lambda_.13} parent=11 // pred_check_branch
        %197 = sbr.rel (%p195) target = $region24
      $region23: #{_lambda_.13} parent=11 // pred_region
        _
      $region24: #{_lambda_.13} parent=11 // pred_fallthru
        _
      // Predicated region
      $region25: #{_lambda_.13} parent=11 // pred_check
        %p198 = pneg %p148
      $region26: #{_lambda_.13} parent=11 // pred_check_branch
        %200 = sbr.rel (%p198) target = $region28
      $region27: #{_lambda_.13} parent=11 // pred_region
        _
      $region28: #{_lambda_.13} parent=11 // pred_fallthru
        _
    $region12: #{_lambda_.13} parent=5 // pred_fallthru
      _
    %p201 = scmp.lt.s32.totalorder %s12, 2
    // Predicated region
    $region29: #{_lambda_.13} parent=5 // pred_check
      %p202 = pneg %p201
    $region30: #{_lambda_.13} parent=5 // pred_check_branch
      %204 = sbr.rel (%p202) target = $region32
    $region31: #{_lambda_.13} parent=5 // pred_region
      // Predicated region
      $region33: #{_lambda_.13} parent=31 // pred_check
        %p205 = pneg %p32
      $region34: #{_lambda_.13} parent=31 // pred_check_branch
        %207 = sbr.rel (%p205) target = $region36
      $region35: #{_lambda_.13} parent=31 // pred_region
        %p208 = scmp.lt.s32.totalorder %s12, 1
        %s209 = scalar_select %p208, %s12, 1
        %s210 = smul.addr %s209, 4
        %s211 = scalar_lea.vmem %s0, %s210
      $region36: #{_lambda_.13} parent=31 // pred_fallthru
        _
      // Predicated region
      $region37: #{_lambda_.13} parent=31 // pred_check
        %p212 = pneg %p58
      $region38: #{_lambda_.13} parent=31 // pred_check_branch
        %214 = sbr.rel (%p212) target = $region40
      $region39: #{_lambda_.13} parent=31 // pred_region
        %p215 = scmp.lt.s32.totalorder %s12, 1
        %s216 = scalar_select %p215, %s12, 1
        %s217 = smul.addr %s216, 4
        %s218 = scalar_lea.vmem %s1, %s217
      $region40: #{_lambda_.13} parent=31 // pred_fallthru
        _
    $region32: #{_lambda_.13} parent=5 // pred_fallthru
      _
    %p219 = scmp.le.s32.totalorder 1, %s12
    %p220 = scmp.lt.s32.totalorder %s12, 3
    %p221 = pnand %p219, %p220
    %p222 = pneg %p221
    // Predicated region
    $region41: #{_lambda_.13} parent=5 // pred_check
      _
    $region42: #{_lambda_.13} parent=5 // pred_check_branch
      %224 = sbr.rel (%p221) target = $region44
    $region43: #{_lambda_.13} parent=5 // pred_region
      %s225 = ssub.s32 %s12, 1
      %p226 = scmp.lt.s32.totalorder %s17, 1
      %s227 = scalar_select %p226, %s17, 1
      %s228 = smul.addr %s227, 4
      %s229 = scalar_lea.vmem %s0, %s228
      %p230 = pneg %p38
      %p231 = pneg %p35
      %p232 = scmp.lt.s32.totalorder %s17, 1
      %s233 = scalar_select %p232, %s17, 1
      %s234 = smul.addr %s233, 4
      %s235 = scalar_lea.vmem %s1, %s234
      %p236 = pneg %p64
      %p237 = pneg %p61
      %p238 = pneg %p85
      %p239 = pneg %p82
      %p240 = pneg %p106
      %p241 = pneg %p103
      %p242 = pneg %p127
      %p243 = pneg %p124
      %p244 = pneg %p148
      %p245 = pneg %p145
      %p246 = pneg %p174
      %p247 = pneg %p171
      %p248 = scmp.lt.s32.totalorder %s17, 1
      %s249 = scalar_select %p248, %s17, 1
      %s250 = smul.addr %s249, 4
      %s251 = scalar_lea.vmem %s6, %s250
      %p252 = scmp.lt.s32.totalorder %s17, 1
      %s253 = scalar_select %p252, %s17, 1
      %s254 = smul.addr %s253, 4
      %s255 = scalar_lea.vmem %s0, %s254
      %p256 = scmp.lt.s32.totalorder %s17, 1
      %s257 = scalar_select %p256, %s17, 1
      %s258 = smul.addr %s257, 4
      %s259 = scalar_lea.vmem %s1, %s258
      %p260 = scmp.lt.s32.totalorder %s17, 1
      %s261 = scalar_select %p260, %s17, 1
      %s262 = smul.addr %s261, 4
      %s263 = scalar_lea.vmem %s6, %s262
      %v265 = vld [vmem:[%s255] sm:$0x7]
      %v267 = vunpack.c.l.b16 %v265
      %v268 = vpack.c.b16 %v267, %v267
      %v269 = vrot.slane %v268, 7
      %vm270 = vcmask 1040384
      %v273 = vsel %vm270, 0, %v269
      %vm274 = vcmask 1043456
      %v275 = vsel %vm274, %v273, 0
      %v276 = vshrl.u32 %v275, 16
      %v278 = vshll.u32 %v275, 16
      %v280 = vrot.slane %v278, 1
      %v281 = vor.u32 %v276, %v280
      %282 = vrot.lane.b32.xlu0 %v281, 32
      %v283 = vpop.permute.xlu0 %282
      %v285 = vrot.slane %v275, 1
      %286 = vrot.lane.b32.xlu0 %v285, 64
      %v287 = vpop.permute.xlu0 %286
      %vm288 = vcmask 261120
      %v290 = vsel %vm288, %v275, %v283
      %vm291 = vcmask 523264
      %v293 = vsel %vm291, %v290, %v287
      %v294 = vld [vmem:[%s2] sm:$0xf]
      %v295 = vld [vmem:[%s2 + $0x4] sm:$0xf]
      %v296 = vld [vmem:[%s2 + $0x8] sm:$0xf]
      %v297 = vld [vmem:[%s2 + $0xc] sm:$0xf]
      %v298 = vld [vmem:[%s2 + $0x10] sm:$0xf]
      %v299 = vld [vmem:[%s2 + $0x14] sm:$0xf]
      %v300 = vld [vmem:[%s2 + $0x18] sm:$0xf]
      %v301 = vld [vmem:[%s2 + $0x1c] sm:$0xf]
      %v302 = vld [vmem:[%s2 + $0x20] sm:$0xf]
      %v303 = vld [vmem:[%s2 + $0x24] sm:$0xf]
      %v304 = vld [vmem:[%s2 + $0x28] sm:$0xf]
      %v305 = vld [vmem:[%s2 + $0x2c] sm:$0xf]
      %v306 = vld [vmem:[%s3] sm:$0x1]
      %v308 = vlaneseq
      %v309 = vshrl.u32 %v308, 7
      %v310 = vsub.s32 0, %v309
      %v311 = vrot.slane %v306, %v310
      %v325 = vunpack.c.l.b16 %v294
      %v326 = vunpack.c.l.b16 %v295
      %v327 = vunpack.c.l.b16 %v296
      %v328 = vunpack.c.l.b16 %v297
      %v329 = vunpack.c.l.b16 %v298
      %v330 = vunpack.c.l.b16 %v299
      %v331 = vunpack.c.l.b16 %v300
      %v332 = vunpack.c.l.b16 %v301
      %v333 = vunpack.c.l.b16 %v302
      %v334 = vunpack.c.l.b16 %v303
      %v335 = vunpack.c.l.b16 %v304
      %v336 = vunpack.c.l.b16 %v305
      %v337 = vpack.c.b16 %v326, %v325
      %v338 = vpack.c.b16 %v328, %v327
      %v339 = vpack.c.b16 %v330, %v329
      %v340 = vpack.c.b16 %v332, %v331
      %v341 = vpack.c.b16 %v334, %v333
      %v342 = vpack.c.b16 %v336, %v335
      %vm349 = vcmask 785408
      %v350 = vsel %vm349, %v293, 0
      %352 = vmatprep.subr.bf16.mxu0 0
      %353 = vmatpush1.bf16.msra.mxu0 0
      %354 = vmatprep.subr.bf16.mxu0 0
      %355 = vmatpush1.bf16.msra.mxu0 0
      %356 = vmatprep.subr.bf16.mxu0 0
      %357 = vmatpush1.bf16.msra.mxu0 %v342
      %358 = vmatprep.subr.bf16.mxu0 0
      %359 = vmatpush1.bf16.msra.mxu0 %v341
      %360 = vmatprep.subr.bf16.mxu0 0
      %361 = vmatpush1.bf16.msra.mxu0 %v340
      %362 = vmatprep.subr.bf16.mxu0 0
      %363 = vmatpush1.bf16.msra.mxu0 %v339
      %364 = vmatprep.subr.bf16.mxu0 0
      %365 = vmatpush1.bf16.msra.mxu0 %v338
      %366 = vmatprep.subr.bf16.mxu0 0
      %367 = vmatpush1.bf16.msra.mxu0 %v337
      %368 = vmatprep.subr.bf16.mxu0 0
      %369 = vmatpush2.bf16.msra.mxu0 0
      %370 = vmatprep.subr.bf16.mxu0 0
      %371 = vmatpush2.bf16.msra.mxu0 0
      %372 = vmatprep.subr.bf16.mxu0 0
      %373 = vmatpush2.bf16.msra.mxu0 0
      %374 = vmatprep.subr.bf16.mxu0 0
      %375 = vmatpush2.bf16.msra.mxu0 0
      %376 = vmatprep.subr.bf16.mxu0 0
      %377 = vmatpush2.bf16.msra.mxu0 0
      %378 = vmatprep.subr.bf16.mxu0 0
      %379 = vmatpush2.bf16.msra.mxu0 0
      %380 = vmatprep.subr.bf16.mxu0 0
      %381 = vmatpush2.bf16.msra.mxu0 0
      %382 = vmatprep.subr.bf16.mxu0 0
      %383 = vmatpush2.bf16.msra.mxu0 0
      %384 = vmatprep.mubr.bf16.mxu0 0
      %385 = vmatmul.mubr.bf16.gmra.mxu0 %v350
      %v386 = vpop.f32.mrf.mxu0
      %v387 = vadd.f32 %v311, %v386
      %v388 = vpop.f32.mrf.mxu0
      %v389 = vpop.f32.mrf.mxu0
      %v390 = vpop.f32.mrf.mxu0
      %391 = vdwg.mxu0
      %v392 = vmax.f32 %v387, 0.0
      %v393 = vld [vmem:[%s4] sm:$0x1]
      %v394 = vld [vmem:[%s5] sm:$0x1]
      %v395 = vsel %vm288, %v392, 0.0
      %396 = vadd.xlane.f32.xlu0 %v395
      %v397 = vpop.xlane.xlu0 %396
      %v398 = vrcp.pop 32.0
      %v399 = vmul.f32 %v397, %v398
      %v400 = vsub.f32 %v392, %v399
      %v401 = vmul.f32 %v400, %v400
      %v402 = vsel %vm288, %v401, 0.0
      %403 = vadd.xlane.f32.xlu0 %v402
      %v404 = vpop.xlane.xlu0 %403
      %v405 = vmul.f32 %v404, %v398
      %v406 = vadd.f32 %v405, 1e-05
      %v407 = vrsqrt.pop %v406
      %v408 = vmul.f32 %v400, %v407
      %v410 = vlaneseq
      %v411 = vshrl.u32 %v410, 7
      %v412 = vsub.s32 0, %v411
      %v413 = vrot.slane %v393, %v412
      %v415 = vmul.f32 %v408, %v413
      %v417 = vlaneseq
      %v418 = vshrl.u32 %v417, 7
      %v419 = vsub.s32 0, %v418
      %v420 = vrot.slane %v394, %v419
      %v422 = vadd.f32 %v415, %v420
      %v423 = vmul.f32 %v422, 0.5
      %v424 = vld [vmem:[%s259] sm:$0xf]
      %v425 = vunpack.c.l.bf16 %v424
      %v426 = vmul.f32 %v425, 0.5
      %v427 = vadd.f32 %v423, %v426
      %v428 = vpack.c.bf16 %v427, %v427
      %vm429 = vcmask 257024
      %430 = vst.msk [vmem:[%s263] sm:$0xf] %vm429, %v428
      %p431 = scmp.lt.s32.totalorder %s17, 1
      %s432 = scalar_select %p431, %s17, 1
      %s433 = smul.addr %s432, 4
      %s434 = scalar_lea.vmem %s6, %s433
      // Predicated region
      $region45: #{_lambda_.13} parent=43 // pred_check
        %p435 = pneg %p171
      $region46: #{_lambda_.13} parent=43 // pred_check_branch
        %437 = sbr.rel (%p435) target = $region48
      $region47: #{_lambda_.13} parent=43 // pred_region
        _
      $region48: #{_lambda_.13} parent=43 // pred_fallthru
        _
    $region44: #{_lambda_.13} parent=5 // pred_fallthru
      _
    %p438 = scmp.le.s32.totalorder 2, %s12
    // Predicated region
    $region49: #{_lambda_.13} parent=5 // pred_check
      %p439 = pneg %p438
    $region50: #{_lambda_.13} parent=5 // pred_check_branch
      %441 = sbr.rel (%p439) target = $region52
    $region51: #{_lambda_.13} parent=5 // pred_region
      %s442 = ssub.s32 %s12, 2
      // Predicated region
      $region53: #{_lambda_.13} parent=51 // pred_check
        %p443 = pneg %p177
      $region54: #{_lambda_.13} parent=51 // pred_check_branch
        %445 = sbr.rel (%p443) target = $region56
      $region55: #{_lambda_.13} parent=51 // pred_region
        %p446 = scmp.lt.s32.totalorder %s18, 1
        %s447 = scalar_select %p446, %s18, 1
        %s448 = smul.addr %s447, 4
        %s449 = scalar_lea.vmem %s6, %s448
      $region56: #{_lambda_.13} parent=51 // pred_fallthru
        _
    $region52: #{_lambda_.13} parent=5 // pred_fallthru
      _
  $region6: #{_lambda_.13} parent=0 // loop_footer
    %s16 = sadd.s32 1, %s12
  $region7: #{_lambda_.13} parent=0 // loop_footer_branch
    %11 = sbr.rel target = $region3
  $region8: #{_lambda_.13} parent=0 // loop_exit
    _

// kernel: _lambda_.14
$region0: #{_lambda_.14}
  #allocation0 [shape = 'u32[]', space=smem, size = 0x4, offset = 0x4, fixed_abs, tag = 'smem constant byte address 0x4 - core index']
  #allocation1 [shape = 'u32[144,128]{1,0:T(1,128)}', space=vmem, size = 0x12000, scoped, tag = 'internal scratch']
  %s0 = inlined_call_operand.vmem [shape: bf16[2,8,32], index: 0, kind: input, shape index: {}]
  %s1 = inlined_call_operand.vmem [shape: bf16[32,32], index: 1, kind: input, shape index: {}]
  %s2 = inlined_call_operand.vmem [shape: f32[1,32], index: 2, kind: input, shape index: {}]
  %s3 = inlined_call_operand.vmem [shape: f32[1,32], index: 3, kind: input, shape index: {}]
  %s4 = inlined_call_operand.vmem [shape: f32[1,32], index: 4, kind: input, shape index: {}]
  %s5 = inlined_call_operand.vmem [shape: bf16[2,8,32], index: 5, kind: output, shape index: {}]
  %s6 = sld [smem:[#allocation0]]
  $region53: #{_lambda_.14} parent=0
    _
  %s8 = ssub.s32 1, %s6
  %s9 = scalar_select 0, %s8, %s6
  loop: start=0, step=1, limit=4
  $region2: #{_lambda_.14} parent=0 // loop_pre_header
    _
  $region3: #{_lambda_.14} parent=0 // loop_header
    %s11 = sphi 0, %s15
    %p12 = scmp.ge.s32.totalorder %s11, 4
    %s21 = sphi 0, %s23
    %s24 = sphi 0, %s21
    %s25 = sphi 0, %s24
    %s41 = sphi 0, %s25
    %s45 = sphi 0, %s45
    %s47 = sphi 0, %s45
    %s48 = sphi 0, %s47
    %s62 = sphi 0, %s48
    %s66 = sphi 0, %s66
    %s68 = sphi 0, %s66
    %s69 = sphi 0, %s68
    %s83 = sphi 0, %s69
    %s87 = sphi 0, %s87
    %s89 = sphi 0, %s87
    %s90 = sphi 0, %s89
    %s104 = sphi 0, %s90
    %s108 = sphi 0, %s108
    %s110 = sphi 0, %s108
    %s111 = sphi 0, %s110
    %s125 = sphi 0, %s111
    %s131 = sphi 0, %s133
    %s134 = sphi 0, %s131
    %s135 = sphi 0, %s134
    %s151 = sphi 0, %s135
  $region4: #{_lambda_.14} parent=0 // loop_header_branch
    %14 = sbr.rel (%p12) target = $region8
  $region5: #{_lambda_.14} parent=0 // loop_body
    %s16 = ssub.s32 %s11, 1
    %s17 = ssub.s32 %s11, 2
    %s18 = sadd.s32 %s11, 1
    %s19 = ssub.s32 %s11, %s18
    %p20 = scmp.eq.s32.totalorder %s19, 0
    %s22 = sadd.s32 %s21, 1
    %s23 = scalar_select %p20, %s21, %s22
    %p26 = pneg %p20
    %p27 = scmp.eq.s32.totalorder %s11, 1
    %p28 = por %p26, %p27
    %p29 = scmp.ne.s32.totalorder %s21, %s24
    %p30 = scmp.eq.s32.totalorder %s11, 0
    %p31 = por %p29, %p30
    %p32 = scmp.ne.s32.totalorder %s21, %s24
    %p33 = scmp.eq.s32.totalorder %s16, 1
    %p34 = por %p32, %p33
    %p35 = scmp.ne.s32.totalorder %s24, %s25
    %p36 = scmp.eq.s32.totalorder %s16, 0
    %p37 = por %p35, %p36
    %p38 = scmp.ne.s32.totalorder %s24, %s25
    %p39 = scmp.eq.s32.totalorder %s17, 1
    %p40 = por %p38, %p39
    %p42 = scmp.ne.s32.totalorder %s25, %s41
    %p43 = scmp.eq.s32.totalorder %s17, 0
    %p44 = por %p42, %p43
    %s46 = sadd.s32 %s45, 1
    %p49 = scmp.eq.s32.totalorder %s11, 1
    %p50 = scmp.ne.s32.totalorder %s45, %s47
    %p51 = scmp.eq.s32.totalorder %s11, 0
    %p52 = por %p50, %p51
    %p53 = scmp.ne.s32.totalorder %s45, %s47
    %p54 = scmp.eq.s32.totalorder %s16, 1
    %p55 = por %p53, %p54
    %p56 = scmp.ne.s32.totalorder %s47, %s48
    %p57 = scmp.eq.s32.totalorder %s16, 0
    %p58 = por %p56, %p57
    %p59 = scmp.ne.s32.totalorder %s47, %s48
    %p60 = scmp.eq.s32.totalorder %s17, 1
    %p61 = por %p59, %p60
    %p63 = scmp.ne.s32.totalorder %s48, %s62
    %p64 = scmp.eq.s32.totalorder %s17, 0
    %p65 = por %p63, %p64
    %s67 = sadd.s32 %s66, 1
    %p70 = scmp.eq.s32.totalorder %s11, 1
    %p71 = scmp.ne.s32.totalorder %s66, %s68
    %p72 = scmp.eq.s32.totalorder %s11, 0
    %p73 = por %p71, %p72
    %p74 = scmp.ne.s32.totalorder %s66, %s68
    %p75 = scmp.eq.s32.totalorder %s16, 1
    %p76 = por %p74, %p75
    %p77 = scmp.ne.s32.totalorder %s68, %s69
    %p78 = scmp.eq.s32.totalorder %s16, 0
    %p79 = por %p77, %p78
    %p80 = scmp.ne.s32.totalorder %s68, %s69
    %p81 = scmp.eq.s32.totalorder %s17, 1
    %p82 = por %p80, %p81
    %p84 = scmp.ne.s32.totalorder %s69, %s83
    %p85 = scmp.eq.s32.totalorder %s17, 0
    %p86 = por %p84, %p85
    %s88 = sadd.s32 %s87, 1
    %p91 = scmp.eq.s32.totalorder %s11, 1
    %p92 = scmp.ne.s32.totalorder %s87, %s89
    %p93 = scmp.eq.s32.totalorder %s11, 0
    %p94 = por %p92, %p93
    %p95 = scmp.ne.s32.totalorder %s87, %s89
    %p96 = scmp.eq.s32.totalorder %s16, 1
    %p97 = por %p95, %p96
    %p98 = scmp.ne.s32.totalorder %s89, %s90
    %p99 = scmp.eq.s32.totalorder %s16, 0
    %p100 = por %p98, %p99
    %p101 = scmp.ne.s32.totalorder %s89, %s90
    %p102 = scmp.eq.s32.totalorder %s17, 1
    %p103 = por %p101, %p102
    %p105 = scmp.ne.s32.totalorder %s90, %s104
    %p106 = scmp.eq.s32.totalorder %s17, 0
    %p107 = por %p105, %p106
    %s109 = sadd.s32 %s108, 1
    %p112 = scmp.eq.s32.totalorder %s11, 1
    %p113 = scmp.ne.s32.totalorder %s108, %s110
    %p114 = scmp.eq.s32.totalorder %s11, 0
    %p115 = por %p113, %p114
    %p116 = scmp.ne.s32.totalorder %s108, %s110
    %p117 = scmp.eq.s32.totalorder %s16, 1
    %p118 = por %p116, %p117
    %p119 = scmp.ne.s32.totalorder %s110, %s111
    %p120 = scmp.eq.s32.totalorder %s16, 0
    %p121 = por %p119, %p120
    %p122 = scmp.ne.s32.totalorder %s110, %s111
    %p123 = scmp.eq.s32.totalorder %s17, 1
    %p124 = por %p122, %p123
    %p126 = scmp.ne.s32.totalorder %s111, %s125
    %p127 = scmp.eq.s32.totalorder %s17, 0
    %p128 = por %p126, %p127
    %s129 = ssub.s32 %s11, %s18
    %p130 = scmp.eq.s32.totalorder %s129, 0
    %s132 = sadd.s32 %s131, 1
    %s133 = scalar_select %p130, %s131, %s132
    %p136 = pneg %p130
    %p137 = scmp.eq.s32.totalorder %s11, 1
    %p138 = por %p136, %p137
    %p139 = scmp.ne.s32.totalorder %s131, %s134
    %p140 = scmp.eq.s32.totalorder %s11, 0
    %p141 = por %p139, %p140
    %p142 = scmp.ne.s32.totalorder %s131, %s134
    %p143 = scmp.eq.s32.totalorder %s16, 1
    %p144 = por %p142, %p143
    %p145 = scmp.ne.s32.totalorder %s134, %s135
    %p146 = scmp.eq.s32.totalorder %s16, 0
    %p147 = por %p145, %p146
    %p148 = scmp.ne.s32.totalorder %s134, %s135
    %p149 = scmp.eq.s32.totalorder %s17, 1
    %p150 = por %p148, %p149
    %p152 = scmp.ne.s32.totalorder %s135, %s151
    %p153 = scmp.eq.s32.totalorder %s17, 0
    %p154 = por %p152, %p153
    %p155 = scmp.le.s32.totalorder 1, %s11
    %p156 = scmp.lt.s32.totalorder %s11, 3
    %p157 = pnand %p155, %p156
    %p158 = pneg %p157
    // Predicated region
    $region9: #{_lambda_.14} parent=5 // pred_check
      _
    $region10: #{_lambda_.14} parent=5 // pred_check_branch
      %160 = sbr.rel (%p157) target = $region12
    $region11: #{_lambda_.14} parent=5 // pred_region
      %s161 = ssub.s32 %s11, 1
      // Predicated region
      $region13: #{_lambda_.14} parent=11 // pred_check
        %p162 = pneg %p58
      $region14: #{_lambda_.14} parent=11 // pred_check_branch
        %164 = sbr.rel (%p162) target = $region16
      $region15: #{_lambda_.14} parent=11 // pred_region
        _
      $region16: #{_lambda_.14} parent=11 // pred_fallthru
        _
      // Predicated region
      $region17: #{_lambda_.14} parent=11 // pred_check
        %p165 = pneg %p79
      $region18: #{_lambda_.14} parent=11 // pred_check_branch
        %167 = sbr.rel (%p165) target = $region20
      $region19: #{_lambda_.14} parent=11 // pred_region
        _
      $region20: #{_lambda_.14} parent=11 // pred_fallthru
        _
      // Predicated region
      $region21: #{_lambda_.14} parent=11 // pred_check
        %p168 = pneg %p100
      $region22: #{_lambda_.14} parent=11 // pred_check_branch
        %170 = sbr.rel (%p168) target = $region24
      $region23: #{_lambda_.14} parent=11 // pred_region
        _
      $region24: #{_lambda_.14} parent=11 // pred_fallthru
        _
      // Predicated region
      $region25: #{_lambda_.14} parent=11 // pred_check
        %p171 = pneg %p121
      $region26: #{_lambda_.14} parent=11 // pred_check_branch
        %173 = sbr.rel (%p171) target = $region28
      $region27: #{_lambda_.14} parent=11 // pred_region
        _
      $region28: #{_lambda_.14} parent=11 // pred_fallthru
        _
    $region12: #{_lambda_.14} parent=5 // pred_fallthru
      _
    %p174 = scmp.lt.s32.totalorder %s11, 2
    // Predicated region
    $region29: #{_lambda_.14} parent=5 // pred_check
      %p175 = pneg %p174
    $region30: #{_lambda_.14} parent=5 // pred_check_branch
      %177 = sbr.rel (%p175) target = $region32
    $region31: #{_lambda_.14} parent=5 // pred_region
      // Predicated region
      $region33: #{_lambda_.14} parent=31 // pred_check
        %p178 = pneg %p31
      $region34: #{_lambda_.14} parent=31 // pred_check_branch
        %180 = sbr.rel (%p178) target = $region36
      $region35: #{_lambda_.14} parent=31 // pred_region
        %p181 = scmp.lt.s32.totalorder %s11, 1
        %s182 = scalar_select %p181, %s11, 1
        %s183 = smul.addr %s182, 4
        %s184 = scalar_lea.vmem %s0, %s183
      $region36: #{_lambda_.14} parent=31 // pred_fallthru
        _
    $region32: #{_lambda_.14} parent=5 // pred_fallthru
      _
    %p185 = scmp.le.s32.totalorder 1, %s11
    %p186 = scmp.lt.s32.totalorder %s11, 3
    %p187 = pnand %p185, %p186
    %p188 = pneg %p187
    // Predicated region
    $region37: #{_lambda_.14} parent=5 // pred_check
      _
    $region38: #{_lambda_.14} parent=5 // pred_check_branch
      %190 = sbr.rel (%p187) target = $region40
    $region39: #{_lambda_.14} parent=5 // pred_region
      %s191 = ssub.s32 %s11, 1
      %p192 = scmp.lt.s32.totalorder %s16, 1
      %s193 = scalar_select %p192, %s16, 1
      %s194 = smul.addr %s193, 4
      %s195 = scalar_lea.vmem %s0, %s194
      %p196 = pneg %p37
      %p197 = pneg %p34
      %p198 = pneg %p58
      %p199 = pneg %p55
      %p200 = pneg %p79
      %p201 = pneg %p76
      %p202 = pneg %p100
      %p203 = pneg %p97
      %p204 = pneg %p121
      %p205 = pneg %p118
      %p206 = pneg %p147
      %p207 = pneg %p144
      %p208 = scmp.lt.s32.totalorder %s16, 1
      %s209 = scalar_select %p208, %s16, 1
      %s210 = smul.addr %s209, 4
      %s211 = scalar_lea.vmem %s5, %s210
      %p212 = scmp.lt.s32.totalorder %s16, 1
      %s213 = scalar_select %p212, %s16, 1
      %s214 = smul.addr %s213, 4
      %s215 = scalar_lea.vmem %s0, %s214
      %p216 = scmp.lt.s32.totalorder %s16, 1
      %s217 = scalar_select %p216, %s16, 1
      %s218 = smul.addr %s217, 4
      %s219 = scalar_lea.vmem %s5, %s218
      %v221 = vld [vmem:[%s215] sm:$0xf]
      %v222 = vld [vmem:[%s1] sm:$0xf]
      %v223 = vld [vmem:[%s1 + $0x4] sm:$0xf]
      %v224 = vld [vmem:[%s1 + $0x8] sm:$0xf]
      %v225 = vld [vmem:[%s1 + $0xc] sm:$0xf]
      %v226 = vld [vmem:[%s2] sm:$0x1]
      %v228 = vlaneseq
      %v229 = vshrl.u32 %v228, 7
      %v230 = vsub.s32 0, %v229
      %v231 = vrot.slane %v226, %v230
      %v237 = vunpack.c.l.b16 %v222
      %v238 = vunpack.c.l.b16 %v223
      %v239 = vunpack.c.l.b16 %v224
      %v240 = vunpack.c.l.b16 %v225
      %v241 = vpack.c.b16 %v238, %v237
      %v242 = vpack.c.b16 %v240, %v239
      %vm245 = vcmask 261120
      %v247 = vsel %vm245, %v221, 0
      %249 = vmatprep.subr.bf16.mxu0 0
      %250 = vmatpush1.bf16.msra.mxu0 0
      %251 = vmatprep.subr.bf16.mxu0 0
      %252 = vmatpush1.bf16.msra.mxu0 0
      %253 = vmatprep.subr.bf16.mxu0 0
      %254 = vmatpush1.bf16.msra.mxu0 0
      %255 = vmatprep.subr.bf16.mxu0 0
      %256 = vmatpush1.bf16.msra.mxu0 0
      %257 = vmatprep.subr.bf16.mxu0 0
      %258 = vmatpush1.bf16.msra.mxu0 0
      %259 = vmatprep.subr.bf16.mxu0 0
      %260 = vmatpush1.bf16.msra.mxu0 0
      %261 = vmatprep.subr.bf16.mxu0 0
      %262 = vmatpush1.bf16.msra.mxu0 %v242
      %263 = vmatprep.subr.bf16.mxu0 0
      %264 = vmatpush1.bf16.msra.mxu0 %v241
      %265 = vmatprep.subr.bf16.mxu0 0
      %266 = vmatpush2.bf16.msra.mxu0 0
      %267 = vmatprep.subr.bf16.mxu0 0
      %268 = vmatpush2.bf16.msra.mxu0 0
      %269 = vmatprep.subr.bf16.mxu0 0
      %270 = vmatpush2.bf16.msra.mxu0 0
      %271 = vmatprep.subr.bf16.mxu0 0
      %272 = vmatpush2.bf16.msra.mxu0 0
      %273 = vmatprep.subr.bf16.mxu0 0
      %274 = vmatpush2.bf16.msra.mxu0 0
      %275 = vmatprep.subr.bf16.mxu0 0
      %276 = vmatpush2.bf16.msra.mxu0 0
      %277 = vmatprep.subr.bf16.mxu0 0
      %278 = vmatpush2.bf16.msra.mxu0 0
      %279 = vmatprep.subr.bf16.mxu0 0
      %280 = vmatpush2.bf16.msra.mxu0 0
      %281 = vmatprep.mubr.bf16.mxu0 0
      %282 = vmatmul.mubr.bf16.gmra.mxu0 %v247
      %v283 = vpop.f32.mrf.mxu0
      %v284 = vadd.f32 %v231, %v283
      %v285 = vpop.f32.mrf.mxu0
      %v286 = vpop.f32.mrf.mxu0
      %v287 = vpop.f32.mrf.mxu0
      %288 = vdwg.mxu0
      %v289 = vmax.f32 %v284, 0.0
      %v290 = vld [vmem:[%s3] sm:$0x1]
      %v291 = vld [vmem:[%s4] sm:$0x1]
      %v292 = vsel %vm245, %v289, 0.0
      %293 = vadd.xlane.f32.xlu0 %v292
      %v294 = vpop.xlane.xlu0 %293
      %v295 = vrcp.pop 32.0
      %v296 = vmul.f32 %v294, %v295
      %v297 = vsub.f32 %v289, %v296
      %v298 = vmul.f32 %v297, %v297
      %v299 = vsel %vm245, %v298, 0.0
      %300 = vadd.xlane.f32.xlu0 %v299
      %v301 = vpop.xlane.xlu0 %300
      %v302 = vmul.f32 %v301, %v295
      %v303 = vadd.f32 %v302, 1e-05
      %v304 = vrsqrt.pop %v303
      %v305 = vmul.f32 %v297, %v304
      %v307 = vlaneseq
      %v308 = vshrl.u32 %v307, 7
      %v309 = vsub.s32 0, %v308
      %v310 = vrot.slane %v290, %v309
      %v312 = vmul.f32 %v305, %v310
      %v314 = vlaneseq
      %v315 = vshrl.u32 %v314, 7
      %v316 = vsub.s32 0, %v315
      %v317 = vrot.slane %v291, %v316
      %v319 = vadd.f32 %v312, %v317
      %v320 = vpack.c.bf16 %v319, %v319
      %vm321 = vcmask 257024
      %322 = vst.msk [vmem:[%s219] sm:$0xf] %vm321, %v320
      %p323 = scmp.lt.s32.totalorder %s16, 1
      %s324 = scalar_select %p323, %s16, 1
      %s325 = smul.addr %s324, 4
      %s326 = scalar_lea.vmem %s5, %s325
      // Predicated region
      $region41: #{_lambda_.14} parent=39 // pred_check
        %p327 = pneg %p144
      $region42: #{_lambda_.14} parent=39 // pred_check_branch
        %329 = sbr.rel (%p327) target = $region44
      $region43: #{_lambda_.14} parent=39 // pred_region
        _
      $region44: #{_lambda_.14} parent=39 // pred_fallthru
        _
    $region40: #{_lambda_.14} parent=5 // pred_fallthru
      _
    %p330 = scmp.le.s32.totalorder 2, %s11
    // Predicated region
    $region45: #{_lambda_.14} parent=5 // pred_check
      %p331 = pneg %p330
    $region46: #{_lambda_.14} parent=5 // pred_check_branch
      %333 = sbr.rel (%p331) target = $region48
    $region47: #{_lambda_.14} parent=5 // pred_region
      %s334 = ssub.s32 %s11, 2
      // Predicated region
      $region49: #{_lambda_.14} parent=47 // pred_check
        %p335 = pneg %p150
      $region50: #{_lambda_.14} parent=47 // pred_check_branch
        %337 = sbr.rel (%p335) target = $region52
      $region51: #{_lambda_.14} parent=47 // pred_region
        %p338 = scmp.lt.s32.totalorder %s17, 1
        %s339 = scalar_select %p338, %s17, 1
        %s340 = smul.addr %s339, 4
        %s341 = scalar_lea.vmem %s5, %s340
      $region52: #{_lambda_.14} parent=47 // pred_fallthru
        _
    $region48: #{_lambda_.14} parent=5 // pred_fallthru
      _
  $region6: #{_lambda_.14} parent=0 // loop_footer
    %s15 = sadd.s32 1, %s11
  $region7: #{_lambda_.14} parent=0 // loop_footer_branch
    %10 = sbr.rel target = $region3
  $region8: #{_lambda_.14} parent=0 // loop_exit
    _

// kernel: _lambda_.16
$region0: #{_lambda_.16}
  #allocation0 [shape = 'u32[]', space=smem, size = 0x4, offset = 0x4, fixed_abs, tag = 'smem constant byte address 0x4 - core index']
  #allocation1 [shape = 'u32[144,128]{1,0:T(1,128)}', space=vmem, size = 0x12000, scoped, tag = 'internal scratch']
  %s0 = inlined_call_operand.vmem [shape: bf16[16,32], index: 0, kind: input, shape index: {}]
  %s1 = inlined_call_operand.vmem [shape: bf16[32,128], index: 1, kind: input, shape index: {}]
  %s2 = inlined_call_operand.vmem [shape: f32[1,128], index: 2, kind: input, shape index: {}]
  %s3 = inlined_call_operand.vmem [shape: bf16[128,32], index: 3, kind: input, shape index: {}]
  %s4 = inlined_call_operand.vmem [shape: f32[1,32], index: 4, kind: input, shape index: {}]
  %s5 = inlined_call_operand.vmem [shape: f32[1,32], index: 5, kind: input, shape index: {}]
  %s6 = inlined_call_operand.vmem [shape: f32[1,32], index: 6, kind: input, shape index: {}]
  %s7 = inlined_call_operand.vmem [shape: bf16[16,32], index: 7, kind: output, shape index: {}]
  %s8 = sld [smem:[#allocation0]]
  $region38: #{_lambda_.16} parent=0
    _
  %s10 = ssub.s32 1, %s8
  %s11 = scalar_select 0, %s10, %s8
  // Predicated region
  $region2: #{_lambda_.16} parent=0 // pred_check
    _
  $region3: #{_lambda_.16} parent=0 // pred_check_branch
    %13 = sbr.rel (0) target = $region5
  $region4: #{_lambda_.16} parent=0 // pred_region
    _
  $region5: #{_lambda_.16} parent=0 // pred_fallthru
    _
  // Predicated region
  $region6: #{_lambda_.16} parent=0 // pred_check
    _
  $region7: #{_lambda_.16} parent=0 // pred_check_branch
    %15 = sbr.rel (0) target = $region9
  $region8: #{_lambda_.16} parent=0 // pred_region
    _
  $region9: #{_lambda_.16} parent=0 // pred_fallthru
    _
  // Predicated region
  $region10: #{_lambda_.16} parent=0 // pred_check
    _
  $region11: #{_lambda_.16} parent=0 // pred_check_branch
    %17 = sbr.rel (0) target = $region13
  $region12: #{_lambda_.16} parent=0 // pred_region
    _
  $region13: #{_lambda_.16} parent=0 // pred_fallthru
    _
  // Predicated region
  $region14: #{_lambda_.16} parent=0 // pred_check
    _
  $region15: #{_lambda_.16} parent=0 // pred_check_branch
    %19 = sbr.rel (0) target = $region17
  $region16: #{_lambda_.16} parent=0 // pred_region
    _
  $region17: #{_lambda_.16} parent=0 // pred_fallthru
    _
  // Predicated region
  $region18: #{_lambda_.16} parent=0 // pred_check
    _
  $region19: #{_lambda_.16} parent=0 // pred_check_branch
    %21 = sbr.rel (0) target = $region21
  $region20: #{_lambda_.16} parent=0 // pred_region
    _
  $region21: #{_lambda_.16} parent=0 // pred_fallthru
    _
  // Predicated region
  $region22: #{_lambda_.16} parent=0 // pred_check
    _
  $region23: #{_lambda_.16} parent=0 // pred_check_branch
    %23 = sbr.rel (0) target = $region25
  $region24: #{_lambda_.16} parent=0 // pred_region
    _
  $region25: #{_lambda_.16} parent=0 // pred_fallthru
    _
  // Predicated region
  $region26: #{_lambda_.16} parent=0 // pred_check
    _
  $region27: #{_lambda_.16} parent=0 // pred_check_branch
    %25 = sbr.rel (0) target = $region29
  $region28: #{_lambda_.16} parent=0 // pred_region
    _
  $region29: #{_lambda_.16} parent=0 // pred_fallthru
    _
  %v27 = vld [vmem:[%s0] sm:$0xf]
  %v28 = vld [vmem:[%s0 + $0x4] sm:$0xf]
  %v29 = vld [vmem:[%s1] sm:$0xf]
  %v30 = vld [vmem:[%s1 + $0x4] sm:$0xf]
  %v31 = vld [vmem:[%s1 + $0x8] sm:$0xf]
  %v32 = vld [vmem:[%s1 + $0xc] sm:$0xf]
  %v33 = vld [vmem:[%s2] sm:$0x1]
  %v35 = vlaneseq
  %v36 = vshrl.u32 %v35, 7
  %v37 = vsub.s32 0, %v36
  %v38 = vrot.slane %v33, %v37
  %v42 = vunpack.c.l.b16 %v27
  %v43 = vunpack.c.l.b16 %v28
  %v44 = vpack.c.b16 %v43, %v42
  %v49 = vunpack.c.l.b16 %v29
  %v50 = vunpack.c.l.b16 %v30
  %v51 = vunpack.c.l.b16 %v31
  %v52 = vunpack.c.l.b16 %v32
  %v53 = vpack.c.b16 %v50, %v49
  %v54 = vpack.c.b16 %v52, %v51
  %vm57 = vcmask 261120
  %v59 = vsel %vm57, %v44, 0
  %61 = vmatprep.subr.bf16.mxu0 0
  %62 = vmatpush1.bf16.msra.mxu0 0
  %63 = vmatprep.subr.bf16.mxu0 0
  %64 = vmatpush1.bf16.msra.mxu0 0
  %65 = vmatprep.subr.bf16.mxu0 0
  %66 = vmatpush1.bf16.msra.mxu0 0
  %67 = vmatprep.subr.bf16.mxu0 0
  %68 = vmatpush1.bf16.msra.mxu0 0
  %69 = vmatprep.subr.bf16.mxu0 0
  %70 = vmatpush1.bf16.msra.mxu0 0
  %71 = vmatprep.subr.bf16.mxu0 0
  %72 = vmatpush1.bf16.msra.mxu0 0
  %73 = vmatprep.subr.bf16.mxu0 0
  %74 = vmatpush1.bf16.msra.mxu0 %v54
  %75 = vmatprep.subr.bf16.mxu0 0
  %76 = vmatpush1.bf16.msra.mxu0 %v53
  %77 = vmatprep.subr.bf16.mxu0 0
  %78 = vmatpush2.bf16.msra.mxu0 0
  %79 = vmatprep.subr.bf16.mxu0 0
  %80 = vmatpush2.bf16.msra.mxu0 0
  %81 = vmatprep.subr.bf16.mxu0 0
  %82 = vmatpush2.bf16.msra.mxu0 0
  %83 = vmatprep.subr.bf16.mxu0 0
  %84 = vmatpush2.bf16.msra.mxu0 0
  %85 = vmatprep.subr.bf16.mxu0 0
  %86 = vmatpush2.bf16.msra.mxu0 0
  %87 = vmatprep.subr.bf16.mxu0 0
  %88 = vmatpush2.bf16.msra.mxu0 0
  %89 = vmatprep.subr.bf16.mxu0 0
  %90 = vmatpush2.bf16.msra.mxu0 0
  %91 = vmatprep.subr.bf16.mxu0 0
  %92 = vmatpush2.bf16.msra.mxu0 0
  %93 = vmatprep.mubr.bf16.mxu0 0
  %94 = vmatmul.mubr.bf16.gmra.mxu0 %v59
  %v95 = vpop.f32.mrf.mxu0
  %v96 = vadd.f32 %v38, %v95
  %v97 = vpop.f32.mrf.mxu0
  %v98 = vpop.f32.mrf.mxu0
  %v99 = vadd.f32 %v38, %v98
  %v100 = vpop.f32.mrf.mxu0
  %101 = vdwg.mxu0
  %v102 = vmax.f32 %v96, 0.0
  %v103 = vmax.f32 %v99, 0.0
  %v104 = vld [vmem:[%s3] sm:$0xf]
  %v105 = vld [vmem:[%s3 + $0x4] sm:$0xf]
  %v106 = vld [vmem:[%s3 + $0x8] sm:$0xf]
  %v107 = vld [vmem:[%s3 + $0xc] sm:$0xf]
  %v108 = vld [vmem:[%s3 + $0x10] sm:$0xf]
  %v109 = vld [vmem:[%s3 + $0x14] sm:$0xf]
  %v110 = vld [vmem:[%s3 + $0x18] sm:$0xf]
  %v111 = vld [vmem:[%s3 + $0x1c] sm:$0xf]
  %v112 = vld [vmem:[%s3 + $0x20] sm:$0xf]
  %v113 = vld [vmem:[%s3 + $0x24] sm:$0xf]
  %v114 = vld [vmem:[%s3 + $0x28] sm:$0xf]
  %v115 = vld [vmem:[%s3 + $0x2c] sm:$0xf]
  %v116 = vld [vmem:[%s3 + $0x30] sm:$0xf]
  %v117 = vld [vmem:[%s3 + $0x34] sm:$0xf]
  %v118 = vld [vmem:[%s3 + $0x38] sm:$0xf]
  %v119 = vld [vmem:[%s3 + $0x3c] sm:$0xf]
  %v120 = vpack.c.bf16 %v103, %v102
  %v121 = vld [vmem:[%s4] sm:$0x1]
  %v123 = vlaneseq
  %v124 = vshrl.u32 %v123, 7
  %v125 = vsub.s32 0, %v124
  %v126 = vrot.slane %v121, %v125
  %v144 = vunpack.c.l.b16 %v104
  %v145 = vunpack.c.l.b16 %v105
  %v146 = vunpack.c.l.b16 %v106
  %v147 = vunpack.c.l.b16 %v107
  %v148 = vunpack.c.l.b16 %v108
  %v149 = vunpack.c.l.b16 %v109
  %v150 = vunpack.c.l.b16 %v110
  %v151 = vunpack.c.l.b16 %v111
  %v152 = vunpack.c.l.b16 %v112
  %v153 = vunpack.c.l.b16 %v113
  %v154 = vunpack.c.l.b16 %v114
  %v155 = vunpack.c.l.b16 %v115
  %v156 = vunpack.c.l.b16 %v116
  %v157 = vunpack.c.l.b16 %v117
  %v158 = vunpack.c.l.b16 %v118
  %v159 = vunpack.c.l.b16 %v119
  %v160 = vpack.c.b16 %v145, %v144
  %v161 = vpack.c.b16 %v147, %v146
  %v162 = vpack.c.b16 %v149, %v148
  %v163 = vpack.c.b16 %v151, %v150
  %v164 = vpack.c.b16 %v153, %v152
  %v165 = vpack.c.b16 %v155, %v154
  %v166 = vpack.c.b16 %v157, %v156
  %v167 = vpack.c.b16 %v159, %v158
  %176 = vmatprep.subr.bf16.mxu0 0
  %177 = vmatpush1.bf16.msra.mxu0 %v167
  %178 = vmatprep.subr.bf16.mxu0 0
  %179 = vmatpush1.bf16.msra.mxu0 %v166
  %180 = vmatprep.subr.bf16.mxu0 0
  %181 = vmatpush1.bf16.msra.mxu0 %v165
  %182 = vmatprep.subr.bf16.mxu0 0
  %183 = vmatpush1.bf16.msra.mxu0 %v164
  %184 = vmatprep.subr.bf16.mxu0 0
  %185 = vmatpush1.bf16.msra.mxu0 %v163
  %186 = vmatprep.subr.bf16.mxu0 0
  %187 = vmatpush1.bf16.msra.mxu0 %v162
  %188 = vmatprep.subr.bf16.mxu0 0
  %189 = vmatpush1.bf16.msra.mxu0 %v161
  %190 = vmatprep.subr.bf16.mxu0 0
  %191 = vmatpush1.bf16.msra.mxu0 %v160
  %192 = vmatprep.subr.bf16.mxu0 0
  %193 = vmatpush2.bf16.msra.mxu0 0
  %194 = vmatprep.subr.bf16.mxu0 0
  %195 = vmatpush2.bf16.msra.mxu0 0
  %196 = vmatprep.subr.bf16.mxu0 0
  %197 = vmatpush2.bf16.msra.mxu0 0
  %198 = vmatprep.subr.bf16.mxu0 0
  %199 = vmatpush2.bf16.msra.mxu0 0
  %200 = vmatprep.subr.bf16.mxu0 0
  %201 = vmatpush2.bf16.msra.mxu0 0
  %202 = vmatprep.subr.bf16.mxu0 0
  %203 = vmatpush2.bf16.msra.mxu0 0
  %204 = vmatprep.subr.bf16.mxu0 0
  %205 = vmatpush2.bf16.msra.mxu0 0
  %206 = vmatprep.subr.bf16.mxu0 0
  %207 = vmatpush2.bf16.msra.mxu0 0
  %208 = vmatprep.mubr.bf16.mxu0 0
  %209 = vmatmul.mubr.bf16.gmra.mxu0 %v120
  %v210 = vpop.f32.mrf.mxu0
  %v211 = vadd.f32 %v126, %v210
  %v212 = vpop.f32.mrf.mxu0
  %v213 = vpop.f32.mrf.mxu0
  %v214 = vadd.f32 %v126, %v213
  %v215 = vpop.f32.mrf.mxu0
  %216 = vdwg.mxu0
  %v217 = vunpack.c.l.bf16 %v27
  %v218 = vunpack.c.l.bf16 %v28
  %v219 = vadd.f32 %v211, %v217
  %v220 = vadd.f32 %v214, %v218
  %v221 = vld [vmem:[%s5] sm:$0x1]
  %v222 = vld [vmem:[%s6] sm:$0x1]
  %v223 = vsel %vm57, %v219, 0.0
  %224 = vadd.xlane.f32.xlu0 %v223
  %v225 = vpop.xlane.xlu0 %224
  %v226 = vsel %vm57, %v220, 0.0
  %227 = vadd.xlane.f32.xlu0 %v226
  %v228 = vpop.xlane.xlu0 %227
  %v229 = vrcp.pop 32.0
  %v230 = vmul.f32 %v225, %v229
  %v231 = vmul.f32 %v228, %v229
  %v232 = vsub.f32 %v219, %v230
  %v233 = vsub.f32 %v220, %v231
  %v234 = vmul.f32 %v232, %v232
  %v235 = vmul.f32 %v233, %v233
  %v236 = vsel %vm57, %v234, 0.0
  %237 = vadd.xlane.f32.xlu0 %v236
  %v238 = vpop.xlane.xlu0 %237
  %v239 = vsel %vm57, %v235, 0.0
  %240 = vadd.xlane.f32.xlu0 %v239
  %v241 = vpop.xlane.xlu0 %240
  %v242 = vmul.f32 %v238, %v229
  %v243 = vmul.f32 %v241, %v229
  %v244 = vadd.f32 %v242, 1e-05
  %v245 = vadd.f32 %v243, 1e-05
  %v246 = vrsqrt.pop %v244
  %v247 = vrsqrt.pop %v245
  %v248 = vmul.f32 %v232, %v246
  %v249 = vmul.f32 %v233, %v247
  %v251 = vlaneseq
  %v252 = vshrl.u32 %v251, 7
  %v253 = vsub.s32 0, %v252
  %v254 = vrot.slane %v221, %v253
  %v256 = vmul.f32 %v248, %v254
  %v257 = vmul.f32 %v249, %v254
  %v259 = vlaneseq
  %v260 = vshrl.u32 %v259, 7
  %v261 = vsub.s32 0, %v260
  %v262 = vrot.slane %v222, %v261
  %v264 = vadd.f32 %v256, %v262
  %v265 = vadd.f32 %v257, %v262
  %v266 = vpack.c.bf16 %v265, %v264
  %v268 = vunpack.c.l.b16 %v266
  %v269 = vunpack.c.h.b16 %v266
  %v270 = vpack.c.b16 %v268, %v268
  %v271 = vpack.c.b16 %v269, %v269
  %vm274 = vcmask 257024
  %275 = vst.msk [vmem:[%s7] sm:$0xf] %vm274, %v270
  %276 = vst.msk [vmem:[%s7 + $0x4] sm:$0xf] %vm274, %v271
  // Predicated region
  $region30: #{_lambda_.16} parent=0 // pred_check
    _
  $region31: #{_lambda_.16} parent=0 // pred_check_branch
    %278 = sbr.rel (0) target = $region33
  $region32: #{_lambda_.16} parent=0 // pred_region
    _
  $region33: #{_lambda_.16} parent=0 // pred_fallthru
    _
  // Predicated region
  $region34: #{_lambda_.16} parent=0 // pred_check
    _
  $region35: #{_lambda_.16} parent=0 // pred_check_branch
    %280 = sbr.rel (0) target = $region37
  $region36: #{_lambda_.16} parent=0 // pred_region
    _
  $region37: #{_lambda_.16} parent=0 // pred_fallthru
    _

// kernel: _lambda_.15
$region0: #{_lambda_.15}
  #allocation0 [shape = 'u32[]', space=smem, size = 0x4, offset = 0x4, fixed_abs, tag = 'smem constant byte address 0x4 - core index']
  #allocation1 [shape = 'u32[144,128]{1,0:T(1,128)}', space=vmem, size = 0x12000, scoped, tag = 'internal scratch']
  #allocation2 [shape = 'bf16[8,32]{1,0:T(8,128)(2,1)}', space=vmem, size = 0x800, scoped, tag = 'scratch operand']
  %s0 = inlined_call_operand.vmem [shape: bf16[2,8,32], index: 0, kind: input, shape index: {}]
  %s1 = inlined_call_operand.vmem [shape: bf16[32,96], index: 1, kind: input, shape index: {}]
  %s2 = inlined_call_operand.vmem [shape: f32[1,96], index: 2, kind: input, shape index: {}]
  %s3 = inlined_call_operand.vmem [shape: bf16[32,32], index: 3, kind: input, shape index: {}]
  %s4 = inlined_call_operand.vmem [shape: f32[1,32], index: 4, kind: input, shape index: {}]
  %s5 = inlined_call_operand.vmem [shape: f32[1,32], index: 5, kind: input, shape index: {}]
  %s6 = inlined_call_operand.vmem [shape: f32[1,32], index: 6, kind: input, shape index: {}]
  %s7 = inlined_call_operand.vmem [shape: bf16[2,8,32], index: 7, kind: output, shape index: {}]
  %s8 = sld [smem:[#allocation0]]
  $region61: #{_lambda_.15} parent=0
    _
  %s10 = ssub.s32 1, %s8
  %s11 = scalar_select 0, %s10, %s8
  loop: start=0, step=1, limit=4
  $region2: #{_lambda_.15} parent=0 // loop_pre_header
    _
  $region3: #{_lambda_.15} parent=0 // loop_header
    %s13 = sphi 0, %s17
    %p14 = scmp.ge.s32.totalorder %s13, 4
    %s23 = sphi 0, %s25
    %s26 = sphi 0, %s23
    %s27 = sphi 0, %s26
    %s43 = sphi 0, %s27
    %s47 = sphi 0, %s47
    %s49 = sphi 0, %s47
    %s50 = sphi 0, %s49
    %s64 = sphi 0, %s50
    %s68 = sphi 0, %s68
    %s70 = sphi 0, %s68
    %s71 = sphi 0, %s70
    %s85 = sphi 0, %s71
    %s89 = sphi 0, %s89
    %s91 = sphi 0, %s89
    %s92 = sphi 0, %s91
    %s106 = sphi 0, %s92
    %s110 = sphi 0, %s110
    %s112 = sphi 0, %s110
    %s113 = sphi 0, %s112
    %s127 = sphi 0, %s113
    %s131 = sphi 0, %s131
    %s133 = sphi 0, %s131
    %s134 = sphi 0, %s133
    %s148 = sphi 0, %s134
    %s152 = sphi 0, %s152
    %s154 = sphi 0, %s152
    %s155 = sphi 0, %s154
    %s169 = sphi 0, %s155
    %s175 = sphi 0, %s177
    %s178 = sphi 0, %s175
    %s179 = sphi 0, %s178
    %s195 = sphi 0, %s179
  $region4: #{_lambda_.15} parent=0 // loop_header_branch
    %16 = sbr.rel (%p14) target = $region8
  $region5: #{_lambda_.15} parent=0 // loop_body
    %s18 = ssub.s32 %s13, 1
    %s19 = ssub.s32 %s13, 2
    %s20 = sadd.s32 %s13, 1
    %s21 = ssub.s32 %s13, %s20
    %p22 = scmp.eq.s32.totalorder %s21, 0
    %s24 = sadd.s32 %s23, 1
    %s25 = scalar_select %p22, %s23, %s24
    %p28 = pneg %p22
    %p29 = scmp.eq.s32.totalorder %s13, 1
    %p30 = por %p28, %p29
    %p31 = scmp.ne.s32.totalorder %s23, %s26
    %p32 = scmp.eq.s32.totalorder %s13, 0
    %p33 = por %p31, %p32
    %p34 = scmp.ne.s32.totalorder %s23, %s26
    %p35 = scmp.eq.s32.totalorder %s18, 1
    %p36 = por %p34, %p35
    %p37 = scmp.ne.s32.totalorder %s26, %s27
    %p38 = scmp.eq.s32.totalorder %s18, 0
    %p39 = por %p37, %p38
    %p40 = scmp.ne.s32.totalorder %s26, %s27
    %p41 = scmp.eq.s32.totalorder %s19, 1
    %p42 = por %p40, %p41
    %p44 = scmp.ne.s32.totalorder %s27, %s43
    %p45 = scmp.eq.s32.totalorder %s19, 0
    %p46 = por %p44, %p45
    %s48 = sadd.s32 %s47, 1
    %p51 = scmp.eq.s32.totalorder %s13, 1
    %p52 = scmp.ne.s32.totalorder %s47, %s49
    %p53 = scmp.eq.s32.totalorder %s13, 0
    %p54 = por %p52, %p53
    %p55 = scmp.ne.s32.totalorder %s47, %s49
    %p56 = scmp.eq.s32.totalorder %s18, 1
    %p57 = por %p55, %p56
    %p58 = scmp.ne.s32.totalorder %s49, %s50
    %p59 = scmp.eq.s32.totalorder %s18, 0
    %p60 = por %p58, %p59
    %p61 = scmp.ne.s32.totalorder %s49, %s50
    %p62 = scmp.eq.s32.totalorder %s19, 1
    %p63 = por %p61, %p62
    %p65 = scmp.ne.s32.totalorder %s50, %s64
    %p66 = scmp.eq.s32.totalorder %s19, 0
    %p67 = por %p65, %p66
    %s69 = sadd.s32 %s68, 1
    %p72 = scmp.eq.s32.totalorder %s13, 1
    %p73 = scmp.ne.s32.totalorder %s68, %s70
    %p74 = scmp.eq.s32.totalorder %s13, 0
    %p75 = por %p73, %p74
    %p76 = scmp.ne.s32.totalorder %s68, %s70
    %p77 = scmp.eq.s32.totalorder %s18, 1
    %p78 = por %p76, %p77
    %p79 = scmp.ne.s32.totalorder %s70, %s71
    %p80 = scmp.eq.s32.totalorder %s18, 0
    %p81 = por %p79, %p80
    %p82 = scmp.ne.s32.totalorder %s70, %s71
    %p83 = scmp.eq.s32.totalorder %s19, 1
    %p84 = por %p82, %p83
    %p86 = scmp.ne.s32.totalorder %s71, %s85
    %p87 = scmp.eq.s32.totalorder %s19, 0
    %p88 = por %p86, %p87
    %s90 = sadd.s32 %s89, 1
    %p93 = scmp.eq.s32.totalorder %s13, 1
    %p94 = scmp.ne.s32.totalorder %s89, %s91
    %p95 = scmp.eq.s32.totalorder %s13, 0
    %p96 = por %p94, %p95
    %p97 = scmp.ne.s32.totalorder %s89, %s91
    %p98 = scmp.eq.s32.totalorder %s18, 1
    %p99 = por %p97, %p98
    %p100 = scmp.ne.s32.totalorder %s91, %s92
    %p101 = scmp.eq.s32.totalorder %s18, 0
    %p102 = por %p100, %p101
    %p103 = scmp.ne.s32.totalorder %s91, %s92
    %p104 = scmp.eq.s32.totalorder %s19, 1
    %p105 = por %p103, %p104
    %p107 = scmp.ne.s32.totalorder %s92, %s106
    %p108 = scmp.eq.s32.totalorder %s19, 0
    %p109 = por %p107, %p108
    %s111 = sadd.s32 %s110, 1
    %p114 = scmp.eq.s32.totalorder %s13, 1
    %p115 = scmp.ne.s32.totalorder %s110, %s112
    %p116 = scmp.eq.s32.totalorder %s13, 0
    %p117 = por %p115, %p116
    %p118 = scmp.ne.s32.totalorder %s110, %s112
    %p119 = scmp.eq.s32.totalorder %s18, 1
    %p120 = por %p118, %p119
    %p121 = scmp.ne.s32.totalorder %s112, %s113
    %p122 = scmp.eq.s32.totalorder %s18, 0
    %p123 = por %p121, %p122
    %p124 = scmp.ne.s32.totalorder %s112, %s113
    %p125 = scmp.eq.s32.totalorder %s19, 1
    %p126 = por %p124, %p125
    %p128 = scmp.ne.s32.totalorder %s113, %s127
    %p129 = scmp.eq.s32.totalorder %s19, 0
    %p130 = por %p128, %p129
    %s132 = sadd.s32 %s131, 1
    %p135 = scmp.eq.s32.totalorder %s13, 1
    %p136 = scmp.ne.s32.totalorder %s131, %s133
    %p137 = scmp.eq.s32.totalorder %s13, 0
    %p138 = por %p136, %p137
    %p139 = scmp.ne.s32.totalorder %s131, %s133
    %p140 = scmp.eq.s32.totalorder %s18, 1
    %p141 = por %p139, %p140
    %p142 = scmp.ne.s32.totalorder %s133, %s134
    %p143 = scmp.eq.s32.totalorder %s18, 0
    %p144 = por %p142, %p143
    %p145 = scmp.ne.s32.totalorder %s133, %s134
    %p146 = scmp.eq.s32.totalorder %s19, 1
    %p147 = por %p145, %p146
    %p149 = scmp.ne.s32.totalorder %s134, %s148
    %p150 = scmp.eq.s32.totalorder %s19, 0
    %p151 = por %p149, %p150
    %s153 = sadd.s32 %s152, 1
    %p156 = scmp.eq.s32.totalorder %s13, 1
    %p157 = scmp.ne.s32.totalorder %s152, %s154
    %p158 = scmp.eq.s32.totalorder %s13, 0
    %p159 = por %p157, %p158
    %p160 = scmp.ne.s32.totalorder %s152, %s154
    %p161 = scmp.eq.s32.totalorder %s18, 1
    %p162 = por %p160, %p161
    %p163 = scmp.ne.s32.totalorder %s154, %s155
    %p164 = scmp.eq.s32.totalorder %s18, 0
    %p165 = por %p163, %p164
    %p166 = scmp.ne.s32.totalorder %s154, %s155
    %p167 = scmp.eq.s32.totalorder %s19, 1
    %p168 = por %p166, %p167
    %p170 = scmp.ne.s32.totalorder %s155, %s169
    %p171 = scmp.eq.s32.totalorder %s19, 0
    %p172 = por %p170, %p171
    %s173 = ssub.s32 %s13, %s20
    %p174 = scmp.eq.s32.totalorder %s173, 0
    %s176 = sadd.s32 %s175, 1
    %s177 = scalar_select %p174, %s175, %s176
    %p180 = pneg %p174
    %p181 = scmp.eq.s32.totalorder %s13, 1
    %p182 = por %p180, %p181
    %p183 = scmp.ne.s32.totalorder %s175, %s178
    %p184 = scmp.eq.s32.totalorder %s13, 0
    %p185 = por %p183, %p184
    %p186 = scmp.ne.s32.totalorder %s175, %s178
    %p187 = scmp.eq.s32.totalorder %s18, 1
    %p188 = por %p186, %p187
    %p189 = scmp.ne.s32.totalorder %s178, %s179
    %p190 = scmp.eq.s32.totalorder %s18, 0
    %p191 = por %p189, %p190
    %p192 = scmp.ne.s32.totalorder %s178, %s179
    %p193 = scmp.eq.s32.totalorder %s19, 1
    %p194 = por %p192, %p193
    %p196 = scmp.ne.s32.totalorder %s179, %s195
    %p197 = scmp.eq.s32.totalorder %s19, 0
    %p198 = por %p196, %p197
    %p199 = scmp.le.s32.totalorder 1, %s13
    %p200 = scmp.lt.s32.totalorder %s13, 3
    %p201 = pnand %p199, %p200
    %p202 = pneg %p201
    // Predicated region
    $region9: #{_lambda_.15} parent=5 // pred_check
      _
    $region10: #{_lambda_.15} parent=5 // pred_check_branch
      %204 = sbr.rel (%p201) target = $region12
    $region11: #{_lambda_.15} parent=5 // pred_region
      %s205 = ssub.s32 %s13, 1
      // Predicated region
      $region13: #{_lambda_.15} parent=11 // pred_check
        %p206 = pneg %p60
      $region14: #{_lambda_.15} parent=11 // pred_check_branch
        %208 = sbr.rel (%p206) target = $region16
      $region15: #{_lambda_.15} parent=11 // pred_region
        _
      $region16: #{_lambda_.15} parent=11 // pred_fallthru
        _
      // Predicated region
      $region17: #{_lambda_.15} parent=11 // pred_check
        %p209 = pneg %p81
      $region18: #{_lambda_.15} parent=11 // pred_check_branch
        %211 = sbr.rel (%p209) target = $region20
      $region19: #{_lambda_.15} parent=11 // pred_region
        _
      $region20: #{_lambda_.15} parent=11 // pred_fallthru
        _
      // Predicated region
      $region21: #{_lambda_.15} parent=11 // pred_check
        %p212 = pneg %p102
      $region22: #{_lambda_.15} parent=11 // pred_check_branch
        %214 = sbr.rel (%p212) target = $region24
      $region23: #{_lambda_.15} parent=11 // pred_region
        _
      $region24: #{_lambda_.15} parent=11 // pred_fallthru
        _
      // Predicated region
      $region25: #{_lambda_.15} parent=11 // pred_check
        %p215 = pneg %p123
      $region26: #{_lambda_.15} parent=11 // pred_check_branch
        %217 = sbr.rel (%p215) target = $region28
      $region27: #{_lambda_.15} parent=11 // pred_region
        _
      $region28: #{_lambda_.15} parent=11 // pred_fallthru
        _
      // Predicated region
      $region29: #{_lambda_.15} parent=11 // pred_check
        %p218 = pneg %p144
      $region30: #{_lambda_.15} parent=11 // pred_check_branch
        %220 = sbr.rel (%p218) target = $region32
      $region31: #{_lambda_.15} parent=11 // pred_region
        _
      $region32: #{_lambda_.15} parent=11 // pred_fallthru
        _
      // Predicated region
      $region33: #{_lambda_.15} parent=11 // pred_check
        %p221 = pneg %p165
      $region34: #{_lambda_.15} parent=11 // pred_check_branch
        %223 = sbr.rel (%p221) target = $region36
      $region35: #{_lambda_.15} parent=11 // pred_region
        _
      $region36: #{_lambda_.15} parent=11 // pred_fallthru
        _
    $region12: #{_lambda_.15} parent=5 // pred_fallthru
      _
    %p224 = scmp.lt.s32.totalorder %s13, 2
    // Predicated region
    $region37: #{_lambda_.15} parent=5 // pred_check
      %p225 = pneg %p224
    $region38: #{_lambda_.15} parent=5 // pred_check_branch
      %227 = sbr.rel (%p225) target = $region40
    $region39: #{_lambda_.15} parent=5 // pred_region
      // Predicated region
      $region41: #{_lambda_.15} parent=39 // pred_check
        %p228 = pneg %p33
      $region42: #{_lambda_.15} parent=39 // pred_check_branch
        %230 = sbr.rel (%p228) target = $region44
      $region43: #{_lambda_.15} parent=39 // pred_region
        %p231 = scmp.lt.s32.totalorder %s13, 1
        %s232 = scalar_select %p231, %s13, 1
        %s233 = smul.addr %s232, 4
        %s234 = scalar_lea.vmem %s0, %s233
      $region44: #{_lambda_.15} parent=39 // pred_fallthru
        _
    $region40: #{_lambda_.15} parent=5 // pred_fallthru
      _
    %p235 = scmp.le.s32.totalorder 1, %s13
    %p236 = scmp.lt.s32.totalorder %s13, 3
    %p237 = pnand %p235, %p236
    %p238 = pneg %p237
    // Predicated region
    $region45: #{_lambda_.15} parent=5 // pred_check
      _
    $region46: #{_lambda_.15} parent=5 // pred_check_branch
      %240 = sbr.rel (%p237) target = $region48
    $region47: #{_lambda_.15} parent=5 // pred_region
      %s241 = ssub.s32 %s13, 1
      %p242 = scmp.lt.s32.totalorder %s18, 1
      %s243 = scalar_select %p242, %s18, 1
      %s244 = smul.addr %s243, 4
      %s245 = scalar_lea.vmem %s0, %s244
      %p246 = pneg %p39
      %p247 = pneg %p36
      %p248 = pneg %p60
      %p249 = pneg %p57
      %p250 = pneg %p81
      %p251 = pneg %p78
      %p252 = pneg %p102
      %p253 = pneg %p99
      %p254 = pneg %p123
      %p255 = pneg %p120
      %p256 = pneg %p144
      %p257 = pneg %p141
      %p258 = pneg %p165
      %p259 = pneg %p162
      %p260 = pneg %p191
      %p261 = pneg %p188
      %p262 = scmp.lt.s32.totalorder %s18, 1
      %s263 = scalar_select %p262, %s18, 1
      %s264 = smul.addr %s263, 4
      %s265 = scalar_lea.vmem %s7, %s264
      %p266 = scmp.lt.s32.totalorder %s18, 1
      %s267 = scalar_select %p266, %s18, 1
      %s268 = smul.addr %s267, 4
      %s269 = scalar_lea.vmem %s0, %s268
      %p270 = scmp.lt.s32.totalorder %s18, 1
      %s271 = scalar_select %p270, %s18, 1
      %s272 = smul.addr %s271, 4
      %s273 = scalar_lea.vmem %s7, %s272
      %v275 = vld [vmem:[%s269] sm:$0xf]
      %v276 = vld [vmem:[%s1] sm:$0xf]
      %v277 = vld [vmem:[%s1 + $0x4] sm:$0xf]
      %v278 = vld [vmem:[%s1 + $0x8] sm:$0xf]
      %v279 = vld [vmem:[%s1 + $0xc] sm:$0xf]
      %v280 = vld [vmem:[%s2] sm:$0x1]
      %v282 = vlaneseq
      %v283 = vshrl.u32 %v282, 7
      %v284 = vsub.s32 0, %v283
      %v285 = vrot.slane %v280, %v284
      %v291 = vunpack.c.l.b16 %v276
      %v292 = vunpack.c.l.b16 %v277
      %v293 = vunpack.c.l.b16 %v278
      %v294 = vunpack.c.l.b16 %v279
      %v295 = vpack.c.b16 %v292, %v291
      %v296 = vpack.c.b16 %v294, %v293
      %vm299 = vcmask 261120
      %v301 = vsel %vm299, %v275, 0
      %303 = vmatprep.subr.bf16.mxu0 0
      %304 = vmatpush1.bf16.msra.mxu0 0
      %305 = vmatprep.subr.bf16.mxu0 0
      %306 = vmatpush1.bf16.msra.mxu0 0
      %307 = vmatprep.subr.bf16.mxu0 0
      %308 = vmatpush1.bf16.msra.mxu0 0
      %309 = vmatprep.subr.bf16.mxu0 0
      %310 = vmatpush1.bf16.msra.mxu0 0
      %311 = vmatprep.subr.bf16.mxu0 0
      %312 = vmatpush1.bf16.msra.mxu0 0
      %313 = vmatprep.subr.bf16.mxu0 0
      %314 = vmatpush1.bf16.msra.mxu0 0
      %315 = vmatprep.subr.bf16.mxu0 0
      %316 = vmatpush1.bf16.msra.mxu0 %v296
      %317 = vmatprep.subr.bf16.mxu0 0
      %318 = vmatpush1.bf16.msra.mxu0 %v295
      %319 = vmatprep.subr.bf16.mxu0 0
      %320 = vmatpush2.bf16.msra.mxu0 0
      %321 = vmatprep.subr.bf16.mxu0 0
      %322 = vmatpush2.bf16.msra.mxu0 0
      %323 = vmatprep.subr.bf16.mxu0 0
      %324 = vmatpush2.bf16.msra.mxu0 0
      %325 = vmatprep.subr.bf16.mxu0 0
      %326 = vmatpush2.bf16.msra.mxu0 0
      %327 = vmatprep.subr.bf16.mxu0 0
      %328 = vmatpush2.bf16.msra.mxu0 0
      %329 = vmatprep.subr.bf16.mxu0 0
      %330 = vmatpush2.bf16.msra.mxu0 0
      %331 = vmatprep.subr.bf16.mxu0 0
      %332 = vmatpush2.bf16.msra.mxu0 0
      %333 = vmatprep.subr.bf16.mxu0 0
      %334 = vmatpush2.bf16.msra.mxu0 0
      %335 = vmatprep.mubr.bf16.mxu0 0
      %336 = vmatmul.mubr.bf16.gmra.mxu0 %v301
      %v337 = vpop.f32.mrf.mxu0
      %v338 = vadd.f32 %v285, %v337
      %v339 = vpop.f32.mrf.mxu0
      %v340 = vpop.f32.mrf.mxu0
      %v341 = vpop.f32.mrf.mxu0
      %342 = vdwg.mxu0
      %v343 = vmul.f32 %v338, 0.35355338
      %v344 = vpack.c.bf16 %v343, %v343
      %v345 = vpack.c.bf16 %v338, %v338
      %347 = vrot.lane.b32.xlu0 %v345, 96
      %v348 = vpop.permute.xlu0 %347
      %vm349 = vcmask 64512
      %v351 = vsel %vm349, %v344, 0
      %v354 = vsel %vm349, %v348, 0
      %356 = vmatprep.subr.bf16.mxu0 0
      %357 = vmatpush1.bf16.xpose.msra.mxu0 0
      %358 = vmatprep.subr.bf16.mxu0 0
      %359 = vmatpush1.bf16.xpose.msra.mxu0 0
      %360 = vmatprep.subr.bf16.mxu0 0
      %361 = vmatpush1.bf16.xpose.msra.mxu0 0
      %362 = vmatprep.subr.bf16.mxu0 0
      %363 = vmatpush1.bf16.xpose.msra.mxu0 0
      %364 = vmatprep.subr.bf16.mxu0 0
      %365 = vmatpush1.bf16.xpose.msra.mxu0 0
      %366 = vmatprep.subr.bf16.mxu0 0
      %367 = vmatpush1.bf16.xpose.msra.mxu0 0
      %368 = vmatprep.subr.bf16.mxu0 0
      %369 = vmatpush1.bf16.xpose.msra.mxu0 0
      %370 = vmatprep.subr.bf16.mxu0 0
      %371 = vmatpush1.bf16.xpose.msra.mxu0 %v354
      %372 = vmatprep.subr.bf16.mxu0 0
      %373 = vmatpush2.bf16.xpose.msra.mxu0 0
      %374 = vmatprep.subr.bf16.mxu0 0
      %375 = vmatpush2.bf16.xpose.msra.mxu0 0
      %376 = vmatprep.subr.bf16.mxu0 0
      %377 = vmatpush2.bf16.xpose.msra.mxu0 0
      %378 = vmatprep.subr.bf16.mxu0 0
      %379 = vmatpush2.bf16.xpose.msra.mxu0 0
      %380 = vmatprep.subr.bf16.mxu0 0
      %381 = vmatpush2.bf16.xpose.msra.mxu0 0
      %382 = vmatprep.subr.bf16.mxu0 0
      %383 = vmatpush2.bf16.xpose.msra.mxu0 0
      %384 = vmatprep.subr.bf16.mxu0 0
      %385 = vmatpush2.bf16.xpose.msra.mxu0 0
      %386 = vmatprep.subr.bf16.mxu0 0
      %387 = vmatpush2.bf16.xpose.msra.mxu0 0
      %388 = vmatprep.mubr.bf16.mxu0 0
      %389 = vmatmul.mubr.bf16.gmra.mxu0 %v351
      %v390 = vpop.f32.mrf.mxu0
      %v391 = vadd.f32 0.0, %v390
      %v392 = vpop.f32.mrf.mxu0
      %v393 = vpop.f32.mrf.mxu0
      %v394 = vpop.f32.mrf.mxu0
      %395 = vdwg.mxu0
      %v396 = vsel %vm349, %v391, -inf
      %397 = vmax.xlane.f32.xlu0 %v396
      %v398 = vpop.xlane.xlu0 %397
      %v399 = vsub.f32 %v391, %v398
      %v400 = vmul.f32 %v399, 1.442695
      %v401 = vpow.pop %v400
      %v402 = vsel %vm349, %v401, 0.0
      %403 = vadd.xlane.f32.xlu0 %v402
      %v404 = vpop.xlane.xlu0 %403
      %v405 = vrcp.pop %v404
      %v406 = vmul.f32 %v401, %v405
      %v407 = vpack.c.bf16 %v406, %v406
      %408 = vrot.lane.b32.xlu0 %v345, 64
      %v409 = vpop.permute.xlu0 %408
      %v411 = vsel %vm349, %v407, 0
      %vm413 = vcmask 1043456
      %v415 = vsel %vm413, %v409, 0
      %417 = vmatprep.subr.bf16.mxu0 0
      %418 = vmatpush1.bf16.msra.mxu0 0
      %419 = vmatprep.subr.bf16.mxu0 0
      %420 = vmatpush1.bf16.msra.mxu0 0
      %421 = vmatprep.subr.bf16.mxu0 0
      %422 = vmatpush1.bf16.msra.mxu0 0
      %423 = vmatprep.subr.bf16.mxu0 0
      %424 = vmatpush1.bf16.msra.mxu0 0
      %425 = vmatprep.subr.bf16.mxu0 0
      %426 = vmatpush1.bf16.msra.mxu0 0
      %427 = vmatprep.subr.bf16.mxu0 0
      %428 = vmatpush1.bf16.msra.mxu0 0
      %429 = vmatprep.subr.bf16.mxu0 0
      %430 = vmatpush1.bf16.msra.mxu0 0
      %431 = vmatprep.subr.bf16.mxu0 0
      %432 = vmatpush1.bf16.msra.mxu0 %v415
      %433 = vmatprep.subr.bf16.mxu0 0
      %434 = vmatpush2.bf16.msra.mxu0 0
      %435 = vmatprep.subr.bf16.mxu0 0
      %436 = vmatpush2.bf16.msra.mxu0 0
      %437 = vmatprep.subr.bf16.mxu0 0
      %438 = vmatpush2.bf16.msra.mxu0 0
      %439 = vmatprep.subr.bf16.mxu0 0
      %440 = vmatpush2.bf16.msra.mxu0 0
      %441 = vmatprep.subr.bf16.mxu0 0
      %442 = vmatpush2.bf16.msra.mxu0 0
      %443 = vmatprep.subr.bf16.mxu0 0
      %444 = vmatpush2.bf16.msra.mxu0 0
      %445 = vmatprep.subr.bf16.mxu0 0
      %446 = vmatpush2.bf16.msra.mxu0 0
      %447 = vmatprep.subr.bf16.mxu0 0
      %448 = vmatpush2.bf16.msra.mxu0 0
      %449 = vmatprep.mubr.bf16.mxu0 0
      %450 = vmatmul.mubr.bf16.gmra.mxu0 %v411
      %v451 = vpop.f32.mrf.mxu0
      %v452 = vadd.f32 0.0, %v451
      %v453 = vpop.f32.mrf.mxu0
      %v454 = vpop.f32.mrf.mxu0
      %v455 = vpop.f32.mrf.mxu0
      %456 = vdwg.mxu0
      %v457 = vpack.c.bf16 %v452, %v452
      %vm458 = vcmask 60416
      %459 = vst.msk [vmem:[#allocation2] sm:$0xf] %vm458, %v457
      %461 = vrot.lane.b32.xlu0 %v344, 120
      %v462 = vpop.permute.xlu0 %461
      %463 = vrot.lane.b32.xlu0 %v345, 88
      %v464 = vpop.permute.xlu0 %463
      %v466 = vsel %vm349, %v462, 0
      %v469 = vsel %vm349, %v464, 0
      %471 = vmatprep.subr.bf16.mxu0 0
      %472 = vmatpush1.bf16.xpose.msra.mxu0 0
      %473 = vmatprep.subr.bf16.mxu0 0
      %474 = vmatpush1.bf16.xpose.msra.mxu0 0
      %475 = vmatprep.subr.bf16.mxu0 0
      %476 = vmatpush1.bf16.xpose.msra.mxu0 0
      %477 = vmatprep.subr.bf16.mxu0 0
      %478 = vmatpush1.bf16.xpose.msra.mxu0 0
      %479 = vmatprep.subr.bf16.mxu0 0
      %480 = vmatpush1.bf16.xpose.msra.mxu0 0
      %481 = vmatprep.subr.bf16.mxu0 0
      %482 = vmatpush1.bf16.xpose.msra.mxu0 0
      %483 = vmatprep.subr.bf16.mxu0 0
      %484 = vmatpush1.bf16.xpose.msra.mxu0 0
      %485 = vmatprep.subr.bf16.mxu0 0
      %486 = vmatpush1.bf16.xpose.msra.mxu0 %v469
      %487 = vmatprep.subr.bf16.mxu0 0
      %488 = vmatpush2.bf16.xpose.msra.mxu0 0
      %489 = vmatprep.subr.bf16.mxu0 0
      %490 = vmatpush2.bf16.xpose.msra.mxu0 0
      %491 = vmatprep.subr.bf16.mxu0 0
      %492 = vmatpush2.bf16.xpose.msra.mxu0 0
      %493 = vmatprep.subr.bf16.mxu0 0
      %494 = vmatpush2.bf16.xpose.msra.mxu0 0
      %495 = vmatprep.subr.bf16.mxu0 0
      %496 = vmatpush2.bf16.xpose.msra.mxu0 0
      %497 = vmatprep.subr.bf16.mxu0 0
      %498 = vmatpush2.bf16.xpose.msra.mxu0 0
      %499 = vmatprep.subr.bf16.mxu0 0
      %500 = vmatpush2.bf16.xpose.msra.mxu0 0
      %501 = vmatprep.subr.bf16.mxu0 0
      %502 = vmatpush2.bf16.xpose.msra.mxu0 0
      %503 = vmatprep.mubr.bf16.mxu0 0
      %504 = vmatmul.mubr.bf16.gmra.mxu0 %v466
      %v505 = vpop.f32.mrf.mxu0
      %v506 = vadd.f32 0.0, %v505
      %v507 = vpop.f32.mrf.mxu0
      %v508 = vpop.f32.mrf.mxu0
      %v509 = vpop.f32.mrf.mxu0
      %510 = vdwg.mxu0
      %v511 = vsel %vm349, %v506, -inf
      %512 = vmax.xlane.f32.xlu0 %v511
      %v513 = vpop.xlane.xlu0 %512
      %v514 = vsub.f32 %v506, %v513
      %v515 = vmul.f32 %v514, 1.442695
      %v516 = vpow.pop %v515
      %v517 = vsel %vm349, %v516, 0.0
      %518 = vadd.xlane.f32.xlu0 %v517
      %v519 = vpop.xlane.xlu0 %518
      %v520 = vrcp.pop %v519
      %v521 = vmul.f32 %v516, %v520
      %v522 = vpack.c.bf16 %v521, %v521
      %523 = vrot.lane.b32.xlu0 %v345, 56
      %v524 = vpop.permute.xlu0 %523
      %v526 = vsel %vm349, %v522, 0
      %v529 = vsel %vm413, %v524, 0
      %531 = vmatprep.subr.bf16.mxu0 0
      %532 = vmatpush1.bf16.msra.mxu0 0
      %533 = vmatprep.subr.bf16.mxu0 0
      %534 = vmatpush1.bf16.msra.mxu0 0
      %535 = vmatprep.subr.bf16.mxu0 0
      %536 = vmatpush1.bf16.msra.mxu0 0
      %537 = vmatprep.subr.bf16.mxu0 0
      %538 = vmatpush1.bf16.msra.mxu0 0
      %539 = vmatprep.subr.bf16.mxu0 0
      %540 = vmatpush1.bf16.msra.mxu0 0
      %541 = vmatprep.subr.bf16.mxu0 0
      %542 = vmatpush1.bf16.msra.mxu0 0
      %543 = vmatprep.subr.bf16.mxu0 0
      %544 = vmatpush1.bf16.msra.mxu0 0
      %545 = vmatprep.subr.bf16.mxu0 0
      %546 = vmatpush1.bf16.msra.mxu0 %v529
      %547 = vmatprep.subr.bf16.mxu0 0
      %548 = vmatpush2.bf16.msra.mxu0 0
      %549 = vmatprep.subr.bf16.mxu0 0
      %550 = vmatpush2.bf16.msra.mxu0 0
      %551 = vmatprep.subr.bf16.mxu0 0
      %552 = vmatpush2.bf16.msra.mxu0 0
      %553 = vmatprep.subr.bf16.mxu0 0
      %554 = vmatpush2.bf16.msra.mxu0 0
      %555 = vmatprep.subr.bf16.mxu0 0
      %556 = vmatpush2.bf16.msra.mxu0 0
      %557 = vmatprep.subr.bf16.mxu0 0
      %558 = vmatpush2.bf16.msra.mxu0 0
      %559 = vmatprep.subr.bf16.mxu0 0
      %560 = vmatpush2.bf16.msra.mxu0 0
      %561 = vmatprep.subr.bf16.mxu0 0
      %562 = vmatpush2.bf16.msra.mxu0 0
      %563 = vmatprep.mubr.bf16.mxu0 0
      %564 = vmatmul.mubr.bf16.gmra.mxu0 %v526
      %v565 = vpop.f32.mrf.mxu0
      %v566 = vadd.f32 0.0, %v565
      %v567 = vpop.f32.mrf.mxu0
      %v568 = vpop.f32.mrf.mxu0
      %v569 = vpop.f32.mrf.mxu0
      %570 = vdwg.mxu0
      %v571 = vpack.c.bf16 %v566, %v566
      %v573 = vunpack.c.l.b16 %v571
      %v574 = vpack.c.b16 %v573, %v573
      %575 = vrot.lane.b32.xlu0 %v574, 8
      %v576 = vpop.permute.xlu0 %575
      %vm578 = vcmask 126016
      %579 = vst.msk [vmem:[#allocation2] sm:$0xf] %vm578, %v576
      %580 = vrot.lane.b32.xlu0 %v344, 112
      %v581 = vpop.permute.xlu0 %580
      %582 = vrot.lane.b32.xlu0 %v345, 80
      %v583 = vpop.permute.xlu0 %582
      %v585 = vsel %vm349, %v581, 0
      %v588 = vsel %vm349, %v583, 0
      %590 = vmatprep.subr.bf16.mxu0 0
      %591 = vmatpush1.bf16.xpose.msra.mxu0 0
      %592 = vmatprep.subr.bf16.mxu0 0
      %593 = vmatpush1.bf16.xpose.msra.mxu0 0
      %594 = vmatprep.subr.bf16.mxu0 0
      %595 = vmatpush1.bf16.xpose.msra.mxu0 0
      %596 = vmatprep.subr.bf16.mxu0 0
      %597 = vmatpush1.bf16.xpose.msra.mxu0 0
      %598 = vmatprep.subr.bf16.mxu0 0
      %599 = vmatpush1.bf16.xpose.msra.mxu0 0
      %600 = vmatprep.subr.bf16.mxu0 0
      %601 = vmatpush1.bf16.xpose.msra.mxu0 0
      %602 = vmatprep.subr.bf16.mxu0 0
      %603 = vmatpush1.bf16.xpose.msra.mxu0 0
      %604 = vmatprep.subr.bf16.mxu0 0
      %605 = vmatpush1.bf16.xpose.msra.mxu0 %v588
      %606 = vmatprep.subr.bf16.mxu0 0
      %607 = vmatpush2.bf16.xpose.msra.mxu0 0
      %608 = vmatprep.subr.bf16.mxu0 0
      %609 = vmatpush2.bf16.xpose.msra.mxu0 0
      %610 = vmatprep.subr.bf16.mxu0 0
      %611 = vmatpush2.bf16.xpose.msra.mxu0 0
      %612 = vmatprep.subr.bf16.mxu0 0
      %613 = vmatpush2.bf16.xpose.msra.mxu0 0
      %614 = vmatprep.subr.bf16.mxu0 0
      %615 = vmatpush2.bf16.xpose.msra.mxu0 0
      %616 = vmatprep.subr.bf16.mxu0 0
      %617 = vmatpush2.bf16.xpose.msra.mxu0 0
      %618 = vmatprep.subr.bf16.mxu0 0
      %619 = vmatpush2.bf16.xpose.msra.mxu0 0
      %620 = vmatprep.subr.bf16.mxu0 0
      %621 = vmatpush2.bf16.xpose.msra.mxu0 0
      %622 = vmatprep.mubr.bf16.mxu0 0
      %623 = vmatmul.mubr.bf16.gmra.mxu0 %v585
      %v624 = vpop.f32.mrf.mxu0
      %v625 = vadd.f32 0.0, %v624
      %v626 = vpop.f32.mrf.mxu0
      %v627 = vpop.f32.mrf.mxu0
      %v628 = vpop.f32.mrf.mxu0
      %629 = vdwg.mxu0
      %v630 = vsel %vm349, %v625, -inf
      %631 = vmax.xlane.f32.xlu0 %v630
      %v632 = vpop.xlane.xlu0 %631
      %v633 = vsub.f32 %v625, %v632
      %v634 = vmul.f32 %v633, 1.442695
      %v635 = vpow.pop %v634
      %v636 = vsel %vm349, %v635, 0.0
      %637 = vadd.xlane.f32.xlu0 %v636
      %v638 = vpop.xlane.xlu0 %637
      %v639 = vrcp.pop %v638
      %v640 = vmul.f32 %v635, %v639
      %v641 = vpack.c.bf16 %v640, %v640
      %642 = vrot.lane.b32.xlu0 %v345, 48
      %v643 = vpop.permute.xlu0 %642
      %v645 = vsel %vm349, %v641, 0
      %v648 = vsel %vm413, %v643, 0
      %650 = vmatprep.subr.bf16.mxu0 0
      %651 = vmatpush1.bf16.msra.mxu0 0
      %652 = vmatprep.subr.bf16.mxu0 0
      %653 = vmatpush1.bf16.msra.mxu0 0
      %654 = vmatprep.subr.bf16.mxu0 0
      %655 = vmatpush1.bf16.msra.mxu0 0
      %656 = vmatprep.subr.bf16.mxu0 0
      %657 = vmatpush1.bf16.msra.mxu0 0
      %658 = vmatprep.subr.bf16.mxu0 0
      %659 = vmatpush1.bf16.msra.mxu0 0
      %660 = vmatprep.subr.bf16.mxu0 0
      %661 = vmatpush1.bf16.msra.mxu0 0
      %662 = vmatprep.subr.bf16.mxu0 0
      %663 = vmatpush1.bf16.msra.mxu0 0
      %664 = vmatprep.subr.bf16.mxu0 0
      %665 = vmatpush1.bf16.msra.mxu0 %v648
      %666 = vmatprep.subr.bf16.mxu0 0
      %667 = vmatpush2.bf16.msra.mxu0 0
      %668 = vmatprep.subr.bf16.mxu0 0
      %669 = vmatpush2.bf16.msra.mxu0 0
      %670 = vmatprep.subr.bf16.mxu0 0
      %671 = vmatpush2.bf16.msra.mxu0 0
      %672 = vmatprep.subr.bf16.mxu0 0
      %673 = vmatpush2.bf16.msra.mxu0 0
      %674 = vmatprep.subr.bf16.mxu0 0
      %675 = vmatpush2.bf16.msra.mxu0 0
      %676 = vmatprep.subr.bf16.mxu0 0
      %677 = vmatpush2.bf16.msra.mxu0 0
      %678 = vmatprep.subr.bf16.mxu0 0
      %679 = vmatpush2.bf16.msra.mxu0 0
      %680 = vmatprep.subr.bf16.mxu0 0
      %681 = vmatpush2.bf16.msra.mxu0 0
      %682 = vmatprep.mubr.bf16.mxu0 0
      %683 = vmatmul.mubr.bf16.gmra.mxu0 %v645
      %v684 = vpop.f32.mrf.mxu0
      %v685 = vadd.f32 0.0, %v684
      %v686 = vpop.f32.mrf.mxu0
      %v687 = vpop.f32.mrf.mxu0
      %v688 = vpop.f32.mrf.mxu0
      %689 = vdwg.mxu0
      %v690 = vpack.c.bf16 %v685, %v685
      %v692 = vunpack.c.l.b16 %v690
      %v693 = vpack.c.b16 %v692, %v692
      %694 = vrot.lane.b32.xlu0 %v693, 16
      %v695 = vpop.permute.xlu0 %694
      %vm697 = vcmask 191616
      %698 = vst.msk [vmem:[#allocation2] sm:$0xf] %vm697, %v695
      %699 = vrot.lane.b32.xlu0 %v344, 104
      %v700 = vpop.permute.xlu0 %699
      %701 = vrot.lane.b32.xlu0 %v345, 72
      %v702 = vpop.permute.xlu0 %701
      %v704 = vsel %vm349, %v700, 0
      %v707 = vsel %vm349, %v702, 0
      %709 = vmatprep.subr.bf16.mxu0 0
      %710 = vmatpush1.bf16.xpose.msra.mxu0 0
      %711 = vmatprep.subr.bf16.mxu0 0
      %712 = vmatpush1.bf16.xpose.msra.mxu0 0
      %713 = vmatprep.subr.bf16.mxu0 0
      %714 = vmatpush1.bf16.xpose.msra.mxu0 0
      %715 = vmatprep.subr.bf16.mxu0 0
      %716 = vmatpush1.bf16.xpose.msra.mxu0 0
      %717 = vmatprep.subr.bf16.mxu0 0
      %718 = vmatpush1.bf16.xpose.msra.mxu0 0
      %719 = vmatprep.subr.bf16.mxu0 0
      %720 = vmatpush1.bf16.xpose.msra.mxu0 0
      %721 = vmatprep.subr.bf16.mxu0 0
      %722 = vmatpush1.bf16.xpose.msra.mxu0 0
      %723 = vmatprep.subr.bf16.mxu0 0
      %724 = vmatpush1.bf16.xpose.msra.mxu0 %v707
      %725 = vmatprep.subr.bf16.mxu0 0
      %726 = vmatpush2.bf16.xpose.msra.mxu0 0
      %727 = vmatprep.subr.bf16.mxu0 0
      %728 = vmatpush2.bf16.xpose.msra.mxu0 0
      %729 = vmatprep.subr.bf16.mxu0 0
      %730 = vmatpush2.bf16.xpose.msra.mxu0 0
      %731 = vmatprep.subr.bf16.mxu0 0
      %732 = vmatpush2.bf16.xpose.msra.mxu0 0
      %733 = vmatprep.subr.bf16.mxu0 0
      %734 = vmatpush2.bf16.xpose.msra.mxu0 0
      %735 = vmatprep.subr.bf16.mxu0 0
      %736 = vmatpush2.bf16.xpose.msra.mxu0 0
      %737 = vmatprep.subr.bf16.mxu0 0
      %738 = vmatpush2.bf16.xpose.msra.mxu0 0
      %739 = vmatprep.subr.bf16.mxu0 0
      %740 = vmatpush2.bf16.xpose.msra.mxu0 0
      %741 = vmatprep.mubr.bf16.mxu0 0
      %742 = vmatmul.mubr.bf16.gmra.mxu0 %v704
      %v743 = vpop.f32.mrf.mxu0
      %v744 = vadd.f32 0.0, %v743
      %v745 = vpop.f32.mrf.mxu0
      %v746 = vpop.f32.mrf.mxu0
      %v747 = vpop.f32.mrf.mxu0
      %748 = vdwg.mxu0
      %v749 = vsel %vm349, %v744, -inf
      %750 = vmax.xlane.f32.xlu0 %v749
      %v751 = vpop.xlane.xlu0 %750
      %v752 = vsub.f32 %v744, %v751
      %v753 = vmul.f32 %v752, 1.442695
      %v754 = vpow.pop %v753
      %v755 = vsel %vm349, %v754, 0.0
      %756 = vadd.xlane.f32.xlu0 %v755
      %v757 = vpop.xlane.xlu0 %756
      %v758 = vrcp.pop %v757
      %v759 = vmul.f32 %v754, %v758
      %v760 = vpack.c.bf16 %v759, %v759
      %761 = vrot.lane.b32.xlu0 %v345, 40
      %v762 = vpop.permute.xlu0 %761
      %v764 = vsel %vm349, %v760, 0
      %v767 = vsel %vm413, %v762, 0
      %769 = vmatprep.subr.bf16.mxu0 0
      %770 = vmatpush1.bf16.msra.mxu0 0
      %771 = vmatprep.subr.bf16.mxu0 0
      %772 = vmatpush1.bf16.msra.mxu0 0
      %773 = vmatprep.subr.bf16.mxu0 0
      %774 = vmatpush1.bf16.msra.mxu0 0
      %775 = vmatprep.subr.bf16.mxu0 0
      %776 = vmatpush1.bf16.msra.mxu0 0
      %777 = vmatprep.subr.bf16.mxu0 0
      %778 = vmatpush1.bf16.msra.mxu0 0
      %779 = vmatprep.subr.bf16.mxu0 0
      %780 = vmatpush1.bf16.msra.mxu0 0
      %781 = vmatprep.subr.bf16.mxu0 0
      %782 = vmatpush1.bf16.msra.mxu0 0
      %783 = vmatprep.subr.bf16.mxu0 0
      %784 = vmatpush1.bf16.msra.mxu0 %v767
      %785 = vmatprep.subr.bf16.mxu0 0
      %786 = vmatpush2.bf16.msra.mxu0 0
      %787 = vmatprep.subr.bf16.mxu0 0
      %788 = vmatpush2.bf16.msra.mxu0 0
      %789 = vmatprep.subr.bf16.mxu0 0
      %790 = vmatpush2.bf16.msra.mxu0 0
      %791 = vmatprep.subr.bf16.mxu0 0
      %792 = vmatpush2.bf16.msra.mxu0 0
      %793 = vmatprep.subr.bf16.mxu0 0
      %794 = vmatpush2.bf16.msra.mxu0 0
      %795 = vmatprep.subr.bf16.mxu0 0
      %796 = vmatpush2.bf16.msra.mxu0 0
      %797 = vmatprep.subr.bf16.mxu0 0
      %798 = vmatpush2.bf16.msra.mxu0 0
      %799 = vmatprep.subr.bf16.mxu0 0
      %800 = vmatpush2.bf16.msra.mxu0 0
      %801 = vmatprep.mubr.bf16.mxu0 0
      %802 = vmatmul.mubr.bf16.gmra.mxu0 %v764
      %v803 = vpop.f32.mrf.mxu0
      %v804 = vadd.f32 0.0, %v803
      %v805 = vpop.f32.mrf.mxu0
      %v806 = vpop.f32.mrf.mxu0
      %v807 = vpop.f32.mrf.mxu0
      %808 = vdwg.mxu0
      %v809 = vpack.c.bf16 %v804, %v804
      %v811 = vunpack.c.l.b16 %v809
      %v812 = vpack.c.b16 %v811, %v811
      %813 = vrot.lane.b32.xlu0 %v812, 24
      %v814 = vpop.permute.xlu0 %813
      %vm816 = vcmask 257216
      %817 = vst.msk [vmem:[#allocation2] sm:$0xf] %vm816, %v814
      %v818 = vld [vmem:[#allocation2] sm:$0xf]
      %v819 = vld [vmem:[%s3] sm:$0xf]
      %v820 = vld [vmem:[%s3 + $0x4] sm:$0xf]
      %v821 = vld [vmem:[%s3 + $0x8] sm:$0xf]
      %v822 = vld [vmem:[%s3 + $0xc] sm:$0xf]
      %v823 = vld [vmem:[%s4] sm:$0x1]
      %v825 = vlaneseq
      %v826 = vshrl.u32 %v825, 7
      %v827 = vsub.s32 0, %v826
      %v828 = vrot.slane %v823, %v827
      %v834 = vunpack.c.l.b16 %v819
      %v835 = vunpack.c.l.b16 %v820
      %v836 = vunpack.c.l.b16 %v821
      %v837 = vunpack.c.l.b16 %v822
      %v838 = vpack.c.b16 %v835, %v834
      %v839 = vpack.c.b16 %v837, %v836
      %v843 = vsel %vm299, %v818, 0
      %845 = vmatprep.subr.bf16.mxu0 0
      %846 = vmatpush1.bf16.msra.mxu0 0
      %847 = vmatprep.subr.bf16.mxu0 0
      %848 = vmatpush1.bf16.msra.mxu0 0
      %849 = vmatprep.subr.bf16.mxu0 0
      %850 = vmatpush1.bf16.msra.mxu0 0
      %851 = vmatprep.subr.bf16.mxu0 0
      %852 = vmatpush1.bf16.msra.mxu0 0
      %853 = vmatprep.subr.bf16.mxu0 0
      %854 = vmatpush1.bf16.msra.mxu0 0
      %855 = vmatprep.subr.bf16.mxu0 0
      %856 = vmatpush1.bf16.msra.mxu0 0
      %857 = vmatprep.subr.bf16.mxu0 0
      %858 = vmatpush1.bf16.msra.mxu0 %v839
      %859 = vmatprep.subr.bf16.mxu0 0
      %860 = vmatpush1.bf16.msra.mxu0 %v838
      %861 = vmatprep.subr.bf16.mxu0 0
      %862 = vmatpush2.bf16.msra.mxu0 0
      %863 = vmatprep.subr.bf16.mxu0 0
      %864 = vmatpush2.bf16.msra.mxu0 0
      %865 = vmatprep.subr.bf16.mxu0 0
      %866 = vmatpush2.bf16.msra.mxu0 0
      %867 = vmatprep.subr.bf16.mxu0 0
      %868 = vmatpush2.bf16.msra.mxu0 0
      %869 = vmatprep.subr.bf16.mxu0 0
      %870 = vmatpush2.bf16.msra.mxu0 0
      %871 = vmatprep.subr.bf16.mxu0 0
      %872 = vmatpush2.bf16.msra.mxu0 0
      %873 = vmatprep.subr.bf16.mxu0 0
      %874 = vmatpush2.bf16.msra.mxu0 0
      %875 = vmatprep.subr.bf16.mxu0 0
      %876 = vmatpush2.bf16.msra.mxu0 0
      %877 = vmatprep.mubr.bf16.mxu0 0
      %878 = vmatmul.mubr.bf16.gmra.mxu0 %v843
      %v879 = vpop.f32.mrf.mxu0
      %v880 = vadd.f32 %v828, %v879
      %v881 = vpop.f32.mrf.mxu0
      %v882 = vpop.f32.mrf.mxu0
      %v883 = vpop.f32.mrf.mxu0
      %884 = vdwg.mxu0
      %v885 = vunpack.c.l.bf16 %v275
      %v886 = vadd.f32 %v880, %v885
      %v887 = vld [vmem:[%s5] sm:$0x1]
      %v888 = vld [vmem:[%s6] sm:$0x1]
      %v889 = vsel %vm299, %v886, 0.0
      %890 = vadd.xlane.f32.xlu0 %v889
      %v891 = vpop.xlane.xlu0 %890
      %v892 = vrcp.pop 32.0
      %v893 = vmul.f32 %v891, %v892
      %v894 = vsub.f32 %v886, %v893
      %v895 = vmul.f32 %v894, %v894
      %v896 = vsel %vm299, %v895, 0.0
      %897 = vadd.xlane.f32.xlu0 %v896
      %v898 = vpop.xlane.xlu0 %897
      %v899 = vmul.f32 %v898, %v892
      %v900 = vadd.f32 %v899, 1e-05
      %v901 = vrsqrt.pop %v900
      %v902 = vmul.f32 %v894, %v901
      %v904 = vlaneseq
      %v905 = vshrl.u32 %v904, 7
      %v906 = vsub.s32 0, %v905
      %v907 = vrot.slane %v887, %v906
      %v909 = vmul.f32 %v902, %v907
      %v911 = vlaneseq
      %v912 = vshrl.u32 %v911, 7
      %v913 = vsub.s32 0, %v912
      %v914 = vrot.slane %v888, %v913
      %v916 = vadd.f32 %v909, %v914
      %v917 = vpack.c.bf16 %v916, %v916
      %vm918 = vcmask 257024
      %919 = vst.msk [vmem:[%s273] sm:$0xf] %vm918, %v917
      %p920 = scmp.lt.s32.totalorder %s18, 1
      %s921 = scalar_select %p920, %s18, 1
      %s922 = smul.addr %s921, 4
      %s923 = scalar_lea.vmem %s7, %s922
      // Predicated region
      $region49: #{_lambda_.15} parent=47 // pred_check
        %p924 = pneg %p188
      $region50: #{_lambda_.15} parent=47 // pred_check_branch
        %926 = sbr.rel (%p924) target = $region52
      $region51: #{_lambda_.15} parent=47 // pred_region
        _
      $region52: #{_lambda_.15} parent=47 // pred_fallthru
        _
    $region48: #{_lambda_.15} parent=5 // pred_fallthru
      _
    %p927 = scmp.le.s32.totalorder 2, %s13
    // Predicated region
    $region53: #{_lambda_.15} parent=5 // pred_check
      %p928 = pneg %p927
    $region54: #{_lambda_.15} parent=5 // pred_check_branch
      %930 = sbr.rel (%p928) target = $region56
    $region55: #{_lambda_.15} parent=5 // pred_region
      %s931 = ssub.s32 %s13, 2
      // Predicated region
      $region57: #{_lambda_.15} parent=55 // pred_check
        %p932 = pneg %p194
      $region58: #{_lambda_.15} parent=55 // pred_check_branch
        %934 = sbr.rel (%p932) target = $region60
      $region59: #{_lambda_.15} parent=55 // pred_region
        %p935 = scmp.lt.s32.totalorder %s19, 1
        %s936 = scalar_select %p935, %s19, 1
        %s937 = smul.addr %s936, 4
        %s938 = scalar_lea.vmem %s7, %s937
      $region60: #{_lambda_.15} parent=55 // pred_fallthru
        _
    $region56: #{_lambda_.15} parent=5 // pred_fallthru
      _
  $region6: #{_lambda_.15} parent=0 // loop_footer
    %s17 = sadd.s32 1, %s13
  $region7: #{_lambda_.15} parent=0 // loop_footer_branch
    %12 = sbr.rel target = $region3
  $region8: #{_lambda_.15} parent=0 // loop_exit
    _

// kernel: _lambda_.17
$region0: #{_lambda_.17}
  #allocation0 [shape = 'u32[]', space=smem, size = 0x4, offset = 0x4, fixed_abs, tag = 'smem constant byte address 0x4 - core index']
  #allocation1 [shape = 'u32[144,128]{1,0:T(1,128)}', space=vmem, size = 0x12000, scoped, tag = 'internal scratch']
  #allocation2 [shape = 'f32[1,1]{1,0:T(1,128)S(1)}', space=vmem, size = 0x200, scoped, tag = 'scoped memory for _lambda_.17']
  %s0 = inlined_call_operand.vmem [shape: bf16[2,8,32], index: 0, kind: input, shape index: {}]
  %s1 = inlined_call_operand.vmem [shape: bf16[2,8,32], index: 1, kind: input, shape index: {}]
  %s2 = inlined_call_operand.vmem [shape: bf16[32,32], index: 2, kind: input, shape index: {}]
  %s3 = inlined_call_operand.vmem [shape: f32[1,32], index: 3, kind: input, shape index: {}]
  %s4 = inlined_call_operand.vmem [shape: f32[1,32], index: 4, kind: input, shape index: {}]
  %s5 = inlined_call_operand.vmem [shape: f32[1,32], index: 5, kind: input, shape index: {}]
  %s6 = inlined_call_operand.vmem [shape: bf16[1,32], index: 6, kind: input, shape index: {}]
  %s7 = inlined_call_operand.<no memory space> [shape: f32[1,1], index: 7, kind: input, shape index: {}]
  %s8 = inlined_call_operand.hbm [shape: f32[2,1,8], index: 8, kind: output, shape index: {}]
  %s9 = sld [smem:[#allocation0]]
  $region65: #{_lambda_.17} parent=0
    _
  %s11 = ssub.s32 1, %s9
  %s12 = scalar_select 0, %s11, %s9
  %v13 = vstv %s7
  %14 = vst [vmem:[#allocation2] sm:$0x1] %v13
  $region1: #{_lambda_.17} parent=0
    #allocation3 [shape = 'u8[1024]{0}', space=vmem, size = 0x400, scoped, tag = 'output window, operand 0']
    #allocation4 [shape = 's32[2]{0}', space=sflag, size = 0x8, scoped, tag = 'scoped memory for _lambda_.17']
    %15 = vsyncpa [#allocation4], 0
    %s16 = scalar_lea.sflag [#allocation4], 1
    %17 = vsyncpa %s16, 0
    loop: start=0, step=1, limit=4
    $region2: #{_lambda_.17} parent=1 // loop_pre_header
      _
    $region3: #{_lambda_.17} parent=1 // loop_header
      %s19 = sphi 0, %s23
      %p20 = scmp.ge.s32.totalorder %s19, 4
      %s29 = sphi 0, %s31
      %s32 = sphi 0, %s29
      %s33 = sphi 0, %s32
      %s49 = sphi 0, %s33
      %s55 = sphi 0, %s57
      %s58 = sphi 0, %s55
      %s59 = sphi 0, %s58
      %s75 = sphi 0, %s59
      %s79 = sphi 0, %s79
      %s81 = sphi 0, %s79
      %s82 = sphi 0, %s81
      %s96 = sphi 0, %s82
      %s100 = sphi 0, %s100
      %s102 = sphi 0, %s100
      %s103 = sphi 0, %s102
      %s117 = sphi 0, %s103
      %s121 = sphi 0, %s121
      %s123 = sphi 0, %s121
      %s124 = sphi 0, %s123
      %s138 = sphi 0, %s124
      %s142 = sphi 0, %s142
      %s144 = sphi 0, %s142
      %s145 = sphi 0, %s144
      %s159 = sphi 0, %s145
      %s163 = sphi 0, %s163
      %s165 = sphi 0, %s163
      %s166 = sphi 0, %s165
      %s180 = sphi 0, %s166
      %s184 = sphi 0, %s184
      %s186 = sphi 0, %s184
      %s187 = sphi 0, %s186
      %s201 = sphi 0, %s187
      %s207 = sphi 0, %s209
      %s210 = sphi 0, %s207
      %s211 = sphi 0, %s210
      %s227 = sphi 0, %s211
    $region4: #{_lambda_.17} parent=1 // loop_header_branch
      %22 = sbr.rel (%p20) target = $region8
    $region5: #{_lambda_.17} parent=1 // loop_body
      %s24 = ssub.s32 %s19, 1
      %s25 = ssub.s32 %s19, 2
      %s26 = sadd.s32 %s19, 1
      %s27 = ssub.s32 %s19, %s26
      %p28 = scmp.eq.s32.totalorder %s27, 0
      %s30 = sadd.s32 %s29, 1
      %s31 = scalar_select %p28, %s29, %s30
      %p34 = pneg %p28
      %p35 = scmp.eq.s32.totalorder %s19, 1
      %p36 = por %p34, %p35
      %p37 = scmp.ne.s32.totalorder %s29, %s32
      %p38 = scmp.eq.s32.totalorder %s19, 0
      %p39 = por %p37, %p38
      %p40 = scmp.ne.s32.totalorder %s29, %s32
      %p41 = scmp.eq.s32.totalorder %s24, 1
      %p42 = por %p40, %p41
      %p43 = scmp.ne.s32.totalorder %s32, %s33
      %p44 = scmp.eq.s32.totalorder %s24, 0
      %p45 = por %p43, %p44
      %p46 = scmp.ne.s32.totalorder %s32, %s33
      %p47 = scmp.eq.s32.totalorder %s25, 1
      %p48 = por %p46, %p47
      %p50 = scmp.ne.s32.totalorder %s33, %s49
      %p51 = scmp.eq.s32.totalorder %s25, 0
      %p52 = por %p50, %p51
      %s53 = ssub.s32 %s19, %s26
      %p54 = scmp.eq.s32.totalorder %s53, 0
      %s56 = sadd.s32 %s55, 1
      %s57 = scalar_select %p54, %s55, %s56
      %p60 = pneg %p54
      %p61 = scmp.eq.s32.totalorder %s19, 1
      %p62 = por %p60, %p61
      %p63 = scmp.ne.s32.totalorder %s55, %s58
      %p64 = scmp.eq.s32.totalorder %s19, 0
      %p65 = por %p63, %p64
      %p66 = scmp.ne.s32.totalorder %s55, %s58
      %p67 = scmp.eq.s32.totalorder %s24, 1
      %p68 = por %p66, %p67
      %p69 = scmp.ne.s32.totalorder %s58, %s59
      %p70 = scmp.eq.s32.totalorder %s24, 0
      %p71 = por %p69, %p70
      %p72 = scmp.ne.s32.totalorder %s58, %s59
      %p73 = scmp.eq.s32.totalorder %s25, 1
      %p74 = por %p72, %p73
      %p76 = scmp.ne.s32.totalorder %s59, %s75
      %p77 = scmp.eq.s32.totalorder %s25, 0
      %p78 = por %p76, %p77
      %s80 = sadd.s32 %s79, 1
      %p83 = scmp.eq.s32.totalorder %s19, 1
      %p84 = scmp.ne.s32.totalorder %s79, %s81
      %p85 = scmp.eq.s32.totalorder %s19, 0
      %p86 = por %p84, %p85
      %p87 = scmp.ne.s32.totalorder %s79, %s81
      %p88 = scmp.eq.s32.totalorder %s24, 1
      %p89 = por %p87, %p88
      %p90 = scmp.ne.s32.totalorder %s81, %s82
      %p91 = scmp.eq.s32.totalorder %s24, 0
      %p92 = por %p90, %p91
      %p93 = scmp.ne.s32.totalorder %s81, %s82
      %p94 = scmp.eq.s32.totalorder %s25, 1
      %p95 = por %p93, %p94
      %p97 = scmp.ne.s32.totalorder %s82, %s96
      %p98 = scmp.eq.s32.totalorder %s25, 0
      %p99 = por %p97, %p98
      %s101 = sadd.s32 %s100, 1
      %p104 = scmp.eq.s32.totalorder %s19, 1
      %p105 = scmp.ne.s32.totalorder %s100, %s102
      %p106 = scmp.eq.s32.totalorder %s19, 0
      %p107 = por %p105, %p106
      %p108 = scmp.ne.s32.totalorder %s100, %s102
      %p109 = scmp.eq.s32.totalorder %s24, 1
      %p110 = por %p108, %p109
      %p111 = scmp.ne.s32.totalorder %s102, %s103
      %p112 = scmp.eq.s32.totalorder %s24, 0
      %p113 = por %p111, %p112
      %p114 = scmp.ne.s32.totalorder %s102, %s103
      %p115 = scmp.eq.s32.totalorder %s25, 1
      %p116 = por %p114, %p115
      %p118 = scmp.ne.s32.totalorder %s103, %s117
      %p119 = scmp.eq.s32.totalorder %s25, 0
      %p120 = por %p118, %p119
      %s122 = sadd.s32 %s121, 1
      %p125 = scmp.eq.s32.totalorder %s19, 1
      %p126 = scmp.ne.s32.totalorder %s121, %s123
      %p127 = scmp.eq.s32.totalorder %s19, 0
      %p128 = por %p126, %p127
      %p129 = scmp.ne.s32.totalorder %s121, %s123
      %p130 = scmp.eq.s32.totalorder %s24, 1
      %p131 = por %p129, %p130
      %p132 = scmp.ne.s32.totalorder %s123, %s124
      %p133 = scmp.eq.s32.totalorder %s24, 0
      %p134 = por %p132, %p133
      %p135 = scmp.ne.s32.totalorder %s123, %s124
      %p136 = scmp.eq.s32.totalorder %s25, 1
      %p137 = por %p135, %p136
      %p139 = scmp.ne.s32.totalorder %s124, %s138
      %p140 = scmp.eq.s32.totalorder %s25, 0
      %p141 = por %p139, %p140
      %s143 = sadd.s32 %s142, 1
      %p146 = scmp.eq.s32.totalorder %s19, 1
      %p147 = scmp.ne.s32.totalorder %s142, %s144
      %p148 = scmp.eq.s32.totalorder %s19, 0
      %p149 = por %p147, %p148
      %p150 = scmp.ne.s32.totalorder %s142, %s144
      %p151 = scmp.eq.s32.totalorder %s24, 1
      %p152 = por %p150, %p151
      %p153 = scmp.ne.s32.totalorder %s144, %s145
      %p154 = scmp.eq.s32.totalorder %s24, 0
      %p155 = por %p153, %p154
      %p156 = scmp.ne.s32.totalorder %s144, %s145
      %p157 = scmp.eq.s32.totalorder %s25, 1
      %p158 = por %p156, %p157
      %p160 = scmp.ne.s32.totalorder %s145, %s159
      %p161 = scmp.eq.s32.totalorder %s25, 0
      %p162 = por %p160, %p161
      %s164 = sadd.s32 %s163, 1
      %p167 = scmp.eq.s32.totalorder %s19, 1
      %p168 = scmp.ne.s32.totalorder %s163, %s165
      %p169 = scmp.eq.s32.totalorder %s19, 0
      %p170 = por %p168, %p169
      %p171 = scmp.ne.s32.totalorder %s163, %s165
      %p172 = scmp.eq.s32.totalorder %s24, 1
      %p173 = por %p171, %p172
      %p174 = scmp.ne.s32.totalorder %s165, %s166
      %p175 = scmp.eq.s32.totalorder %s24, 0
      %p176 = por %p174, %p175
      %p177 = scmp.ne.s32.totalorder %s165, %s166
      %p178 = scmp.eq.s32.totalorder %s25, 1
      %p179 = por %p177, %p178
      %p181 = scmp.ne.s32.totalorder %s166, %s180
      %p182 = scmp.eq.s32.totalorder %s25, 0
      %p183 = por %p181, %p182
      %s185 = sadd.s32 %s184, 1
      %p188 = scmp.eq.s32.totalorder %s19, 1
      %p189 = scmp.ne.s32.totalorder %s184, %s186
      %p190 = scmp.eq.s32.totalorder %s19, 0
      %p191 = por %p189, %p190
      %p192 = scmp.ne.s32.totalorder %s184, %s186
      %p193 = scmp.eq.s32.totalorder %s24, 1
      %p194 = por %p192, %p193
      %p195 = scmp.ne.s32.totalorder %s186, %s187
      %p196 = scmp.eq.s32.totalorder %s24, 0
      %p197 = por %p195, %p196
      %p198 = scmp.ne.s32.totalorder %s186, %s187
      %p199 = scmp.eq.s32.totalorder %s25, 1
      %p200 = por %p198, %p199
      %p202 = scmp.ne.s32.totalorder %s187, %s201
      %p203 = scmp.eq.s32.totalorder %s25, 0
      %p204 = por %p202, %p203
      %s205 = ssub.s32 %s19, %s26
      %p206 = scmp.eq.s32.totalorder %s205, 0
      %s208 = sadd.s32 %s207, 1
      %s209 = scalar_select %p206, %s207, %s208
      %p212 = pneg %p206
      %p213 = scmp.eq.s32.totalorder %s19, 1
      %p214 = por %p212, %p213
      %p215 = scmp.ne.s32.totalorder %s207, %s210
      %p216 = scmp.eq.s32.totalorder %s19, 0
      %p217 = por %p215, %p216
      %p218 = scmp.ne.s32.totalorder %s207, %s210
      %p219 = scmp.eq.s32.totalorder %s24, 1
      %p220 = por %p218, %p219
      %p221 = scmp.ne.s32.totalorder %s210, %s211
      %p222 = scmp.eq.s32.totalorder %s24, 0
      %p223 = por %p221, %p222
      %p224 = scmp.ne.s32.totalorder %s210, %s211
      %p225 = scmp.eq.s32.totalorder %s25, 1
      %p226 = por %p224, %p225
      %p228 = scmp.ne.s32.totalorder %s211, %s227
      %p229 = scmp.eq.s32.totalorder %s25, 0
      %p230 = por %p228, %p229
      %p231 = scmp.le.s32.totalorder 1, %s19
      %p232 = scmp.lt.s32.totalorder %s19, 3
      %p233 = pnand %p231, %p232
      %p234 = pneg %p233
      // Predicated region
      $region9: #{_lambda_.17} parent=5 // pred_check
        _
      $region10: #{_lambda_.17} parent=5 // pred_check_branch
        %236 = sbr.rel (%p233) target = $region12
      $region11: #{_lambda_.17} parent=5 // pred_region
        %s237 = ssub.s32 %s19, 1
        // Predicated region
        $region13: #{_lambda_.17} parent=11 // pred_check
          %p238 = pneg %p92
        $region14: #{_lambda_.17} parent=11 // pred_check_branch
          %240 = sbr.rel (%p238) target = $region16
        $region15: #{_lambda_.17} parent=11 // pred_region
          _
        $region16: #{_lambda_.17} parent=11 // pred_fallthru
          _
        // Predicated region
        $region17: #{_lambda_.17} parent=11 // pred_check
          %p241 = pneg %p113
        $region18: #{_lambda_.17} parent=11 // pred_check_branch
          %243 = sbr.rel (%p241) target = $region20
        $region19: #{_lambda_.17} parent=11 // pred_region
          _
        $region20: #{_lambda_.17} parent=11 // pred_fallthru
          _
        // Predicated region
        $region21: #{_lambda_.17} parent=11 // pred_check
          %p244 = pneg %p134
        $region22: #{_lambda_.17} parent=11 // pred_check_branch
          %246 = sbr.rel (%p244) target = $region24
        $region23: #{_lambda_.17} parent=11 // pred_region
          _
        $region24: #{_lambda_.17} parent=11 // pred_fallthru
          _
        // Predicated region
        $region25: #{_lambda_.17} parent=11 // pred_check
          %p247 = pneg %p155
        $region26: #{_lambda_.17} parent=11 // pred_check_branch
          %249 = sbr.rel (%p247) target = $region28
        $region27: #{_lambda_.17} parent=11 // pred_region
          _
        $region28: #{_lambda_.17} parent=11 // pred_fallthru
          _
        // Predicated region
        $region29: #{_lambda_.17} parent=11 // pred_check
          %p250 = pneg %p176
        $region30: #{_lambda_.17} parent=11 // pred_check_branch
          %252 = sbr.rel (%p250) target = $region32
        $region31: #{_lambda_.17} parent=11 // pred_region
          _
        $region32: #{_lambda_.17} parent=11 // pred_fallthru
          _
        // Predicated region
        $region33: #{_lambda_.17} parent=11 // pred_check
          %p253 = pneg %p197
        $region34: #{_lambda_.17} parent=11 // pred_check_branch
          %255 = sbr.rel (%p253) target = $region36
        $region35: #{_lambda_.17} parent=11 // pred_region
          _
        $region36: #{_lambda_.17} parent=11 // pred_fallthru
          _
      $region12: #{_lambda_.17} parent=5 // pred_fallthru
        _
      %p256 = scmp.lt.s32.totalorder %s19, 2
      // Predicated region
      $region37: #{_lambda_.17} parent=5 // pred_check
        %p257 = pneg %p256
      $region38: #{_lambda_.17} parent=5 // pred_check_branch
        %259 = sbr.rel (%p257) target = $region40
      $region39: #{_lambda_.17} parent=5 // pred_region
        // Predicated region
        $region41: #{_lambda_.17} parent=39 // pred_check
          %p260 = pneg %p39
        $region42: #{_lambda_.17} parent=39 // pred_check_branch
          %262 = sbr.rel (%p260) target = $region44
        $region43: #{_lambda_.17} parent=39 // pred_region
          %p263 = scmp.lt.s32.totalorder %s19, 1
          %s264 = scalar_select %p263, %s19, 1
          %s265 = smul.addr %s264, 4
          %s266 = scalar_lea.vmem %s0, %s265
        $region44: #{_lambda_.17} parent=39 // pred_fallthru
          _
        // Predicated region
        $region45: #{_lambda_.17} parent=39 // pred_check
          %p267 = pneg %p65
        $region46: #{_lambda_.17} parent=39 // pred_check_branch
          %269 = sbr.rel (%p267) target = $region48
        $region47: #{_lambda_.17} parent=39 // pred_region
          %p270 = scmp.lt.s32.totalorder %s19, 1
          %s271 = scalar_select %p270, %s19, 1
          %s272 = smul.addr %s271, 4
          %s273 = scalar_lea.vmem %s1, %s272
        $region48: #{_lambda_.17} parent=39 // pred_fallthru
          _
      $region40: #{_lambda_.17} parent=5 // pred_fallthru
        _
      %p274 = scmp.le.s32.totalorder 1, %s19
      %p275 = scmp.lt.s32.totalorder %s19, 3
      %p276 = pnand %p274, %p275
      %p277 = pneg %p276
      // Predicated region
      $region49: #{_lambda_.17} parent=5 // pred_check
        _
      $region50: #{_lambda_.17} parent=5 // pred_check_branch
        %279 = sbr.rel (%p276) target = $region52
      $region51: #{_lambda_.17} parent=5 // pred_region
        %s280 = ssub.s32 %s19, 1
        %p281 = scmp.lt.s32.totalorder %s24, 1
        %s282 = scalar_select %p281, %s24, 1
        %s283 = smul.addr %s282, 4
        %s284 = scalar_lea.vmem %s0, %s283
        %p285 = pneg %p45
        %p286 = pneg %p42
        %p287 = scmp.lt.s32.totalorder %s24, 1
        %s288 = scalar_select %p287, %s24, 1
        %s289 = smul.addr %s288, 4
        %s290 = scalar_lea.vmem %s1, %s289
        %p291 = pneg %p71
        %p292 = pneg %p68
        %p293 = pneg %p92
        %p294 = pneg %p89
        %p295 = pneg %p113
        %p296 = pneg %p110
        %p297 = pneg %p134
        %p298 = pneg %p131
        %p299 = pneg %p155
        %p300 = pneg %p152
        %p301 = pneg %p176
        %p302 = pneg %p173
        %p303 = pneg %p197
        %p304 = pneg %p194
        %p305 = pneg %p223
        %p306 = pneg %p220
        %s307 = sand.u32 %s210, 1
        %s308 = scalar_lea.sflag [#allocation4], %s307
        %s309 = sand.u32 %s210, 1
        %s310 = scalar_lea.vmem [#allocation3], %s309
        %p311 = scmp.lt.s32.totalorder %s24, 1
        %s312 = scalar_select %p311, %s24, 1
        %s313 = smul.addr %s312, 4
        %s314 = scalar_lea.vmem %s0, %s313
        %p315 = scmp.lt.s32.totalorder %s24, 1
        %s316 = scalar_select %p315, %s24, 1
        %s317 = smul.addr %s316, 4
        %s318 = scalar_lea.vmem %s1, %s317
        %v320 = vld [vmem:[%s314] sm:$0xf]
        %v321 = vld [vmem:[%s2] sm:$0xf]
        %v322 = vld [vmem:[%s2 + $0x4] sm:$0xf]
        %v323 = vld [vmem:[%s2 + $0x8] sm:$0xf]
        %v324 = vld [vmem:[%s2 + $0xc] sm:$0xf]
        %v325 = vld [vmem:[%s3] sm:$0x1]
        %v327 = vlaneseq
        %v328 = vshrl.u32 %v327, 7
        %v329 = vsub.s32 0, %v328
        %v330 = vrot.slane %v325, %v329
        %v336 = vunpack.c.l.b16 %v321
        %v337 = vunpack.c.l.b16 %v322
        %v338 = vunpack.c.l.b16 %v323
        %v339 = vunpack.c.l.b16 %v324
        %v340 = vpack.c.b16 %v337, %v336
        %v341 = vpack.c.b16 %v339, %v338
        %vm344 = vcmask 261120
        %v346 = vsel %vm344, %v320, 0
        %348 = vmatprep.subr.bf16.mxu0 0
        %349 = vmatpush1.bf16.msra.mxu0 0
        %350 = vmatprep.subr.bf16.mxu0 0
        %351 = vmatpush1.bf16.msra.mxu0 0
        %352 = vmatprep.subr.bf16.mxu0 0
        %353 = vmatpush1.bf16.msra.mxu0 0
        %354 = vmatprep.subr.bf16.mxu0 0
        %355 = vmatpush1.bf16.msra.mxu0 0
        %356 = vmatprep.subr.bf16.mxu0 0
        %357 = vmatpush1.bf16.msra.mxu0 0
        %358 = vmatprep.subr.bf16.mxu0 0
        %359 = vmatpush1.bf16.msra.mxu0 0
        %360 = vmatprep.subr.bf16.mxu0 0
        %361 = vmatpush1.bf16.msra.mxu0 %v341
        %362 = vmatprep.subr.bf16.mxu0 0
        %363 = vmatpush1.bf16.msra.mxu0 %v340
        %364 = vmatprep.subr.bf16.mxu0 0
        %365 = vmatpush2.bf16.msra.mxu0 0
        %366 = vmatprep.subr.bf16.mxu0 0
        %367 = vmatpush2.bf16.msra.mxu0 0
        %368 = vmatprep.subr.bf16.mxu0 0
        %369 = vmatpush2.bf16.msra.mxu0 0
        %370 = vmatprep.subr.bf16.mxu0 0
        %371 = vmatpush2.bf16.msra.mxu0 0
        %372 = vmatprep.subr.bf16.mxu0 0
        %373 = vmatpush2.bf16.msra.mxu0 0
        %374 = vmatprep.subr.bf16.mxu0 0
        %375 = vmatpush2.bf16.msra.mxu0 0
        %376 = vmatprep.subr.bf16.mxu0 0
        %377 = vmatpush2.bf16.msra.mxu0 0
        %378 = vmatprep.subr.bf16.mxu0 0
        %379 = vmatpush2.bf16.msra.mxu0 0
        %380 = vmatprep.mubr.bf16.mxu0 0
        %381 = vmatmul.mubr.bf16.gmra.mxu0 %v346
        %v382 = vpop.f32.mrf.mxu0
        %v383 = vadd.f32 %v330, %v382
        %v384 = vpop.f32.mrf.mxu0
        %v385 = vpop.f32.mrf.mxu0
        %v386 = vpop.f32.mrf.mxu0
        %387 = vdwg.mxu0
        %v388 = vmax.f32 %v383, 0.0
        %v389 = vld [vmem:[%s4] sm:$0x1]
        %v390 = vld [vmem:[%s5] sm:$0x1]
        %v391 = vsel %vm344, %v388, 0.0
        %392 = vadd.xlane.f32.xlu0 %v391
        %v393 = vpop.xlane.xlu0 %392
        %v394 = vrcp.pop 32.0
        %v395 = vmul.f32 %v393, %v394
        %v396 = vsub.f32 %v388, %v395
        %v397 = vmul.f32 %v396, %v396
        %v398 = vsel %vm344, %v397, 0.0
        %399 = vadd.xlane.f32.xlu0 %v398
        %v400 = vpop.xlane.xlu0 %399
        %v401 = vmul.f32 %v400, %v394
        %v402 = vadd.f32 %v401, 1e-05
        %v403 = vrsqrt.pop %v402
        %v404 = vmul.f32 %v396, %v403
        %v406 = vlaneseq
        %v407 = vshrl.u32 %v406, 7
        %v408 = vsub.s32 0, %v407
        %v409 = vrot.slane %v389, %v408
        %v411 = vmul.f32 %v404, %v409
        %v413 = vlaneseq
        %v414 = vshrl.u32 %v413, 7
        %v415 = vsub.s32 0, %v414
        %v416 = vrot.slane %v390, %v415
        %v418 = vadd.f32 %v411, %v416
        %v419 = vmul.f32 %v418, 0.5
        %v420 = vld [vmem:[%s318] sm:$0xf]
        %v421 = vunpack.c.l.bf16 %v420
        %v422 = vmul.f32 %v421, 0.5
        %v423 = vadd.f32 %v419, %v422
        %v424 = vld [vmem:[%s6] sm:$0x1]
        %v425 = vpack.c.bf16 %v423, %v423
        %v426 = vld [vmem:[#allocation2] sm:$0x1]
        %428 = vset.pattern.permute.xlu0 0
        %429 = vperm.xlu0 %428, %v426
        %v430 = vpop.permute.xlu0 %429
        %v432 = vlaneseq
        %v433 = vshrl.u32 %v432, 7
        %v434 = vsub.s32 0, %v433
        %v435 = vrot.slane %v430, %v434
        %v437 = vsel %vm344, %v424, 0
        %v440 = vsel %vm344, %v425, 0
        %442 = vmatprep.subr.bf16.mxu0 0
        %443 = vmatpush1.bf16.xpose.msra.mxu0 0
        %444 = vmatprep.subr.bf16.mxu0 0
        %445 = vmatpush1.bf16.xpose.msra.mxu0 0
        %446 = vmatprep.subr.bf16.mxu0 0
        %447 = vmatpush1.bf16.xpose.msra.mxu0 0
        %448 = vmatprep.subr.bf16.mxu0 0
        %449 = vmatpush1.bf16.xpose.msra.mxu0 0
        %450 = vmatprep.subr.bf16.mxu0 0
        %451 = vmatpush1.bf16.xpose.msra.mxu0 0
        %452 = vmatprep.subr.bf16.mxu0 0
        %453 = vmatpush1.bf16.xpose.msra.mxu0 0
        %454 = vmatprep.subr.bf16.mxu0 0
        %455 = vmatpush1.bf16.xpose.msra.mxu0 0
        %456 = vmatprep.subr.bf16.mxu0 0
        %457 = vmatpush1.bf16.xpose.msra.mxu0 %v440
        %458 = vmatprep.subr.bf16.mxu0 0
        %459 = vmatpush2.bf16.xpose.msra.mxu0 0
        %460 = vmatprep.subr.bf16.mxu0 0
        %461 = vmatpush2.bf16.xpose.msra.mxu0 0
        %462 = vmatprep.subr.bf16.mxu0 0
        %463 = vmatpush2.bf16.xpose.msra.mxu0 0
        %464 = vmatprep.subr.bf16.mxu0 0
        %465 = vmatpush2.bf16.xpose.msra.mxu0 0
        %466 = vmatprep.subr.bf16.mxu0 0
        %467 = vmatpush2.bf16.xpose.msra.mxu0 0
        %468 = vmatprep.subr.bf16.mxu0 0
        %469 = vmatpush2.bf16.xpose.msra.mxu0 0
        %470 = vmatprep.subr.bf16.mxu0 0
        %471 = vmatpush2.bf16.xpose.msra.mxu0 0
        %472 = vmatprep.subr.bf16.mxu0 0
        %473 = vmatpush2.bf16.xpose.msra.mxu0 0
        %474 = vmatprep.mubr.bf16.mxu0 0
        %475 = vmatmul.mubr.bf16.gmra.mxu0 %v437
        %v476 = vpop.f32.mrf.mxu0
        %v477 = vadd.f32 %v435, %v476
        %v478 = vpop.f32.mrf.mxu0
        %v479 = vpop.f32.mrf.mxu0
        %v480 = vpop.f32.mrf.mxu0
        %481 = vdwg.mxu0
        %vm482 = vcmask 57344
        %483 = vst.msk [vmem:[%s310] sm:$0x1] %vm482, %v477
        %s484 = sand.u32 %s210, 1
        %s485 = scalar_lea.sflag [#allocation4], %s484
        %s486 = sand.u32 %s210, 1
        %s487 = scalar_lea.vmem [#allocation3], %s486
        // Predicated region
        $region53: #{_lambda_.17} parent=51 // pred_check
          %p488 = pneg %p220
        $region54: #{_lambda_.17} parent=51 // pred_check_branch
          %490 = sbr.rel (%p488) target = $region56
        $region55: #{_lambda_.17} parent=51 // pred_region
          %s492 = ssub.s32 16, 16
          %493 = vsyncadd %s485, %s492
          %s494 = smul.addr %s24, 16
          %s495 = scalar_lea.hbm %s8, %s494
          %s497 = sshll.u32 %s487, 4
          %s498 = int_to_ptr.vmem [resolvable:$true] %s497
          %500 = dma.vmem_to_hbm [thread:$0]  %s498, 16, %s495, %s485
        $region56: #{_lambda_.17} parent=51 // pred_fallthru
          _
      $region52: #{_lambda_.17} parent=5 // pred_fallthru
        _
      %p501 = scmp.le.s32.totalorder 2, %s19
      // Predicated region
      $region57: #{_lambda_.17} parent=5 // pred_check
        %p502 = pneg %p501
      $region58: #{_lambda_.17} parent=5 // pred_check_branch
        %504 = sbr.rel (%p502) target = $region60
      $region59: #{_lambda_.17} parent=5 // pred_region
        %s505 = ssub.s32 %s19, 2
        // Predicated region
        $region61: #{_lambda_.17} parent=59 // pred_check
          %p506 = pneg %p226
        $region62: #{_lambda_.17} parent=59 // pred_check_branch
          %508 = sbr.rel (%p506) target = $region64
        $region63: #{_lambda_.17} parent=59 // pred_region
          %s509 = sand.u32 %s211, 1
          %s510 = scalar_lea.sflag [#allocation4], %s509
          %s511 = sand.u32 %s211, 1
          %s512 = scalar_lea.vmem [#allocation3], %s511
          %513 = dma.done %s510, 16
        $region64: #{_lambda_.17} parent=59 // pred_fallthru
          _
      $region60: #{_lambda_.17} parent=5 // pred_fallthru
        _
    $region6: #{_lambda_.17} parent=1 // loop_footer
      %s23 = sadd.s32 1, %s19
    $region7: #{_lambda_.17} parent=1 // loop_footer_branch
      %18 = sbr.rel target = $region3
    $region8: #{_lambda_.17} parent=1 // loop_exit
      _
    %514 = vsyncpa [#allocation4], 1
    %s515 = scalar_lea.sflag [#allocation4], 1
    %516 = vsyncpa %s515, 1

</llo_original>
